<compile_context>
chip_gen: v6e
topology: v6e:2x2x1
jax: 0.10.0
libtpu: 0.0.40
codegen_flags: <defaults>
</compile_context>

<pallas_src>
import functools

import jax
import jax.numpy as jnp
from jax import lax
from jax.experimental import pallas as pl
from jax.experimental.pallas import tpu as pltpu

MAX_TM = 512                      # M tile upper bound (im2col rows / batch rows)
MAX_TN = 512                      # N tile upper bound (output channels)
MAX_TK = 1024                     # K tile upper bound (reduction)
VMEM_LIMIT = 32 * 1024 * 1024     # fits v7x (64 MiB/TC) with pipelining headroom


def _round_up(x, m):
    return (x + m - 1) // m * m


def _pick_tile(size, unit, max_tile):
    """Pick (tile, padded_size): tile is a multiple of `unit`, <= max_tile, and
    divides padded_size exactly (prefer divisors of round_up(size, unit) to
    avoid extra zero padding)."""
    sp = _round_up(size, unit)
    if sp <= max_tile:
        return sp, sp
    d = sp // unit
    best = 1
    for m in range(max_tile // unit, 0, -1):
        if d % m == 0:
            best = m
            break
    tile = best * unit
    if tile * 2 >= max_tile:
        return tile, sp
    # poor divisor -> take max_tile and pay a little extra zero padding
    return max_tile, _round_up(sp, max_tile)


# ----------------------------------------------------------------------------
# Pallas kernel 1: C = relu?(A @ B + bias), tiled over (M, N, K)
#   A/B tiles are bf16, accumulation in f32 VMEM scratch, K is the last
#   ("arbitrary") grid axis; output written (cast to o_ref.dtype) on the
#   final K step.
# ----------------------------------------------------------------------------
def _mm_bias_kernel(a_ref, b_ref, bias_ref, o_ref, acc_ref, *, relu):
    k = pl.program_id(2)

    @pl.when(k == 0)
    def _():
        acc_ref[...] = jnp.zeros_like(acc_ref)

    acc_ref[...] += jnp.dot(a_ref[...], b_ref[...],
                            preferred_element_type=jnp.float32)

    @pl.when(k == pl.num_programs(2) - 1)
    def _():
        out = acc_ref[...] + bias_ref[...]          # (1, tn) broadcasts over rows
        if relu:
            out = jnp.maximum(out, 0.0)
        o_ref[...] = out.astype(o_ref.dtype)


def matmul_bias_relu(a, w_p, b_p, lm, *, relu, out_dtype=jnp.float32):
    """a: (M, K); w_p: (Kp, Np) bf16 (pre-padded); b_p: (1, Np) f32.
    lm: static layer metadata (tk, tn, K, N). Returns (M, N) out_dtype."""
    M, K = a.shape
    Kp, Np = w_p.shape
    tk, tn = lm["tk"], lm["tn"]
    tm, Mp = _pick_tile(M, 8, MAX_TM)

    a_p = jnp.pad(a.astype(jnp.bfloat16), ((0, Mp - M), (0, Kp - K)))

    out = pl.pallas_call(
        functools.partial(_mm_bias_kernel, relu=relu),
        out_shape=jax.ShapeDtypeStruct((Mp, Np), out_dtype),
        grid=(Mp // tm, Np // tn, Kp // tk),
        in_specs=[
            pl.BlockSpec((tm, tk), lambda i, j, k: (i, k)),
            pl.BlockSpec((tk, tn), lambda i, j, k: (k, j)),
            pl.BlockSpec((1, tn), lambda i, j, k: (0, j)),
        ],
        out_specs=pl.BlockSpec((tm, tn), lambda i, j, k: (i, j)),
        scratch_shapes=[pltpu.VMEM((tm, tn), jnp.float32)],
        compiler_params=pltpu.CompilerParams(
            dimension_semantics=("parallel", "parallel", "arbitrary"),
            vmem_limit_bytes=VMEM_LIMIT,
        ),
    )(a_p, w_p, b_p)
    return out[:M, :lm["N"]]


# ----------------------------------------------------------------------------
# Pallas kernel 2: fused FC head  v = (relu(x @ W4 + b4)) @ W5 + b5
#   Hidden (tm, 512) tile lives only in the VMEM accumulator; W5 stays resident.
# ----------------------------------------------------------------------------
def _fc_head_kernel(x_ref, w4_ref, b4_ref, w5_ref, b5_ref, o_ref, acc_ref):
    k = pl.program_id(1)

    @pl.when(k == 0)
    def _():
        acc_ref[...] = jnp.zeros_like(acc_ref)

    acc_ref[...] += jnp.dot(x_ref[...], w4_ref[...],
                            preferred_element_type=jnp.float32)

    @pl.when(k == pl.num_programs(1) - 1)
    def _():
        h = jnp.maximum(acc_ref[...] + b4_ref[...], 0.0)
        v = jnp.dot(h.astype(w5_ref.dtype), w5_ref[...],
                    preferred_element_type=jnp.float32)
        o_ref[...] = v + b5_ref[...]


def fc_head(x, w4_p, b4_p, w5_p, b5_p, fm):
    """x: (M, 3136) HWC-ordered bf16 features -> value (M, 1) f32."""
    M, K = x.shape
    Kp, Hd = w4_p.shape                    # Hd = 512 hidden
    tk = fm["tk"]
    tm, Mp = _pick_tile(M, 8, 256)

    x_p = jnp.pad(x.astype(jnp.bfloat16), ((0, Mp - M), (0, Kp - K)))

    out = pl.pallas_call(
        _fc_head_kernel,
        out_shape=jax.ShapeDtypeStruct((Mp, 128), jnp.float32),
        grid=(Mp // tm, Kp // tk),
        in_specs=[
            pl.BlockSpec((tm, tk), lambda i, k: (i, k)),
            pl.BlockSpec((tk, Hd), lambda i, k: (k, 0)),
            pl.BlockSpec((1, Hd), lambda i, k: (0, 0)),
            pl.BlockSpec((Hd, 128), lambda i, k: (0, 0)),
            pl.BlockSpec((1, 128), lambda i, k: (0, 0)),
        ],
        out_specs=pl.BlockSpec((tm, 128), lambda i, k: (i, 0)),
        scratch_shapes=[pltpu.VMEM((tm, Hd), jnp.float32)],
        compiler_params=pltpu.CompilerParams(
            dimension_semantics=("parallel", "arbitrary"),
            vmem_limit_bytes=VMEM_LIMIT,
        ),
    )(x_p, w4_p, b4_p, w5_p, b5_p)
    return out[:M, :1]


# ----------------------------------------------------------------------------
# Conv2d (valid padding, stride s), NHWC: strided-slice im2col + Pallas matmul
# ----------------------------------------------------------------------------
def conv2d_relu(x, w_p, b_p, lm):
    """x: (N, H, W, C) NHWC bf16; weights pre-flattened to (kh*kw*C, C_out).
    Returns (N, oh, ow, C_out) bf16."""
    N, H, W, C = x.shape
    kh, kw, s = lm["kh"], lm["kw"], lm["stride"]
    oh = (H - kh) // s + 1
    ow = (W - kw) // s + 1
    # Patch features ordered (kh, kw, C) -- matches prepare_params' weight layout.
    cols = [
        x[:, i:i + (oh - 1) * s + 1:s, j:j + (ow - 1) * s + 1:s, :]
        for i in range(kh) for j in range(kw)
    ]
    patches = jnp.concatenate(cols, axis=-1).reshape(N * oh * ow, kh * kw * C)
    y = matmul_bias_relu(patches, w_p, b_p, lm, relu=True,
                         out_dtype=jnp.bfloat16)          # (N*oh*ow, C_out) bf16
    return y.reshape(N, oh, ow, lm["N"])


# ----------------------------------------------------------------------------
# Parameters
# ----------------------------------------------------------------------------
def init_params(key, in_ch):
    ks = jax.random.split(key, 10)

    def uni(k, shape, fan_in):
        bound = 1.0 / jnp.sqrt(jnp.float32(fan_in))
        return jax.random.uniform(k, shape, jnp.float32, -bound, bound)

    p = {}
    p["w1"] = uni(ks[0], (32, in_ch, 8, 8), in_ch * 8 * 8)
    p["b1"] = uni(ks[1], (32,), in_ch * 8 * 8)
    p["w2"] = uni(ks[2], (64, 32, 4, 4), 32 * 4 * 4)
    p["b2"] = uni(ks[3], (64,), 32 * 4 * 4)
    p["w3"] = uni(ks[4], (64, 64, 3, 3), 64 * 3 * 3)
    p["b3"] = uni(ks[5], (64,), 64 * 3 * 3)
    p["w4"] = uni(ks[6], (512, 3136), 3136)
    p["b4"] = uni(ks[7], (512,), 3136)
    p["w5"] = uni(ks[8], (1, 512), 512)
    p["b5"] = uni(ks[9], (1,), 512)
    return p


def prepare_params(params):
    """One-time weight preprocessing: transpose to matmul layout, pad to
    (8,128)-aligned tiles, cast to bf16.  Returns (static_meta, device_arrays)."""
    meta, arrs = {}, {}

    def add_conv(name, w, b, stride):
        c_out, c_in, kh, kw = w.shape
        K, N = kh * kw * c_in, c_out
        tk, Kp = _pick_tile(K, 128, MAX_TK)
        tn, Np = _pick_tile(N, 128, MAX_TN)
        # reduction index order (kh, kw, c_in) to match the NHWC patch layout
        w2d = w.transpose(2, 3, 1, 0).reshape(K, N)
        arrs[name + "_w"] = jnp.pad(
            w2d.astype(jnp.float32), ((0, Kp - K), (0, Np - N))).astype(jnp.bfloat16)
        arrs[name + "_b"] = jnp.pad(
            b.astype(jnp.float32), ((0, Np - N),)).reshape(1, Np)
        meta[name] = dict(kh=kh, kw=kw, stride=stride, K=K, N=N, tk=tk, tn=tn)

    add_conv("conv1", params["w1"], params["b1"], 4)
    add_conv("conv2", params["w2"], params["b2"], 2)
    add_conv("conv3", params["w3"], params["b3"], 1)

    # Fused FC head.  PyTorch flattens (C, H, W); our activations are HWC, so
    # permute w4's columns once here:  (512, C*H*W) -> (H*W*C, 512).
    c, hh, ww = 64, 7, 7
    w4 = params["w4"].reshape(512, c, hh, ww).transpose(0, 2, 3, 1)
    w4 = w4.reshape(512, hh * ww * c).T                              # (3136, 512)
    K = w4.shape[0]
    tk, Kp = _pick_tile(K, 128, MAX_TK)
    arrs["fc_w4"] = jnp.pad(
        w4.astype(jnp.float32), ((0, Kp - K), (0, 0))).astype(jnp.bfloat16)
    arrs["fc_b4"] = params["b4"].astype(jnp.float32).reshape(1, 512)
    arrs["fc_w5"] = jnp.pad(
        params["w5"].T.astype(jnp.float32), ((0, 0), (0, 127))).astype(jnp.bfloat16)
    arrs["fc_b5"] = jnp.pad(
        params["b5"].astype(jnp.float32), ((0, 127),)).reshape(1, 128)
    meta["fc"] = dict(K=K, tk=tk)
    return meta, arrs


# ----------------------------------------------------------------------------
# Forward
# ----------------------------------------------------------------------------
def critic_forward(meta, arrays, x_nchw):
    """x_nchw: (N, C, 84, 84) -> value (N, 1) f32."""
    # NHWC once, bf16 once; activations stay bf16 between layers.
    x = jnp.transpose(x_nchw, (0, 2, 3, 1)).astype(jnp.bfloat16)
    h = conv2d_relu(x, arrays["conv1_w"], arrays["conv1_b"], meta["conv1"])  # (N,20,20,32)
    h = conv2d_relu(h, arrays["conv2_w"], arrays["conv2_b"], meta["conv2"])  # (N, 9, 9,64)
    h = conv2d_relu(h, arrays["conv3_w"], arrays["conv3_b"], meta["conv3"])  # (N, 7, 7,64)
    h = h.reshape(h.shape[0], -1)                                    # (N, 3136) HWC order
    return fc_head(h, arrays["fc_w4"], arrays["fc_b4"],
                   arrays["fc_w5"], arrays["fc_b5"], meta["fc"])     # (N, 1)


def critic_forward_ref(params, x):
    """Pure-JAX f32 reference (lax.conv) for correctness checking."""
    def conv(x, w, b, s):
        y = lax.conv_general_dilated(
            x, w, window_strides=(s, s), padding="VALID",
            dimension_numbers=("NCHW", "OIHW", "NCHW"))
        return jax.nn.relu(y + b[None, :, None, None])

    h = conv(x, params["w1"], params["b1"], 4)
    h = conv(h, params["w2"], params["b2"], 2)
    h = conv(h, params["w3"], params["b3"], 1)
    h = h.reshape(h.shape[0], -1)
    h = jax.nn.relu(h @ params["w4"].T + params["b4"])
    return h @ params["w5"].T + params["b5"]


if __name__ == "__main__":
    key = jax.random.PRNGKey(0)
    k_x, k_p = jax.random.split(key)

    # state_dim = (4, 84, 84): Linear(3136, 512) forces 84x84 spatial, 4 frames.
    batch, in_ch = 2, 4
    x = jax.random.normal(k_x, (batch, in_ch, 84, 84), jnp.float32)
    params = init_params(k_p, in_ch)
    meta, arrays = prepare_params(params)

    fwd = jax.jit(functools.partial(critic_forward, meta))
    out = jax.block_until_ready(fwd(arrays, x))
    assert out.shape == (batch, 1), out.shape

    ref = critic_forward_ref(params, x)
    max_err = float(jnp.max(jnp.abs(out - ref)))
    # bf16 MXU operands / bf16 inter-layer activations -> looser tolerance.
    assert jnp.allclose(out, ref, rtol=2e-2, atol=2e-2), max_err

    print("KERNEL_OK")
</pallas_src>

<mosaic_0001>
module attributes {stable_mosaic.version = 11 : i64} {
  func.func @_mm_bias_kernel(%arg0: i32, %arg1: i32, %arg2: i32, %arg3: memref<400x256xbf16, #tpu.memory_space<vmem>>, %arg4: memref<256x128xbf16, #tpu.memory_space<vmem>>, %arg5: memref<1x128xf32, #tpu.memory_space<vmem>>, %arg6: memref<400x128xbf16, #tpu.memory_space<vmem>>, %arg7: memref<400x128xf32, #tpu.memory_space<vmem>>) attributes {dimension_semantics = [#tpu.dimension_semantics<parallel>, #tpu.dimension_semantics<parallel>, #tpu.dimension_semantics<arbitrary>], iteration_bounds = array<i64: 2, 1, 1>, scalar_prefetch = 0 : i64, scratch_operands = 1 : i64, tpu.core_type = #tpu.core_type<tc>, window_params = [{transform_indices = @transform_0, window_bounds = array<i64: 400, 256>}, {transform_indices = @transform_1, window_bounds = array<i64: 256, 128>}, {transform_indices = @transform_2, window_bounds = array<i64: 1, 128>}, {transform_indices = @transform_3, window_bounds = array<i64: 400, 128>}]} {
    %c0_i32 = arith.constant 0 : i32
    %0 = arith.cmpi eq, %arg2, %c0_i32 : i32
    %1 = arith.extui %0 : i1 to i32
    %c0_i32_0 = arith.constant 0 : i32
    %2 = arith.cmpi ne, %1, %c0_i32_0 : i32
    scf.if %2 {
      %cst_10 = arith.constant 0.000000e+00 : f32
      %12 = vector.broadcast %cst_10 : f32 to vector<400x128xf32>
      %c0_11 = arith.constant 0 : index
      %c0_12 = arith.constant 0 : index
      %13 = vector.load %arg7[%c0_11, %c0_12] : memref<400x128xf32, #tpu.memory_space<vmem>>, vector<400x128xf32>
      tpu.vector_store %arg7[%c0_11, %c0_12], %12 {strides = array<i32>} : memref<400x128xf32, #tpu.memory_space<vmem>>, vector<400x128xf32>,
    } else {
    }
    %c0 = arith.constant 0 : index
    %c0_1 = arith.constant 0 : index
    %3 = vector.load %arg7[%c0, %c0_1] : memref<400x128xf32, #tpu.memory_space<vmem>>, vector<400x128xf32>
    %c0_2 = arith.constant 0 : index
    %c0_3 = arith.constant 0 : index
    %4 = vector.load %arg3[%c0_2, %c0_3] : memref<400x256xbf16, #tpu.memory_space<vmem>>, vector<400x256xbf16>
    %c0_4 = arith.constant 0 : index
    %c0_5 = arith.constant 0 : index
    %5 = vector.load %arg4[%c0_4, %c0_5] : memref<256x128xbf16, #tpu.memory_space<vmem>>, vector<256x128xbf16>
    %cst = arith.constant dense<0.000000e+00> : vector<400x128xf32>
    %6 = tpu.matmul %4, %5, %cst {dimension_numbers = #tpu.dot_dimension_numbers<[1], [0], [0], [1], [0, 0, 1, 1], [], []>} : vector<400x256xbf16>, vector<256x128xbf16>, vector<400x128xf32> -> vector<400x128xf32>
    %7 = arith.addf %3, %6 : vector<400x128xf32>
    %c0_6 = arith.constant 0 : index
    %c0_7 = arith.constant 0 : index
    %8 = vector.load %arg7[%c0_6, %c0_7] : memref<400x128xf32, #tpu.memory_space<vmem>>, vector<400x128xf32>
    tpu.vector_store %arg7[%c0_6, %c0_7], %7 {strides = array<i32>} : memref<400x128xf32, #tpu.memory_space<vmem>>, vector<400x128xf32>,
    %c0_i32_8 = arith.constant 0 : i32
    %9 = arith.cmpi eq, %arg2, %c0_i32_8 : i32
    %10 = arith.extui %9 : i1 to i32
    %c0_i32_9 = arith.constant 0 : i32
    %11 = arith.cmpi ne, %10, %c0_i32_9 : i32
    scf.if %11 {
      %c0_10 = arith.constant 0 : index
      %c0_11 = arith.constant 0 : index
      %12 = vector.load %arg7[%c0_10, %c0_11] : memref<400x128xf32, #tpu.memory_space<vmem>>, vector<400x128xf32>
      %c0_12 = arith.constant 0 : index
      %c0_13 = arith.constant 0 : index
      %13 = vector.load %arg5[%c0_12, %c0_13] : memref<1x128xf32, #tpu.memory_space<vmem>>, vector<1x128xf32>
      %14 = vector.broadcast %13 : vector<1x128xf32> to vector<400x128xf32>
      %15 = arith.addf %12, %14 : vector<400x128xf32>
      %cst_14 = arith.constant 0.000000e+00 : f32
      %16 = vector.broadcast %cst_14 : f32 to vector<400x128xf32>
      %17 = arith.maximumf %15, %16 : vector<400x128xf32>
      %18 = arith.truncf %17 : vector<400x128xf32> to vector<400x128xbf16>
      %c0_15 = arith.constant 0 : index
      %c0_16 = arith.constant 0 : index
      %19 = vector.load %arg6[%c0_15, %c0_16] : memref<400x128xbf16, #tpu.memory_space<vmem>>, vector<400x128xbf16>
      tpu.vector_store %arg6[%c0_15, %c0_16], %18 {strides = array<i32>} : memref<400x128xbf16, #tpu.memory_space<vmem>>, vector<400x128xbf16>,
    } else {
    }
    return
  }
  func.func @transform_0(%arg0: i32, %arg1: i32, %arg2: i32) -> (i32, i32) {
    %c0_i32 = arith.constant 0 : i32
    return %arg0, %arg2 : i32, i32
  }
  func.func @transform_1(%arg0: i32, %arg1: i32, %arg2: i32) -> (i32, i32) {
    %c0_i32 = arith.constant 0 : i32
    return %arg2, %arg1 : i32, i32
  }
  func.func @transform_2(%arg0: i32, %arg1: i32, %arg2: i32) -> (i32, i32) {
    %c0_i32 = arith.constant 0 : i32
    %c0_i32_0 = arith.constant 0 : i32
    return %c0_i32, %arg1 : i32, i32
  }
  func.func @transform_3(%arg0: i32, %arg1: i32, %arg2: i32) -> (i32, i32) {
    %c0_i32 = arith.constant 0 : i32
    return %arg0, %arg1 : i32, i32
  }
}

module attributes {stable_mosaic.version = 11 : i64} {
  func.func @_mm_bias_kernel(%arg0: i32, %arg1: i32, %arg2: i32, %arg3: memref<168x512xbf16, #tpu.memory_space<vmem>>, %arg4: memref<512x128xbf16, #tpu.memory_space<vmem>>, %arg5: memref<1x128xf32, #tpu.memory_space<vmem>>, %arg6: memref<168x128xbf16, #tpu.memory_space<vmem>>, %arg7: memref<168x128xf32, #tpu.memory_space<vmem>>) attributes {dimension_semantics = [#tpu.dimension_semantics<parallel>, #tpu.dimension_semantics<parallel>, #tpu.dimension_semantics<arbitrary>], iteration_bounds = array<i64: 1, 1, 1>, scalar_prefetch = 0 : i64, scratch_operands = 1 : i64, tpu.core_type = #tpu.core_type<tc>, window_params = [{transform_indices = @transform_0, window_bounds = array<i64: 168, 512>}, {transform_indices = @transform_1, window_bounds = array<i64: 512, 128>}, {transform_indices = @transform_2, window_bounds = array<i64: 1, 128>}, {transform_indices = @transform_3, window_bounds = array<i64: 168, 128>}]} {
    %c0_i32 = arith.constant 0 : i32
    %0 = arith.cmpi eq, %arg2, %c0_i32 : i32
    %1 = arith.extui %0 : i1 to i32
    %c0_i32_0 = arith.constant 0 : i32
    %2 = arith.cmpi ne, %1, %c0_i32_0 : i32
    scf.if %2 {
      %cst_10 = arith.constant 0.000000e+00 : f32
      %12 = vector.broadcast %cst_10 : f32 to vector<168x128xf32>
      %c0_11 = arith.constant 0 : index
      %c0_12 = arith.constant 0 : index
      %13 = vector.load %arg7[%c0_11, %c0_12] : memref<168x128xf32, #tpu.memory_space<vmem>>, vector<168x128xf32>
      tpu.vector_store %arg7[%c0_11, %c0_12], %12 {strides = array<i32>} : memref<168x128xf32, #tpu.memory_space<vmem>>, vector<168x128xf32>,
    } else {
    }
    %c0 = arith.constant 0 : index
    %c0_1 = arith.constant 0 : index
    %3 = vector.load %arg7[%c0, %c0_1] : memref<168x128xf32, #tpu.memory_space<vmem>>, vector<168x128xf32>
    %c0_2 = arith.constant 0 : index
    %c0_3 = arith.constant 0 : index
    %4 = vector.load %arg3[%c0_2, %c0_3] : memref<168x512xbf16, #tpu.memory_space<vmem>>, vector<168x512xbf16>
    %c0_4 = arith.constant 0 : index
    %c0_5 = arith.constant 0 : index
    %5 = vector.load %arg4[%c0_4, %c0_5] : memref<512x128xbf16, #tpu.memory_space<vmem>>, vector<512x128xbf16>
    %cst = arith.constant dense<0.000000e+00> : vector<168x128xf32>
    %6 = tpu.matmul %4, %5, %cst {dimension_numbers = #tpu.dot_dimension_numbers<[1], [0], [0], [1], [0, 0, 1, 1], [], []>} : vector<168x512xbf16>, vector<512x128xbf16>, vector<168x128xf32> -> vector<168x128xf32>
    %7 = arith.addf %3, %6 : vector<168x128xf32>
    %c0_6 = arith.constant 0 : index
    %c0_7 = arith.constant 0 : index
    %8 = vector.load %arg7[%c0_6, %c0_7] : memref<168x128xf32, #tpu.memory_space<vmem>>, vector<168x128xf32>
    tpu.vector_store %arg7[%c0_6, %c0_7], %7 {strides = array<i32>} : memref<168x128xf32, #tpu.memory_space<vmem>>, vector<168x128xf32>,
    %c0_i32_8 = arith.constant 0 : i32
    %9 = arith.cmpi eq, %arg2, %c0_i32_8 : i32
    %10 = arith.extui %9 : i1 to i32
    %c0_i32_9 = arith.constant 0 : i32
    %11 = arith.cmpi ne, %10, %c0_i32_9 : i32
    scf.if %11 {
      %c0_10 = arith.constant 0 : index
      %c0_11 = arith.constant 0 : index
      %12 = vector.load %arg7[%c0_10, %c0_11] : memref<168x128xf32, #tpu.memory_space<vmem>>, vector<168x128xf32>
      %c0_12 = arith.constant 0 : index
      %c0_13 = arith.constant 0 : index
      %13 = vector.load %arg5[%c0_12, %c0_13] : memref<1x128xf32, #tpu.memory_space<vmem>>, vector<1x128xf32>
      %14 = vector.broadcast %13 : vector<1x128xf32> to vector<168x128xf32>
      %15 = arith.addf %12, %14 : vector<168x128xf32>
      %cst_14 = arith.constant 0.000000e+00 : f32
      %16 = vector.broadcast %cst_14 : f32 to vector<168x128xf32>
      %17 = arith.maximumf %15, %16 : vector<168x128xf32>
      %18 = arith.truncf %17 : vector<168x128xf32> to vector<168x128xbf16>
      %c0_15 = arith.constant 0 : index
      %c0_16 = arith.constant 0 : index
      %19 = vector.load %arg6[%c0_15, %c0_16] : memref<168x128xbf16, #tpu.memory_space<vmem>>, vector<168x128xbf16>
      tpu.vector_store %arg6[%c0_15, %c0_16], %18 {strides = array<i32>} : memref<168x128xbf16, #tpu.memory_space<vmem>>, vector<168x128xbf16>,
    } else {
    }
    return
  }
  func.func @transform_0(%arg0: i32, %arg1: i32, %arg2: i32) -> (i32, i32) {
    %c0_i32 = arith.constant 0 : i32
    return %arg0, %arg2 : i32, i32
  }
  func.func @transform_1(%arg0: i32, %arg1: i32, %arg2: i32) -> (i32, i32) {
    %c0_i32 = arith.constant 0 : i32
    return %arg2, %arg1 : i32, i32
  }
  func.func @transform_2(%arg0: i32, %arg1: i32, %arg2: i32) -> (i32, i32) {
    %c0_i32 = arith.constant 0 : i32
    %c0_i32_0 = arith.constant 0 : i32
    return %c0_i32, %arg1 : i32, i32
  }
  func.func @transform_3(%arg0: i32, %arg1: i32, %arg2: i32) -> (i32, i32) {
    %c0_i32 = arith.constant 0 : i32
    return %arg0, %arg1 : i32, i32
  }
}

module attributes {stable_mosaic.version = 11 : i64} {
  func.func @_mm_bias_kernel(%arg0: i32, %arg1: i32, %arg2: i32, %arg3: memref<104x640xbf16, #tpu.memory_space<vmem>>, %arg4: memref<640x128xbf16, #tpu.memory_space<vmem>>, %arg5: memref<1x128xf32, #tpu.memory_space<vmem>>, %arg6: memref<104x128xbf16, #tpu.memory_space<vmem>>, %arg7: memref<104x128xf32, #tpu.memory_space<vmem>>) attributes {dimension_semantics = [#tpu.dimension_semantics<parallel>, #tpu.dimension_semantics<parallel>, #tpu.dimension_semantics<arbitrary>], iteration_bounds = array<i64: 1, 1, 1>, scalar_prefetch = 0 : i64, scratch_operands = 1 : i64, tpu.core_type = #tpu.core_type<tc>, window_params = [{transform_indices = @transform_0, window_bounds = array<i64: 104, 640>}, {transform_indices = @transform_1, window_bounds = array<i64: 640, 128>}, {transform_indices = @transform_2, window_bounds = array<i64: 1, 128>}, {transform_indices = @transform_3, window_bounds = array<i64: 104, 128>}]} {
    %c0_i32 = arith.constant 0 : i32
    %0 = arith.cmpi eq, %arg2, %c0_i32 : i32
    %1 = arith.extui %0 : i1 to i32
    %c0_i32_0 = arith.constant 0 : i32
    %2 = arith.cmpi ne, %1, %c0_i32_0 : i32
    scf.if %2 {
      %cst_10 = arith.constant 0.000000e+00 : f32
      %12 = vector.broadcast %cst_10 : f32 to vector<104x128xf32>
      %c0_11 = arith.constant 0 : index
      %c0_12 = arith.constant 0 : index
      %13 = vector.load %arg7[%c0_11, %c0_12] : memref<104x128xf32, #tpu.memory_space<vmem>>, vector<104x128xf32>
      tpu.vector_store %arg7[%c0_11, %c0_12], %12 {strides = array<i32>} : memref<104x128xf32, #tpu.memory_space<vmem>>, vector<104x128xf32>,
    } else {
    }
    %c0 = arith.constant 0 : index
    %c0_1 = arith.constant 0 : index
    %3 = vector.load %arg7[%c0, %c0_1] : memref<104x128xf32, #tpu.memory_space<vmem>>, vector<104x128xf32>
    %c0_2 = arith.constant 0 : index
    %c0_3 = arith.constant 0 : index
    %4 = vector.load %arg3[%c0_2, %c0_3] : memref<104x640xbf16, #tpu.memory_space<vmem>>, vector<104x640xbf16>
    %c0_4 = arith.constant 0 : index
    %c0_5 = arith.constant 0 : index
    %5 = vector.load %arg4[%c0_4, %c0_5] : memref<640x128xbf16, #tpu.memory_space<vmem>>, vector<640x128xbf16>
    %cst = arith.constant dense<0.000000e+00> : vector<104x128xf32>
    %6 = tpu.matmul %4, %5, %cst {dimension_numbers = #tpu.dot_dimension_numbers<[1], [0], [0], [1], [0, 0, 1, 1], [], []>} : vector<104x640xbf16>, vector<640x128xbf16>, vector<104x128xf32> -> vector<104x128xf32>
    %7 = arith.addf %3, %6 : vector<104x128xf32>
    %c0_6 = arith.constant 0 : index
    %c0_7 = arith.constant 0 : index
    %8 = vector.load %arg7[%c0_6, %c0_7] : memref<104x128xf32, #tpu.memory_space<vmem>>, vector<104x128xf32>
    tpu.vector_store %arg7[%c0_6, %c0_7], %7 {strides = array<i32>} : memref<104x128xf32, #tpu.memory_space<vmem>>, vector<104x128xf32>,
    %c0_i32_8 = arith.constant 0 : i32
    %9 = arith.cmpi eq, %arg2, %c0_i32_8 : i32
    %10 = arith.extui %9 : i1 to i32
    %c0_i32_9 = arith.constant 0 : i32
    %11 = arith.cmpi ne, %10, %c0_i32_9 : i32
    scf.if %11 {
      %c0_10 = arith.constant 0 : index
      %c0_11 = arith.constant 0 : index
      %12 = vector.load %arg7[%c0_10, %c0_11] : memref<104x128xf32, #tpu.memory_space<vmem>>, vector<104x128xf32>
      %c0_12 = arith.constant 0 : index
      %c0_13 = arith.constant 0 : index
      %13 = vector.load %arg5[%c0_12, %c0_13] : memref<1x128xf32, #tpu.memory_space<vmem>>, vector<1x128xf32>
      %14 = vector.broadcast %13 : vector<1x128xf32> to vector<104x128xf32>
      %15 = arith.addf %12, %14 : vector<104x128xf32>
      %cst_14 = arith.constant 0.000000e+00 : f32
      %16 = vector.broadcast %cst_14 : f32 to vector<104x128xf32>
      %17 = arith.maximumf %15, %16 : vector<104x128xf32>
      %18 = arith.truncf %17 : vector<104x128xf32> to vector<104x128xbf16>
      %c0_15 = arith.constant 0 : index
      %c0_16 = arith.constant 0 : index
      %19 = vector.load %arg6[%c0_15, %c0_16] : memref<104x128xbf16, #tpu.memory_space<vmem>>, vector<104x128xbf16>
      tpu.vector_store %arg6[%c0_15, %c0_16], %18 {strides = array<i32>} : memref<104x128xbf16, #tpu.memory_space<vmem>>, vector<104x128xbf16>,
    } else {
    }
    return
  }
  func.func @transform_0(%arg0: i32, %arg1: i32, %arg2: i32) -> (i32, i32) {
    %c0_i32 = arith.constant 0 : i32
    return %arg0, %arg2 : i32, i32
  }
  func.func @transform_1(%arg0: i32, %arg1: i32, %arg2: i32) -> (i32, i32) {
    %c0_i32 = arith.constant 0 : i32
    return %arg2, %arg1 : i32, i32
  }
  func.func @transform_2(%arg0: i32, %arg1: i32, %arg2: i32) -> (i32, i32) {
    %c0_i32 = arith.constant 0 : i32
    %c0_i32_0 = arith.constant 0 : i32
    return %c0_i32, %arg1 : i32, i32
  }
  func.func @transform_3(%arg0: i32, %arg1: i32, %arg2: i32) -> (i32, i32) {
    %c0_i32 = arith.constant 0 : i32
    return %arg0, %arg1 : i32, i32
  }
}

module attributes {stable_mosaic.version = 11 : i64} {
  func.func @_fc_head_kernel(%arg0: i32, %arg1: i32, %arg2: memref<8x640xbf16, #tpu.memory_space<vmem>>, %arg3: memref<640x512xbf16, #tpu.memory_space<vmem>>, %arg4: memref<1x512xf32, #tpu.memory_space<vmem>>, %arg5: memref<512x128xbf16, #tpu.memory_space<vmem>>, %arg6: memref<1x128xf32, #tpu.memory_space<vmem>>, %arg7: memref<8x128xf32, #tpu.memory_space<vmem>>, %arg8: memref<8x512xf32, #tpu.memory_space<vmem>>) attributes {dimension_semantics = [#tpu.dimension_semantics<parallel>, #tpu.dimension_semantics<arbitrary>], iteration_bounds = array<i64: 1, 5>, scalar_prefetch = 0 : i64, scratch_operands = 1 : i64, tpu.core_type = #tpu.core_type<tc>, window_params = [{transform_indices = @transform_0, window_bounds = array<i64: 8, 640>}, {transform_indices = @transform_1, window_bounds = array<i64: 640, 512>}, {pipeline_mode = #tpu.pipeline_mode<synchronous>, transform_indices = @transform_2, window_bounds = array<i64: 1, 512>}, {pipeline_mode = #tpu.pipeline_mode<synchronous>, transform_indices = @transform_3, window_bounds = array<i64: 512, 128>}, {pipeline_mode = #tpu.pipeline_mode<synchronous>, transform_indices = @transform_4, window_bounds = array<i64: 1, 128>}, {transform_indices = @transform_5, window_bounds = array<i64: 8, 128>}]} {
    %c0_i32 = arith.constant 0 : i32
    %0 = arith.cmpi eq, %arg1, %c0_i32 : i32
    %1 = arith.extui %0 : i1 to i32
    %c0_i32_0 = arith.constant 0 : i32
    %2 = arith.cmpi ne, %1, %c0_i32_0 : i32
    scf.if %2 {
      %cst_9 = arith.constant 0.000000e+00 : f32
      %12 = vector.broadcast %cst_9 : f32 to vector<8x512xf32>
      %c0_10 = arith.constant 0 : index
      %c0_11 = arith.constant 0 : index
      %13 = vector.load %arg8[%c0_10, %c0_11] : memref<8x512xf32, #tpu.memory_space<vmem>>, vector<8x512xf32>
      tpu.vector_store %arg8[%c0_10, %c0_11], %12 {strides = array<i32>} : memref<8x512xf32, #tpu.memory_space<vmem>>, vector<8x512xf32>,
    } else {
    }
    %c0 = arith.constant 0 : index
    %c0_1 = arith.constant 0 : index
    %3 = vector.load %arg8[%c0, %c0_1] : memref<8x512xf32, #tpu.memory_space<vmem>>, vector<8x512xf32>
    %c0_2 = arith.constant 0 : index
    %c0_3 = arith.constant 0 : index
    %4 = vector.load %arg2[%c0_2, %c0_3] : memref<8x640xbf16, #tpu.memory_space<vmem>>, vector<8x640xbf16>
    %c0_4 = arith.constant 0 : index
    %c0_5 = arith.constant 0 : index
    %5 = vector.load %arg3[%c0_4, %c0_5] : memref<640x512xbf16, #tpu.memory_space<vmem>>, vector<640x512xbf16>
    %cst = arith.constant dense<0.000000e+00> : vector<8x512xf32>
    %6 = tpu.matmul %4, %5, %cst {dimension_numbers = #tpu.dot_dimension_numbers<[1], [0], [0], [1], [0, 0, 1, 1], [], []>} : vector<8x640xbf16>, vector<640x512xbf16>, vector<8x512xf32> -> vector<8x512xf32>
    %7 = arith.addf %3, %6 : vector<8x512xf32>
    %c0_6 = arith.constant 0 : index
    %c0_7 = arith.constant 0 : index
    %8 = vector.load %arg8[%c0_6, %c0_7] : memref<8x512xf32, #tpu.memory_space<vmem>>, vector<8x512xf32>
    tpu.vector_store %arg8[%c0_6, %c0_7], %7 {strides = array<i32>} : memref<8x512xf32, #tpu.memory_space<vmem>>, vector<8x512xf32>,
    %c4_i32 = arith.constant 4 : i32
    %9 = arith.cmpi eq, %arg1, %c4_i32 : i32
    %10 = arith.extui %9 : i1 to i32
    %c0_i32_8 = arith.constant 0 : i32
    %11 = arith.cmpi ne, %10, %c0_i32_8 : i32
    scf.if %11 {
      %c0_9 = arith.constant 0 : index
      %c0_10 = arith.constant 0 : index
      %12 = vector.load %arg8[%c0_9, %c0_10] : memref<8x512xf32, #tpu.memory_space<vmem>>, vector<8x512xf32>
      %c0_11 = arith.constant 0 : index
      %c0_12 = arith.constant 0 : index
      %13 = vector.load %arg4[%c0_11, %c0_12] : memref<1x512xf32, #tpu.memory_space<vmem>>, vector<1x512xf32>
      %14 = vector.broadcast %13 : vector<1x512xf32> to vector<8x512xf32>
      %15 = arith.addf %12, %14 : vector<8x512xf32>
      %cst_13 = arith.constant 0.000000e+00 : f32
      %16 = vector.broadcast %cst_13 : f32 to vector<8x512xf32>
      %17 = arith.maximumf %15, %16 : vector<8x512xf32>
      %18 = arith.truncf %17 : vector<8x512xf32> to vector<8x512xbf16>
      %c0_14 = arith.constant 0 : index
      %c0_15 = arith.constant 0 : index
      %19 = vector.load %arg5[%c0_14, %c0_15] : memref<512x128xbf16, #tpu.memory_space<vmem>>, vector<512x128xbf16>
      %cst_16 = arith.constant dense<0.000000e+00> : vector<8x128xf32>
      %20 = tpu.matmul %18, %19, %cst_16 {dimension_numbers = #tpu.dot_dimension_numbers<[1], [0], [0], [1], [0, 0, 1, 1], [], []>} : vector<8x512xbf16>, vector<512x128xbf16>, vector<8x128xf32> -> vector<8x128xf32>
      %c0_17 = arith.constant 0 : index
      %c0_18 = arith.constant 0 : index
      %21 = vector.load %arg6[%c0_17, %c0_18] : memref<1x128xf32, #tpu.memory_space<vmem>>, vector<1x128xf32>
      %22 = vector.broadcast %21 : vector<1x128xf32> to vector<8x128xf32>
      %23 = arith.addf %20, %22 : vector<8x128xf32>
      %c0_19 = arith.constant 0 : index
      %c0_20 = arith.constant 0 : index
      %24 = vector.load %arg7[%c0_19, %c0_20] : memref<8x128xf32, #tpu.memory_space<vmem>>, vector<8x128xf32>
      tpu.vector_store %arg7[%c0_19, %c0_20], %23 {strides = array<i32>} : memref<8x128xf32, #tpu.memory_space<vmem>>, vector<8x128xf32>,
    } else {
    }
    return
  }
  func.func @transform_0(%arg0: i32, %arg1: i32) -> (i32, i32) {
    %c0_i32 = arith.constant 0 : i32
    return %arg0, %arg1 : i32, i32
  }
  func.func @transform_1(%arg0: i32, %arg1: i32) -> (i32, i32) {
    %c0_i32 = arith.constant 0 : i32
    %c0_i32_0 = arith.constant 0 : i32
    return %arg1, %c0_i32 : i32, i32
  }
  func.func @transform_2(%arg0: i32, %arg1: i32) -> (i32, i32) {
    %c0_i32 = arith.constant 0 : i32
    %c0_i32_0 = arith.constant 0 : i32
    %c0_i32_1 = arith.constant 0 : i32
    return %c0_i32, %c0_i32_0 : i32, i32
  }
  func.func @transform_3(%arg0: i32, %arg1: i32) -> (i32, i32) {
    %c0_i32 = arith.constant 0 : i32
    %c0_i32_0 = arith.constant 0 : i32
    %c0_i32_1 = arith.constant 0 : i32
    return %c0_i32, %c0_i32_0 : i32, i32
  }
  func.func @transform_4(%arg0: i32, %arg1: i32) -> (i32, i32) {
    %c0_i32 = arith.constant 0 : i32
    %c0_i32_0 = arith.constant 0 : i32
    %c0_i32_1 = arith.constant 0 : i32
    return %c0_i32, %c0_i32_0 : i32, i32
  }
  func.func @transform_5(%arg0: i32, %arg1: i32) -> (i32, i32) {
    %c0_i32 = arith.constant 0 : i32
    %c0_i32_0 = arith.constant 0 : i32
    return %arg0, %c0_i32 : i32, i32
  }
}

</mosaic_0001>

<llo_original>
// kernel: critic_forward.4
$region0: #{critic_forward.4}
  #allocation0 [shape = 'u32[]', space=smem, size = 0x4, offset = 0x4, fixed_abs, tag = 'smem constant byte address 0x4 - core index']
  #allocation1 [shape = 'u32[144,128]{1,0:T(1,128)}', space=vmem, size = 0x12000, scoped, tag = 'internal scratch']
  #allocation2 [shape = 'f32[400,128]{1,0:T(8,128)}', space=vmem, size = 0x32000, scoped, tag = 'scratch operand']
  %s0 = inlined_call_operand.vmem [shape: bf16[800,256], index: 0, kind: input, shape index: {}]
  %s1 = inlined_call_operand.vmem [shape: bf16[256,128], index: 1, kind: input, shape index: {}]
  %s2 = inlined_call_operand.vmem [shape: f32[1,128], index: 2, kind: input, shape index: {}]
  %s3 = inlined_call_operand.vmem [shape: bf16[800,128], index: 3, kind: output, shape index: {}]
  %s4 = sld [smem:[#allocation0]]
  $region53: #{critic_forward.4} parent=0
    _
  %s6 = ssub.s32 1, %s4
  %s7 = scalar_select 0, %s6, %s4
  loop: start=0, step=1, limit=4
  $region2: #{critic_forward.4} parent=0 // loop_pre_header
    _
  $region3: #{critic_forward.4} parent=0 // loop_header
    %s9 = sphi 0, %s13
    %p10 = scmp.ge.s32.totalorder %s9, 4
    %s16 = sphi 0, %s35
    %s17 = sphi 0, %s31
    %s18 = sphi 0, %s27
    %s19 = sphi 0, %s16
    %s20 = sphi 0, %s17
    %s21 = sphi 0, %s18
    %s22 = sphi 0, %s19
    %s23 = sphi 0, %s20
    %s24 = sphi 0, %s21
    %s40 = sphi 0, %s42
    %s43 = sphi 0, %s40
    %s44 = sphi 0, %s43
    %s60 = sphi 0, %s44
    %s68 = sphi 0, %s70
    %s71 = sphi 0, %s68
    %s72 = sphi 0, %s71
    %s88 = sphi 0, %s72
    %s94 = sphi 0, %s96
    %s97 = sphi 0, %s94
    %s98 = sphi 0, %s97
    %s114 = sphi 0, %s98
    %s122 = sphi 0, %s124
    %s125 = sphi 0, %s122
    %s126 = sphi 0, %s125
    %s142 = sphi 0, %s126
  $region4: #{critic_forward.4} parent=0 // loop_header_branch
    %12 = sbr.rel (%p10) target = $region8
  $region5: #{critic_forward.4} parent=0 // loop_body
    %s14 = ssub.s32 %s9, 1
    %s15 = ssub.s32 %s9, 2
    %s25 = sadd.s32 1, %s18
    %p26 = scmp.ge.s32.totalorder %s25, 1
    %s27 = scalar_select %p26, 0, %s25
    %s28 = sadd.s32 1, %s17
    %s29 = scalar_select %p26, %s28, %s17
    %p30 = scmp.ge.s32.totalorder %s29, 1
    %s31 = scalar_select %p30, 0, %s29
    %s32 = sadd.s32 1, %s16
    %s33 = scalar_select %p30, %s32, %s16
    %p34 = scmp.ge.s32.totalorder %s33, 2
    %s35 = scalar_select %p34, 0, %s33
    %s36 = ssub.s32 %s16, %s35
    %s37 = ssub.s32 %s18, %s27
    %s38 = sor.u32 %s36, %s37
    %p39 = scmp.eq.s32.totalorder %s38, 0
    %s41 = sadd.s32 %s40, 1
    %s42 = scalar_select %p39, %s40, %s41
    %p45 = pneg %p39
    %p46 = scmp.eq.s32.totalorder %s9, 1
    %p47 = por %p45, %p46
    %p48 = scmp.ne.s32.totalorder %s40, %s43
    %p49 = scmp.eq.s32.totalorder %s9, 0
    %p50 = por %p48, %p49
    %p51 = scmp.ne.s32.totalorder %s40, %s43
    %p52 = scmp.eq.s32.totalorder %s14, 1
    %p53 = por %p51, %p52
    %p54 = scmp.ne.s32.totalorder %s43, %s44
    %p55 = scmp.eq.s32.totalorder %s14, 0
    %p56 = por %p54, %p55
    %p57 = scmp.ne.s32.totalorder %s43, %s44
    %p58 = scmp.eq.s32.totalorder %s15, 1
    %p59 = por %p57, %p58
    %p61 = scmp.ne.s32.totalorder %s44, %s60
    %p62 = scmp.eq.s32.totalorder %s15, 0
    %p63 = por %p61, %p62
    %s64 = ssub.s32 %s18, %s27
    %s65 = ssub.s32 %s17, %s31
    %s66 = sor.u32 %s64, %s65
    %p67 = scmp.eq.s32.totalorder %s66, 0
    %s69 = sadd.s32 %s68, 1
    %s70 = scalar_select %p67, %s68, %s69
    %p73 = pneg %p67
    %p74 = scmp.eq.s32.totalorder %s9, 1
    %p75 = por %p73, %p74
    %p76 = scmp.ne.s32.totalorder %s68, %s71
    %p77 = scmp.eq.s32.totalorder %s9, 0
    %p78 = por %p76, %p77
    %p79 = scmp.ne.s32.totalorder %s68, %s71
    %p80 = scmp.eq.s32.totalorder %s14, 1
    %p81 = por %p79, %p80
    %p82 = scmp.ne.s32.totalorder %s71, %s72
    %p83 = scmp.eq.s32.totalorder %s14, 0
    %p84 = por %p82, %p83
    %p85 = scmp.ne.s32.totalorder %s71, %s72
    %p86 = scmp.eq.s32.totalorder %s15, 1
    %p87 = por %p85, %p86
    %p89 = scmp.ne.s32.totalorder %s72, %s88
    %p90 = scmp.eq.s32.totalorder %s15, 0
    %p91 = por %p89, %p90
    %s92 = ssub.s32 %s17, %s31
    %p93 = scmp.eq.s32.totalorder %s92, 0
    %s95 = sadd.s32 %s94, 1
    %s96 = scalar_select %p93, %s94, %s95
    %p99 = pneg %p93
    %p100 = scmp.eq.s32.totalorder %s9, 1
    %p101 = por %p99, %p100
    %p102 = scmp.ne.s32.totalorder %s94, %s97
    %p103 = scmp.eq.s32.totalorder %s9, 0
    %p104 = por %p102, %p103
    %p105 = scmp.ne.s32.totalorder %s94, %s97
    %p106 = scmp.eq.s32.totalorder %s14, 1
    %p107 = por %p105, %p106
    %p108 = scmp.ne.s32.totalorder %s97, %s98
    %p109 = scmp.eq.s32.totalorder %s14, 0
    %p110 = por %p108, %p109
    %p111 = scmp.ne.s32.totalorder %s97, %s98
    %p112 = scmp.eq.s32.totalorder %s15, 1
    %p113 = por %p111, %p112
    %p115 = scmp.ne.s32.totalorder %s98, %s114
    %p116 = scmp.eq.s32.totalorder %s15, 0
    %p117 = por %p115, %p116
    %s118 = ssub.s32 %s16, %s35
    %s119 = ssub.s32 %s17, %s31
    %s120 = sor.u32 %s118, %s119
    %p121 = scmp.eq.s32.totalorder %s120, 0
    %s123 = sadd.s32 %s122, 1
    %s124 = scalar_select %p121, %s122, %s123
    %p127 = pneg %p121
    %p128 = scmp.eq.s32.totalorder %s9, 1
    %p129 = por %p127, %p128
    %p130 = scmp.ne.s32.totalorder %s122, %s125
    %p131 = scmp.eq.s32.totalorder %s9, 0
    %p132 = por %p130, %p131
    %p133 = scmp.ne.s32.totalorder %s122, %s125
    %p134 = scmp.eq.s32.totalorder %s14, 1
    %p135 = por %p133, %p134
    %p136 = scmp.ne.s32.totalorder %s125, %s126
    %p137 = scmp.eq.s32.totalorder %s14, 0
    %p138 = por %p136, %p137
    %p139 = scmp.ne.s32.totalorder %s125, %s126
    %p140 = scmp.eq.s32.totalorder %s15, 1
    %p141 = por %p139, %p140
    %p143 = scmp.ne.s32.totalorder %s126, %s142
    %p144 = scmp.eq.s32.totalorder %s15, 0
    %p145 = por %p143, %p144
    %p146 = scmp.le.s32.totalorder 1, %s9
    %p147 = scmp.lt.s32.totalorder %s9, 3
    %p148 = pnand %p146, %p147
    %p149 = pneg %p148
    // Predicated region
    $region9: #{critic_forward.4} parent=5 // pred_check
      _
    $region10: #{critic_forward.4} parent=5 // pred_check_branch
      %151 = sbr.rel (%p148) target = $region12
    $region11: #{critic_forward.4} parent=5 // pred_region
      %s152 = ssub.s32 %s9, 1
      // Predicated region
      $region13: #{critic_forward.4} parent=11 // pred_check
        %p153 = pneg %p84
      $region14: #{critic_forward.4} parent=11 // pred_check_branch
        %155 = sbr.rel (%p153) target = $region16
      $region15: #{critic_forward.4} parent=11 // pred_region
        %s156 = smul.u32 32, %s21
        %p157 = scmp.lt.s32.totalorder %s156, 31
        %s158 = scalar_select %p157, %s156, 31
        %p159 = scmp.lt.s32.totalorder %s20, 0
        %s160 = scalar_select %p159, %s20, 0
        %s161 = sadd.s32 %s160, %s158
        %s162 = smul.addr %s161, 4
        %s163 = scalar_lea.vmem %s1, %s162
        %s164 = smul.u32 32, %s21
      $region16: #{critic_forward.4} parent=11 // pred_fallthru
        _
      // Predicated region
      $region17: #{critic_forward.4} parent=11 // pred_check
        %p165 = pneg %p110
      $region18: #{critic_forward.4} parent=11 // pred_check_branch
        %167 = sbr.rel (%p165) target = $region20
      $region19: #{critic_forward.4} parent=11 // pred_region
        %p168 = scmp.lt.s32.totalorder %s20, 0
        %s169 = scalar_select %p168, %s20, 0
        %s170 = scalar_lea.vmem %s2, %s169
      $region20: #{critic_forward.4} parent=11 // pred_fallthru
        _
    $region12: #{critic_forward.4} parent=5 // pred_fallthru
      _
    %p171 = scmp.lt.s32.totalorder %s9, 2
    // Predicated region
    $region21: #{critic_forward.4} parent=5 // pred_check
      %p172 = pneg %p171
    $region22: #{critic_forward.4} parent=5 // pred_check_branch
      %174 = sbr.rel (%p172) target = $region24
    $region23: #{critic_forward.4} parent=5 // pred_region
      // Predicated region
      $region25: #{critic_forward.4} parent=23 // pred_check
        %p175 = pneg %p50
      $region26: #{critic_forward.4} parent=23 // pred_check_branch
        %177 = sbr.rel (%p175) target = $region28
      $region27: #{critic_forward.4} parent=23 // pred_region
        %s178 = smul.u32 50, %s16
        %s179 = smul.u32 2, %s18
        %p180 = scmp.lt.s32.totalorder %s178, 99
        %s181 = scalar_select %p180, %s178, 99
        %p182 = scmp.lt.s32.totalorder %s179, 1
        %s183 = scalar_select %p182, %s179, 1
        %s184 = smul.addr %s181, 2
        %s185 = sadd.s32 %s183, %s184
        %s186 = smul.addr %s185, 4
        %s187 = scalar_lea.vmem %s0, %s186
        %s188 = smul.u32 50, %s16
        %s189 = smul.u32 2, %s18
      $region28: #{critic_forward.4} parent=23 // pred_fallthru
        _
    $region24: #{critic_forward.4} parent=5 // pred_fallthru
      _
    %p190 = scmp.le.s32.totalorder 1, %s9
    %p191 = scmp.lt.s32.totalorder %s9, 3
    %p192 = pnand %p190, %p191
    %p193 = pneg %p192
    // Predicated region
    $region29: #{critic_forward.4} parent=5 // pred_check
      _
    $region30: #{critic_forward.4} parent=5 // pred_check_branch
      %195 = sbr.rel (%p192) target = $region32
    $region31: #{critic_forward.4} parent=5 // pred_region
      %s196 = ssub.s32 %s9, 1
      %s197 = smul.u32 50, %s19
      %s198 = smul.u32 2, %s21
      %p199 = scmp.lt.s32.totalorder %s197, 99
      %s200 = scalar_select %p199, %s197, 99
      %p201 = scmp.lt.s32.totalorder %s198, 1
      %s202 = scalar_select %p201, %s198, 1
      %s203 = smul.addr %s200, 2
      %s204 = sadd.s32 %s202, %s203
      %s205 = smul.addr %s204, 4
      %s206 = scalar_lea.vmem %s0, %s205
      %p207 = pneg %p56
      %p208 = pneg %p53
      %s209 = smul.u32 32, %s21
      %p210 = scmp.lt.s32.totalorder %s209, 31
      %s211 = scalar_select %p210, %s209, 31
      %p212 = scmp.lt.s32.totalorder %s20, 0
      %s213 = scalar_select %p212, %s20, 0
      %s214 = sadd.s32 %s213, %s211
      %s215 = smul.addr %s214, 4
      %s216 = scalar_lea.vmem %s1, %s215
      %p217 = pneg %p84
      %p218 = pneg %p81
      %p219 = scmp.lt.s32.totalorder %s20, 0
      %s220 = scalar_select %p219, %s20, 0
      %s221 = scalar_lea.vmem %s2, %s220
      %p222 = pneg %p110
      %p223 = pneg %p107
      %p224 = pneg %p138
      %p225 = pneg %p135
      %s226 = smul.u32 50, %s19
      %p227 = scmp.lt.s32.totalorder %s226, 99
      %s228 = scalar_select %p227, %s226, 99
      %p229 = scmp.lt.s32.totalorder %s20, 0
      %s230 = scalar_select %p229, %s20, 0
      %s231 = sadd.s32 %s230, %s228
      %s232 = smul.addr %s231, 4
      %s233 = scalar_lea.vmem %s3, %s232
      %s234 = smul.u32 50, %s19
      %s235 = smul.u32 2, %s21
      %p236 = scmp.lt.s32.totalorder %s234, 99
      %s237 = scalar_select %p236, %s234, 99
      %p238 = scmp.lt.s32.totalorder %s235, 1
      %s239 = scalar_select %p238, %s235, 1
      %s240 = smul.addr %s237, 2
      %s241 = sadd.s32 %s239, %s240
      %s242 = smul.addr %s241, 4
      %s243 = scalar_lea.vmem %s0, %s242
      %s244 = smul.u32 50, %s19
      %s245 = smul.u32 2, %s21
      %s246 = smul.u32 32, %s21
      %p247 = scmp.lt.s32.totalorder %s246, 31
      %s248 = scalar_select %p247, %s246, 31
      %p249 = scmp.lt.s32.totalorder %s20, 0
      %s250 = scalar_select %p249, %s20, 0
      %s251 = sadd.s32 %s250, %s248
      %s252 = smul.addr %s251, 4
      %s253 = scalar_lea.vmem %s1, %s252
      %s254 = smul.u32 32, %s21
      %p255 = scmp.lt.s32.totalorder %s20, 0
      %s256 = scalar_select %p255, %s20, 0
      %s257 = scalar_lea.vmem %s2, %s256
      %s258 = smul.u32 50, %s19
      %p259 = scmp.lt.s32.totalorder %s258, 99
      %s260 = scalar_select %p259, %s258, 99
      %p261 = scmp.lt.s32.totalorder %s20, 0
      %s262 = scalar_select %p261, %s20, 0
      %s263 = sadd.s32 %s262, %s260
      %s264 = smul.addr %s263, 4
      %s265 = scalar_lea.vmem %s3, %s264
      %s266 = smul.u32 50, %s19
      %p268 = scmp.eq.s32.totalorder %s21, 0
      // Predicated region
      $region33: #{critic_forward.4} parent=31 // pred_check
        %p269 = pneg %p268
      $region34: #{critic_forward.4} parent=31 // pred_check_branch
        %271 = sbr.rel (%p269) target = $region36
      $region35: #{critic_forward.4} parent=31 // pred_region
        %272 = vst [vmem:[#allocation2] sm:$0xff] 0.0
        %273 = vst [vmem:[#allocation2 + $0x8] sm:$0xff] 0.0
        %274 = vst [vmem:[#allocation2 + $0x10] sm:$0xff] 0.0
        %275 = vst [vmem:[#allocation2 + $0x18] sm:$0xff] 0.0
        %276 = vst [vmem:[#allocation2 + $0x20] sm:$0xff] 0.0
        %277 = vst [vmem:[#allocation2 + $0x28] sm:$0xff] 0.0
        %278 = vst [vmem:[#allocation2 + $0x30] sm:$0xff] 0.0
        %279 = vst [vmem:[#allocation2 + $0x38] sm:$0xff] 0.0
        %280 = vst [vmem:[#allocation2 + $0x40] sm:$0xff] 0.0
        %281 = vst [vmem:[#allocation2 + $0x48] sm:$0xff] 0.0
        %282 = vst [vmem:[#allocation2 + $0x50] sm:$0xff] 0.0
        %283 = vst [vmem:[#allocation2 + $0x58] sm:$0xff] 0.0
        %284 = vst [vmem:[#allocation2 + $0x60] sm:$0xff] 0.0
        %285 = vst [vmem:[#allocation2 + $0x68] sm:$0xff] 0.0
        %286 = vst [vmem:[#allocation2 + $0x70] sm:$0xff] 0.0
        %287 = vst [vmem:[#allocation2 + $0x78] sm:$0xff] 0.0
        %288 = vst [vmem:[#allocation2 + $0x80] sm:$0xff] 0.0
        %289 = vst [vmem:[#allocation2 + $0x88] sm:$0xff] 0.0
        %290 = vst [vmem:[#allocation2 + $0x90] sm:$0xff] 0.0
        %291 = vst [vmem:[#allocation2 + $0x98] sm:$0xff] 0.0
        %292 = vst [vmem:[#allocation2 + $0xa0] sm:$0xff] 0.0
        %293 = vst [vmem:[#allocation2 + $0xa8] sm:$0xff] 0.0
        %294 = vst [vmem:[#allocation2 + $0xb0] sm:$0xff] 0.0
        %295 = vst [vmem:[#allocation2 + $0xb8] sm:$0xff] 0.0
        %296 = vst [vmem:[#allocation2 + $0xc0] sm:$0xff] 0.0
        %297 = vst [vmem:[#allocation2 + $0xc8] sm:$0xff] 0.0
        %298 = vst [vmem:[#allocation2 + $0xd0] sm:$0xff] 0.0
        %299 = vst [vmem:[#allocation2 + $0xd8] sm:$0xff] 0.0
        %300 = vst [vmem:[#allocation2 + $0xe0] sm:$0xff] 0.0
        %301 = vst [vmem:[#allocation2 + $0xe8] sm:$0xff] 0.0
        %302 = vst [vmem:[#allocation2 + $0xf0] sm:$0xff] 0.0
        %303 = vst [vmem:[#allocation2 + $0xf8] sm:$0xff] 0.0
        %304 = vst [vmem:[#allocation2 + $0x100] sm:$0xff] 0.0
        %305 = vst [vmem:[#allocation2 + $0x108] sm:$0xff] 0.0
        %306 = vst [vmem:[#allocation2 + $0x110] sm:$0xff] 0.0
        %307 = vst [vmem:[#allocation2 + $0x118] sm:$0xff] 0.0
        %308 = vst [vmem:[#allocation2 + $0x120] sm:$0xff] 0.0
        %309 = vst [vmem:[#allocation2 + $0x128] sm:$0xff] 0.0
        %310 = vst [vmem:[#allocation2 + $0x130] sm:$0xff] 0.0
        %311 = vst [vmem:[#allocation2 + $0x138] sm:$0xff] 0.0
        %312 = vst [vmem:[#allocation2 + $0x140] sm:$0xff] 0.0
        %313 = vst [vmem:[#allocation2 + $0x148] sm:$0xff] 0.0
        %314 = vst [vmem:[#allocation2 + $0x150] sm:$0xff] 0.0
        %315 = vst [vmem:[#allocation2 + $0x158] sm:$0xff] 0.0
        %316 = vst [vmem:[#allocation2 + $0x160] sm:$0xff] 0.0
        %317 = vst [vmem:[#allocation2 + $0x168] sm:$0xff] 0.0
        %318 = vst [vmem:[#allocation2 + $0x170] sm:$0xff] 0.0
        %319 = vst [vmem:[#allocation2 + $0x178] sm:$0xff] 0.0
        %320 = vst [vmem:[#allocation2 + $0x180] sm:$0xff] 0.0
        %321 = vst [vmem:[#allocation2 + $0x188] sm:$0xff] 0.0
      $region36: #{critic_forward.4} parent=31 // pred_fallthru
        _
      %v322 = vld [vmem:[#allocation2] sm:$0xff]
      %v323 = vld [vmem:[#allocation2 + $0x8] sm:$0xff]
      %v324 = vld [vmem:[#allocation2 + $0x10] sm:$0xff]
      %v325 = vld [vmem:[#allocation2 + $0x18] sm:$0xff]
      %v326 = vld [vmem:[#allocation2 + $0x20] sm:$0xff]
      %v327 = vld [vmem:[#allocation2 + $0x28] sm:$0xff]
      %v328 = vld [vmem:[#allocation2 + $0x30] sm:$0xff]
      %v329 = vld [vmem:[#allocation2 + $0x38] sm:$0xff]
      %v330 = vld [vmem:[#allocation2 + $0x40] sm:$0xff]
      %v331 = vld [vmem:[#allocation2 + $0x48] sm:$0xff]
      %v332 = vld [vmem:[#allocation2 + $0x50] sm:$0xff]
      %v333 = vld [vmem:[#allocation2 + $0x58] sm:$0xff]
      %v334 = vld [vmem:[#allocation2 + $0x60] sm:$0xff]
      %v335 = vld [vmem:[#allocation2 + $0x68] sm:$0xff]
      %v336 = vld [vmem:[#allocation2 + $0x70] sm:$0xff]
      %v337 = vld [vmem:[#allocation2 + $0x78] sm:$0xff]
      %v338 = vld [vmem:[#allocation2 + $0x80] sm:$0xff]
      %v339 = vld [vmem:[#allocation2 + $0x88] sm:$0xff]
      %v340 = vld [vmem:[#allocation2 + $0x90] sm:$0xff]
      %v341 = vld [vmem:[#allocation2 + $0x98] sm:$0xff]
      %v342 = vld [vmem:[#allocation2 + $0xa0] sm:$0xff]
      %v343 = vld [vmem:[#allocation2 + $0xa8] sm:$0xff]
      %v344 = vld [vmem:[#allocation2 + $0xb0] sm:$0xff]
      %v345 = vld [vmem:[#allocation2 + $0xb8] sm:$0xff]
      %v346 = vld [vmem:[#allocation2 + $0xc0] sm:$0xff]
      %v347 = vld [vmem:[#allocation2 + $0xc8] sm:$0xff]
      %v348 = vld [vmem:[#allocation2 + $0xd0] sm:$0xff]
      %v349 = vld [vmem:[#allocation2 + $0xd8] sm:$0xff]
      %v350 = vld [vmem:[#allocation2 + $0xe0] sm:$0xff]
      %v351 = vld [vmem:[#allocation2 + $0xe8] sm:$0xff]
      %v352 = vld [vmem:[#allocation2 + $0xf0] sm:$0xff]
      %v353 = vld [vmem:[#allocation2 + $0xf8] sm:$0xff]
      %v354 = vld [vmem:[#allocation2 + $0x100] sm:$0xff]
      %v355 = vld [vmem:[#allocation2 + $0x108] sm:$0xff]
      %v356 = vld [vmem:[#allocation2 + $0x110] sm:$0xff]
      %v357 = vld [vmem:[#allocation2 + $0x118] sm:$0xff]
      %v358 = vld [vmem:[#allocation2 + $0x120] sm:$0xff]
      %v359 = vld [vmem:[#allocation2 + $0x128] sm:$0xff]
      %v360 = vld [vmem:[#allocation2 + $0x130] sm:$0xff]
      %v361 = vld [vmem:[#allocation2 + $0x138] sm:$0xff]
      %v362 = vld [vmem:[#allocation2 + $0x140] sm:$0xff]
      %v363 = vld [vmem:[#allocation2 + $0x148] sm:$0xff]
      %v364 = vld [vmem:[#allocation2 + $0x150] sm:$0xff]
      %v365 = vld [vmem:[#allocation2 + $0x158] sm:$0xff]
      %v366 = vld [vmem:[#allocation2 + $0x160] sm:$0xff]
      %v367 = vld [vmem:[#allocation2 + $0x168] sm:$0xff]
      %v368 = vld [vmem:[#allocation2 + $0x170] sm:$0xff]
      %v369 = vld [vmem:[#allocation2 + $0x178] sm:$0xff]
      %v370 = vld [vmem:[#allocation2 + $0x180] sm:$0xff]
      %v371 = vld [vmem:[#allocation2 + $0x188] sm:$0xff]
      %v372 = vld [vmem:[%s243] sm:$0xff]
      %v373 = vld [vmem:[%s243 + $0x8] sm:$0xff]
      %v374 = vld [vmem:[%s243 + $0x10] sm:$0xff]
      %v375 = vld [vmem:[%s243 + $0x18] sm:$0xff]
      %v376 = vld [vmem:[%s243 + $0x20] sm:$0xff]
      %v377 = vld [vmem:[%s243 + $0x28] sm:$0xff]
      %v378 = vld [vmem:[%s243 + $0x30] sm:$0xff]
      %v379 = vld [vmem:[%s243 + $0x38] sm:$0xff]
      %v380 = vld [vmem:[%s243 + $0x40] sm:$0xff]
      %v381 = vld [vmem:[%s243 + $0x48] sm:$0xff]
      %v382 = vld [vmem:[%s243 + $0x50] sm:$0xff]
      %v383 = vld [vmem:[%s243 + $0x58] sm:$0xff]
      %v384 = vld [vmem:[%s243 + $0x60] sm:$0xff]
      %v385 = vld [vmem:[%s243 + $0x68] sm:$0xff]
      %v386 = vld [vmem:[%s243 + $0x70] sm:$0xff]
      %v387 = vld [vmem:[%s243 + $0x78] sm:$0xff]
      %v388 = vld [vmem:[%s243 + $0x80] sm:$0xff]
      %v389 = vld [vmem:[%s243 + $0x88] sm:$0xff]
      %v390 = vld [vmem:[%s243 + $0x90] sm:$0xff]
      %v391 = vld [vmem:[%s243 + $0x98] sm:$0xff]
      %v392 = vld [vmem:[%s243 + $0xa0] sm:$0xff]
      %v393 = vld [vmem:[%s243 + $0xa8] sm:$0xff]
      %v394 = vld [vmem:[%s243 + $0xb0] sm:$0xff]
      %v395 = vld [vmem:[%s243 + $0xb8] sm:$0xff]
      %v396 = vld [vmem:[%s243 + $0xc0] sm:$0xff]
      %v397 = vld [vmem:[%s243 + $0xc8] sm:$0xff]
      %v398 = vld [vmem:[%s243 + $0xd0] sm:$0xff]
      %v399 = vld [vmem:[%s243 + $0xd8] sm:$0xff]
      %v400 = vld [vmem:[%s243 + $0xe0] sm:$0xff]
      %v401 = vld [vmem:[%s243 + $0xe8] sm:$0xff]
      %v402 = vld [vmem:[%s243 + $0xf0] sm:$0xff]
      %v403 = vld [vmem:[%s243 + $0xf8] sm:$0xff]
      %v404 = vld [vmem:[%s243 + $0x100] sm:$0xff]
      %v405 = vld [vmem:[%s243 + $0x108] sm:$0xff]
      %v406 = vld [vmem:[%s243 + $0x110] sm:$0xff]
      %v407 = vld [vmem:[%s243 + $0x118] sm:$0xff]
      %v408 = vld [vmem:[%s243 + $0x120] sm:$0xff]
      %v409 = vld [vmem:[%s243 + $0x128] sm:$0xff]
      %v410 = vld [vmem:[%s243 + $0x130] sm:$0xff]
      %v411 = vld [vmem:[%s243 + $0x138] sm:$0xff]
      %v412 = vld [vmem:[%s243 + $0x140] sm:$0xff]
      %v413 = vld [vmem:[%s243 + $0x148] sm:$0xff]
      %v414 = vld [vmem:[%s243 + $0x150] sm:$0xff]
      %v415 = vld [vmem:[%s243 + $0x158] sm:$0xff]
      %v416 = vld [vmem:[%s243 + $0x160] sm:$0xff]
      %v417 = vld [vmem:[%s243 + $0x168] sm:$0xff]
      %v418 = vld [vmem:[%s243 + $0x170] sm:$0xff]
      %v419 = vld [vmem:[%s243 + $0x178] sm:$0xff]
      %v420 = vld [vmem:[%s243 + $0x180] sm:$0xff]
      %v421 = vld [vmem:[%s243 + $0x188] sm:$0xff]
      %v422 = vld [vmem:[%s253] sm:$0xf]
      %v423 = vld [vmem:[%s253 + $0x4] sm:$0xf]
      %v424 = vld [vmem:[%s253 + $0x8] sm:$0xf]
      %v425 = vld [vmem:[%s253 + $0xc] sm:$0xf]
      %v426 = vld [vmem:[%s253 + $0x10] sm:$0xf]
      %v427 = vld [vmem:[%s253 + $0x14] sm:$0xf]
      %v428 = vld [vmem:[%s253 + $0x18] sm:$0xf]
      %v429 = vld [vmem:[%s253 + $0x1c] sm:$0xf]
      %v430 = vld [vmem:[%s253 + $0x20] sm:$0xf]
      %v431 = vld [vmem:[%s253 + $0x24] sm:$0xf]
      %v432 = vld [vmem:[%s253 + $0x28] sm:$0xf]
      %v433 = vld [vmem:[%s253 + $0x2c] sm:$0xf]
      %v434 = vld [vmem:[%s253 + $0x30] sm:$0xf]
      %v435 = vld [vmem:[%s253 + $0x34] sm:$0xf]
      %v436 = vld [vmem:[%s253 + $0x38] sm:$0xf]
      %v437 = vld [vmem:[%s253 + $0x3c] sm:$0xf]
      %v438 = vld [vmem:[%s253 + $0x40] sm:$0xf]
      %v439 = vld [vmem:[%s253 + $0x44] sm:$0xf]
      %v440 = vld [vmem:[%s253 + $0x48] sm:$0xf]
      %v441 = vld [vmem:[%s253 + $0x4c] sm:$0xf]
      %v442 = vld [vmem:[%s253 + $0x50] sm:$0xf]
      %v443 = vld [vmem:[%s253 + $0x54] sm:$0xf]
      %v444 = vld [vmem:[%s253 + $0x58] sm:$0xf]
      %v445 = vld [vmem:[%s253 + $0x5c] sm:$0xf]
      %v446 = vld [vmem:[%s253 + $0x60] sm:$0xf]
      %v447 = vld [vmem:[%s253 + $0x64] sm:$0xf]
      %v448 = vld [vmem:[%s253 + $0x68] sm:$0xf]
      %v449 = vld [vmem:[%s253 + $0x6c] sm:$0xf]
      %v450 = vld [vmem:[%s253 + $0x70] sm:$0xf]
      %v451 = vld [vmem:[%s253 + $0x74] sm:$0xf]
      %v452 = vld [vmem:[%s253 + $0x78] sm:$0xf]
      %v453 = vld [vmem:[%s253 + $0x7c] sm:$0xf]
      %v504 = vunpack.c.l.b16 %v372
      %v505 = vunpack.c.h.b16 %v372
      %v506 = vunpack.c.l.b16 %v373
      %v507 = vunpack.c.h.b16 %v373
      %v508 = vunpack.c.l.b16 %v374
      %v509 = vunpack.c.h.b16 %v374
      %v510 = vunpack.c.l.b16 %v375
      %v511 = vunpack.c.h.b16 %v375
      %v512 = vunpack.c.l.b16 %v376
      %v513 = vunpack.c.h.b16 %v376
      %v514 = vunpack.c.l.b16 %v377
      %v515 = vunpack.c.h.b16 %v377
      %v516 = vunpack.c.l.b16 %v378
      %v517 = vunpack.c.h.b16 %v378
      %v518 = vunpack.c.l.b16 %v379
      %v519 = vunpack.c.h.b16 %v379
      %v520 = vunpack.c.l.b16 %v380
      %v521 = vunpack.c.h.b16 %v380
      %v522 = vunpack.c.l.b16 %v381
      %v523 = vunpack.c.h.b16 %v381
      %v524 = vunpack.c.l.b16 %v382
      %v525 = vunpack.c.h.b16 %v382
      %v526 = vunpack.c.l.b16 %v383
      %v527 = vunpack.c.h.b16 %v383
      %v528 = vunpack.c.l.b16 %v384
      %v529 = vunpack.c.h.b16 %v384
      %v530 = vunpack.c.l.b16 %v385
      %v531 = vunpack.c.h.b16 %v385
      %v532 = vunpack.c.l.b16 %v386
      %v533 = vunpack.c.h.b16 %v386
      %v534 = vunpack.c.l.b16 %v387
      %v535 = vunpack.c.h.b16 %v387
      %v536 = vunpack.c.l.b16 %v388
      %v537 = vunpack.c.h.b16 %v388
      %v538 = vunpack.c.l.b16 %v389
      %v539 = vunpack.c.h.b16 %v389
      %v540 = vunpack.c.l.b16 %v390
      %v541 = vunpack.c.h.b16 %v390
      %v542 = vunpack.c.l.b16 %v391
      %v543 = vunpack.c.h.b16 %v391
      %v544 = vunpack.c.l.b16 %v392
      %v545 = vunpack.c.h.b16 %v392
      %v546 = vunpack.c.l.b16 %v393
      %v547 = vunpack.c.h.b16 %v393
      %v548 = vunpack.c.l.b16 %v394
      %v549 = vunpack.c.h.b16 %v394
      %v550 = vunpack.c.l.b16 %v395
      %v551 = vunpack.c.h.b16 %v395
      %v552 = vunpack.c.l.b16 %v396
      %v553 = vunpack.c.h.b16 %v396
      %v554 = vunpack.c.l.b16 %v397
      %v555 = vunpack.c.h.b16 %v397
      %v556 = vunpack.c.l.b16 %v398
      %v557 = vunpack.c.h.b16 %v398
      %v558 = vunpack.c.l.b16 %v399
      %v559 = vunpack.c.h.b16 %v399
      %v560 = vunpack.c.l.b16 %v400
      %v561 = vunpack.c.h.b16 %v400
      %v562 = vunpack.c.l.b16 %v401
      %v563 = vunpack.c.h.b16 %v401
      %v564 = vunpack.c.l.b16 %v402
      %v565 = vunpack.c.h.b16 %v402
      %v566 = vunpack.c.l.b16 %v403
      %v567 = vunpack.c.h.b16 %v403
      %v568 = vunpack.c.l.b16 %v404
      %v569 = vunpack.c.h.b16 %v404
      %v570 = vunpack.c.l.b16 %v405
      %v571 = vunpack.c.h.b16 %v405
      %v572 = vunpack.c.l.b16 %v406
      %v573 = vunpack.c.h.b16 %v406
      %v574 = vunpack.c.l.b16 %v407
      %v575 = vunpack.c.h.b16 %v407
      %v576 = vunpack.c.l.b16 %v408
      %v577 = vunpack.c.h.b16 %v408
      %v578 = vunpack.c.l.b16 %v409
      %v579 = vunpack.c.h.b16 %v409
      %v580 = vunpack.c.l.b16 %v410
      %v581 = vunpack.c.h.b16 %v410
      %v582 = vunpack.c.l.b16 %v411
      %v583 = vunpack.c.h.b16 %v411
      %v584 = vunpack.c.l.b16 %v412
      %v585 = vunpack.c.h.b16 %v412
      %v586 = vunpack.c.l.b16 %v413
      %v587 = vunpack.c.h.b16 %v413
      %v588 = vunpack.c.l.b16 %v414
      %v589 = vunpack.c.h.b16 %v414
      %v590 = vunpack.c.l.b16 %v415
      %v591 = vunpack.c.h.b16 %v415
      %v592 = vunpack.c.l.b16 %v416
      %v593 = vunpack.c.h.b16 %v416
      %v594 = vunpack.c.l.b16 %v417
      %v595 = vunpack.c.h.b16 %v417
      %v596 = vunpack.c.l.b16 %v418
      %v597 = vunpack.c.h.b16 %v418
      %v598 = vunpack.c.l.b16 %v419
      %v599 = vunpack.c.h.b16 %v419
      %v600 = vunpack.c.l.b16 %v420
      %v601 = vunpack.c.h.b16 %v420
      %v602 = vunpack.c.l.b16 %v421
      %v603 = vunpack.c.h.b16 %v421
      %v604 = vpack.c.b16 %v506, %v504
      %v605 = vpack.c.b16 %v507, %v505
      %v606 = vpack.c.b16 %v510, %v508
      %v607 = vpack.c.b16 %v511, %v509
      %v608 = vpack.c.b16 %v514, %v512
      %v609 = vpack.c.b16 %v515, %v513
      %v610 = vpack.c.b16 %v518, %v516
      %v611 = vpack.c.b16 %v519, %v517
      %v612 = vpack.c.b16 %v522, %v520
      %v613 = vpack.c.b16 %v523, %v521
      %v614 = vpack.c.b16 %v526, %v524
      %v615 = vpack.c.b16 %v527, %v525
      %v616 = vpack.c.b16 %v530, %v528
      %v617 = vpack.c.b16 %v531, %v529
      %v618 = vpack.c.b16 %v534, %v532
      %v619 = vpack.c.b16 %v535, %v533
      %v620 = vpack.c.b16 %v538, %v536
      %v621 = vpack.c.b16 %v539, %v537
      %v622 = vpack.c.b16 %v542, %v540
      %v623 = vpack.c.b16 %v543, %v541
      %v624 = vpack.c.b16 %v546, %v544
      %v625 = vpack.c.b16 %v547, %v545
      %v626 = vpack.c.b16 %v550, %v548
      %v627 = vpack.c.b16 %v551, %v549
      %v628 = vpack.c.b16 %v554, %v552
      %v629 = vpack.c.b16 %v555, %v553
      %v630 = vpack.c.b16 %v558, %v556
      %v631 = vpack.c.b16 %v559, %v557
      %v632 = vpack.c.b16 %v562, %v560
      %v633 = vpack.c.b16 %v563, %v561
      %v634 = vpack.c.b16 %v566, %v564
      %v635 = vpack.c.b16 %v567, %v565
      %v636 = vpack.c.b16 %v570, %v568
      %v637 = vpack.c.b16 %v571, %v569
      %v638 = vpack.c.b16 %v574, %v572
      %v639 = vpack.c.b16 %v575, %v573
      %v640 = vpack.c.b16 %v578, %v576
      %v641 = vpack.c.b16 %v579, %v577
      %v642 = vpack.c.b16 %v582, %v580
      %v643 = vpack.c.b16 %v583, %v581
      %v644 = vpack.c.b16 %v586, %v584
      %v645 = vpack.c.b16 %v587, %v585
      %v646 = vpack.c.b16 %v590, %v588
      %v647 = vpack.c.b16 %v591, %v589
      %v648 = vpack.c.b16 %v594, %v592
      %v649 = vpack.c.b16 %v595, %v593
      %v650 = vpack.c.b16 %v598, %v596
      %v651 = vpack.c.b16 %v599, %v597
      %v652 = vpack.c.b16 %v602, %v600
      %v653 = vpack.c.b16 %v603, %v601
      %v736 = vunpack.c.l.b16 %v422
      %v737 = vunpack.c.l.b16 %v423
      %v738 = vunpack.c.l.b16 %v424
      %v739 = vunpack.c.l.b16 %v425
      %v740 = vunpack.c.l.b16 %v426
      %v741 = vunpack.c.l.b16 %v427
      %v742 = vunpack.c.l.b16 %v428
      %v743 = vunpack.c.l.b16 %v429
      %v744 = vunpack.c.l.b16 %v430
      %v745 = vunpack.c.l.b16 %v431
      %v746 = vunpack.c.l.b16 %v432
      %v747 = vunpack.c.l.b16 %v433
      %v748 = vunpack.c.l.b16 %v434
      %v749 = vunpack.c.l.b16 %v435
      %v750 = vunpack.c.l.b16 %v436
      %v751 = vunpack.c.l.b16 %v437
      %v752 = vunpack.c.l.b16 %v438
      %v753 = vunpack.c.l.b16 %v439
      %v754 = vunpack.c.l.b16 %v440
      %v755 = vunpack.c.l.b16 %v441
      %v756 = vunpack.c.l.b16 %v442
      %v757 = vunpack.c.l.b16 %v443
      %v758 = vunpack.c.l.b16 %v444
      %v759 = vunpack.c.l.b16 %v445
      %v760 = vunpack.c.l.b16 %v446
      %v761 = vunpack.c.l.b16 %v447
      %v762 = vunpack.c.l.b16 %v448
      %v763 = vunpack.c.l.b16 %v449
      %v764 = vunpack.c.l.b16 %v450
      %v765 = vunpack.c.l.b16 %v451
      %v766 = vunpack.c.l.b16 %v452
      %v767 = vunpack.c.l.b16 %v453
      %v768 = vpack.c.b16 %v737, %v736
      %v769 = vpack.c.b16 %v739, %v738
      %v770 = vpack.c.b16 %v741, %v740
      %v771 = vpack.c.b16 %v743, %v742
      %v772 = vpack.c.b16 %v745, %v744
      %v773 = vpack.c.b16 %v747, %v746
      %v774 = vpack.c.b16 %v749, %v748
      %v775 = vpack.c.b16 %v751, %v750
      %v776 = vpack.c.b16 %v753, %v752
      %v777 = vpack.c.b16 %v755, %v754
      %v778 = vpack.c.b16 %v757, %v756
      %v779 = vpack.c.b16 %v759, %v758
      %v780 = vpack.c.b16 %v761, %v760
      %v781 = vpack.c.b16 %v763, %v762
      %v782 = vpack.c.b16 %v765, %v764
      %v783 = vpack.c.b16 %v767, %v766
      %800 = vmatprep.subr.bf16.mxu0 0
      %801 = vmatpush1.bf16.msra.mxu0 %v775
      %802 = vmatprep.subr.bf16.mxu0 0
      %803 = vmatpush1.bf16.msra.mxu0 %v774
      %804 = vmatprep.subr.bf16.mxu0 0
      %805 = vmatpush1.bf16.msra.mxu0 %v773
      %806 = vmatprep.subr.bf16.mxu0 0
      %807 = vmatpush1.bf16.msra.mxu0 %v772
      %808 = vmatprep.subr.bf16.mxu0 0
      %809 = vmatpush1.bf16.msra.mxu0 %v771
      %810 = vmatprep.subr.bf16.mxu0 0
      %811 = vmatpush1.bf16.msra.mxu0 %v770
      %812 = vmatprep.subr.bf16.mxu0 0
      %813 = vmatpush1.bf16.msra.mxu0 %v769
      %814 = vmatprep.subr.bf16.mxu0 0
      %815 = vmatpush1.bf16.msra.mxu0 %v768
      %816 = vmatprep.subr.bf16.mxu0 0
      %817 = vmatpush2.bf16.msra.mxu0 %v783
      %818 = vmatprep.subr.bf16.mxu0 0
      %819 = vmatpush2.bf16.msra.mxu0 %v782
      %820 = vmatprep.subr.bf16.mxu0 0
      %821 = vmatpush2.bf16.msra.mxu0 %v781
      %822 = vmatprep.subr.bf16.mxu0 0
      %823 = vmatpush2.bf16.msra.mxu0 %v780
      %824 = vmatprep.subr.bf16.mxu0 0
      %825 = vmatpush2.bf16.msra.mxu0 %v779
      %826 = vmatprep.subr.bf16.mxu0 0
      %827 = vmatpush2.bf16.msra.mxu0 %v778
      %828 = vmatprep.subr.bf16.mxu0 0
      %829 = vmatpush2.bf16.msra.mxu0 %v777
      %830 = vmatprep.subr.bf16.mxu0 0
      %831 = vmatpush2.bf16.msra.mxu0 %v776
      %832 = vmatprep.mubr.bf16.mxu0 %v605
      %833 = vmatmul.mubr.bf16.gmra.mxu0 %v604
      %v834 = vpop.f32.mrf.mxu0
      %v835 = vadd.f32 0.0, %v834
      %v836 = vpop.f32.mrf.mxu0
      %v837 = vpop.f32.mrf.mxu0
      %v838 = vadd.f32 0.0, %v837
      %v839 = vpop.f32.mrf.mxu0
      %840 = vmatprep.mubr.bf16.mxu0 %v607
      %841 = vmatmul.mubr.bf16.gmra.mxu0 %v606
      %v842 = vpop.f32.mrf.mxu0
      %v843 = vadd.f32 0.0, %v842
      %v844 = vpop.f32.mrf.mxu0
      %v845 = vpop.f32.mrf.mxu0
      %v846 = vadd.f32 0.0, %v845
      %v847 = vpop.f32.mrf.mxu0
      %848 = vmatprep.mubr.bf16.mxu0 %v609
      %849 = vmatmul.mubr.bf16.gmra.mxu0 %v608
      %v850 = vpop.f32.mrf.mxu0
      %v851 = vadd.f32 0.0, %v850
      %v852 = vpop.f32.mrf.mxu0
      %v853 = vpop.f32.mrf.mxu0
      %v854 = vadd.f32 0.0, %v853
      %v855 = vpop.f32.mrf.mxu0
      %856 = vmatprep.mubr.bf16.mxu0 %v611
      %857 = vmatmul.mubr.bf16.gmra.mxu0 %v610
      %v858 = vpop.f32.mrf.mxu0
      %v859 = vadd.f32 0.0, %v858
      %v860 = vpop.f32.mrf.mxu0
      %v861 = vpop.f32.mrf.mxu0
      %v862 = vadd.f32 0.0, %v861
      %v863 = vpop.f32.mrf.mxu0
      %864 = vmatprep.mubr.bf16.mxu0 %v613
      %865 = vmatmul.mubr.bf16.gmra.mxu0 %v612
      %v866 = vpop.f32.mrf.mxu0
      %v867 = vadd.f32 0.0, %v866
      %v868 = vpop.f32.mrf.mxu0
      %v869 = vpop.f32.mrf.mxu0
      %v870 = vadd.f32 0.0, %v869
      %v871 = vpop.f32.mrf.mxu0
      %872 = vmatprep.mubr.bf16.mxu0 %v615
      %873 = vmatmul.mubr.bf16.gmra.mxu0 %v614
      %v874 = vpop.f32.mrf.mxu0
      %v875 = vadd.f32 0.0, %v874
      %v876 = vpop.f32.mrf.mxu0
      %v877 = vpop.f32.mrf.mxu0
      %v878 = vadd.f32 0.0, %v877
      %v879 = vpop.f32.mrf.mxu0
      %880 = vmatprep.mubr.bf16.mxu0 %v617
      %881 = vmatmul.mubr.bf16.gmra.mxu0 %v616
      %v882 = vpop.f32.mrf.mxu0
      %v883 = vadd.f32 0.0, %v882
      %v884 = vpop.f32.mrf.mxu0
      %v885 = vpop.f32.mrf.mxu0
      %v886 = vadd.f32 0.0, %v885
      %v887 = vpop.f32.mrf.mxu0
      %888 = vmatprep.mubr.bf16.mxu0 %v619
      %889 = vmatmul.mubr.bf16.gmra.mxu0 %v618
      %v890 = vpop.f32.mrf.mxu0
      %v891 = vadd.f32 0.0, %v890
      %v892 = vpop.f32.mrf.mxu0
      %v893 = vpop.f32.mrf.mxu0
      %v894 = vadd.f32 0.0, %v893
      %v895 = vpop.f32.mrf.mxu0
      %896 = vmatprep.mubr.bf16.mxu0 %v621
      %897 = vmatmul.mubr.bf16.gmra.mxu0 %v620
      %v898 = vpop.f32.mrf.mxu0
      %v899 = vadd.f32 0.0, %v898
      %v900 = vpop.f32.mrf.mxu0
      %v901 = vpop.f32.mrf.mxu0
      %v902 = vadd.f32 0.0, %v901
      %v903 = vpop.f32.mrf.mxu0
      %904 = vmatprep.mubr.bf16.mxu0 %v623
      %905 = vmatmul.mubr.bf16.gmra.mxu0 %v622
      %v906 = vpop.f32.mrf.mxu0
      %v907 = vadd.f32 0.0, %v906
      %v908 = vpop.f32.mrf.mxu0
      %v909 = vpop.f32.mrf.mxu0
      %v910 = vadd.f32 0.0, %v909
      %v911 = vpop.f32.mrf.mxu0
      %912 = vmatprep.mubr.bf16.mxu0 %v625
      %913 = vmatmul.mubr.bf16.gmra.mxu0 %v624
      %v914 = vpop.f32.mrf.mxu0
      %v915 = vadd.f32 0.0, %v914
      %v916 = vpop.f32.mrf.mxu0
      %v917 = vpop.f32.mrf.mxu0
      %v918 = vadd.f32 0.0, %v917
      %v919 = vpop.f32.mrf.mxu0
      %920 = vmatprep.mubr.bf16.mxu0 %v627
      %921 = vmatmul.mubr.bf16.gmra.mxu0 %v626
      %v922 = vpop.f32.mrf.mxu0
      %v923 = vadd.f32 0.0, %v922
      %v924 = vpop.f32.mrf.mxu0
      %v925 = vpop.f32.mrf.mxu0
      %v926 = vadd.f32 0.0, %v925
      %v927 = vpop.f32.mrf.mxu0
      %928 = vmatprep.mubr.bf16.mxu0 %v629
      %929 = vmatmul.mubr.bf16.gmra.mxu0 %v628
      %v930 = vpop.f32.mrf.mxu0
      %v931 = vadd.f32 0.0, %v930
      %v932 = vpop.f32.mrf.mxu0
      %v933 = vpop.f32.mrf.mxu0
      %v934 = vadd.f32 0.0, %v933
      %v935 = vpop.f32.mrf.mxu0
      %936 = vmatprep.mubr.bf16.mxu0 %v631
      %937 = vmatmul.mubr.bf16.gmra.mxu0 %v630
      %v938 = vpop.f32.mrf.mxu0
      %v939 = vadd.f32 0.0, %v938
      %v940 = vpop.f32.mrf.mxu0
      %v941 = vpop.f32.mrf.mxu0
      %v942 = vadd.f32 0.0, %v941
      %v943 = vpop.f32.mrf.mxu0
      %944 = vmatprep.mubr.bf16.mxu0 %v633
      %945 = vmatmul.mubr.bf16.gmra.mxu0 %v632
      %v946 = vpop.f32.mrf.mxu0
      %v947 = vadd.f32 0.0, %v946
      %v948 = vpop.f32.mrf.mxu0
      %v949 = vpop.f32.mrf.mxu0
      %v950 = vadd.f32 0.0, %v949
      %v951 = vpop.f32.mrf.mxu0
      %952 = vmatprep.mubr.bf16.mxu0 %v635
      %953 = vmatmul.mubr.bf16.gmra.mxu0 %v634
      %v954 = vpop.f32.mrf.mxu0
      %v955 = vadd.f32 0.0, %v954
      %v956 = vpop.f32.mrf.mxu0
      %v957 = vpop.f32.mrf.mxu0
      %v958 = vadd.f32 0.0, %v957
      %v959 = vpop.f32.mrf.mxu0
      %960 = vmatprep.mubr.bf16.mxu0 %v637
      %961 = vmatmul.mubr.bf16.gmra.mxu0 %v636
      %v962 = vpop.f32.mrf.mxu0
      %v963 = vadd.f32 0.0, %v962
      %v964 = vpop.f32.mrf.mxu0
      %v965 = vpop.f32.mrf.mxu0
      %v966 = vadd.f32 0.0, %v965
      %v967 = vpop.f32.mrf.mxu0
      %968 = vmatprep.mubr.bf16.mxu0 %v639
      %969 = vmatmul.mubr.bf16.gmra.mxu0 %v638
      %v970 = vpop.f32.mrf.mxu0
      %v971 = vadd.f32 0.0, %v970
      %v972 = vpop.f32.mrf.mxu0
      %v973 = vpop.f32.mrf.mxu0
      %v974 = vadd.f32 0.0, %v973
      %v975 = vpop.f32.mrf.mxu0
      %976 = vmatprep.mubr.bf16.mxu0 %v641
      %977 = vmatmul.mubr.bf16.gmra.mxu0 %v640
      %v978 = vpop.f32.mrf.mxu0
      %v979 = vadd.f32 0.0, %v978
      %v980 = vpop.f32.mrf.mxu0
      %v981 = vpop.f32.mrf.mxu0
      %v982 = vadd.f32 0.0, %v981
      %v983 = vpop.f32.mrf.mxu0
      %984 = vmatprep.mubr.bf16.mxu0 %v643
      %985 = vmatmul.mubr.bf16.gmra.mxu0 %v642
      %v986 = vpop.f32.mrf.mxu0
      %v987 = vadd.f32 0.0, %v986
      %v988 = vpop.f32.mrf.mxu0
      %v989 = vpop.f32.mrf.mxu0
      %v990 = vadd.f32 0.0, %v989
      %v991 = vpop.f32.mrf.mxu0
      %992 = vmatprep.mubr.bf16.mxu0 %v645
      %993 = vmatmul.mubr.bf16.gmra.mxu0 %v644
      %v994 = vpop.f32.mrf.mxu0
      %v995 = vadd.f32 0.0, %v994
      %v996 = vpop.f32.mrf.mxu0
      %v997 = vpop.f32.mrf.mxu0
      %v998 = vadd.f32 0.0, %v997
      %v999 = vpop.f32.mrf.mxu0
      %1000 = vmatprep.mubr.bf16.mxu0 %v647
      %1001 = vmatmul.mubr.bf16.gmra.mxu0 %v646
      %v1002 = vpop.f32.mrf.mxu0
      %v1003 = vadd.f32 0.0, %v1002
      %v1004 = vpop.f32.mrf.mxu0
      %v1005 = vpop.f32.mrf.mxu0
      %v1006 = vadd.f32 0.0, %v1005
      %v1007 = vpop.f32.mrf.mxu0
      %1008 = vmatprep.mubr.bf16.mxu0 %v649
      %1009 = vmatmul.mubr.bf16.gmra.mxu0 %v648
      %v1010 = vpop.f32.mrf.mxu0
      %v1011 = vadd.f32 0.0, %v1010
      %v1012 = vpop.f32.mrf.mxu0
      %v1013 = vpop.f32.mrf.mxu0
      %v1014 = vadd.f32 0.0, %v1013
      %v1015 = vpop.f32.mrf.mxu0
      %1016 = vmatprep.mubr.bf16.mxu0 %v651
      %1017 = vmatmul.mubr.bf16.gmra.mxu0 %v650
      %v1018 = vpop.f32.mrf.mxu0
      %v1019 = vadd.f32 0.0, %v1018
      %v1020 = vpop.f32.mrf.mxu0
      %v1021 = vpop.f32.mrf.mxu0
      %v1022 = vadd.f32 0.0, %v1021
      %v1023 = vpop.f32.mrf.mxu0
      %1024 = vmatprep.mubr.bf16.mxu0 %v653
      %1025 = vmatmul.mubr.bf16.gmra.mxu0 %v652
      %v1026 = vpop.f32.mrf.mxu0
      %v1027 = vadd.f32 0.0, %v1026
      %v1028 = vpop.f32.mrf.mxu0
      %v1029 = vpop.f32.mrf.mxu0
      %v1030 = vadd.f32 0.0, %v1029
      %v1031 = vpop.f32.mrf.mxu0
      %1032 = vdwg.mxu0
      %v1033 = vadd.f32 %v322, %v835
      %v1034 = vadd.f32 %v323, %v838
      %v1035 = vadd.f32 %v324, %v843
      %v1036 = vadd.f32 %v325, %v846
      %v1037 = vadd.f32 %v326, %v851
      %v1038 = vadd.f32 %v327, %v854
      %v1039 = vadd.f32 %v328, %v859
      %v1040 = vadd.f32 %v329, %v862
      %v1041 = vadd.f32 %v330, %v867
      %v1042 = vadd.f32 %v331, %v870
      %v1043 = vadd.f32 %v332, %v875
      %v1044 = vadd.f32 %v333, %v878
      %v1045 = vadd.f32 %v334, %v883
      %v1046 = vadd.f32 %v335, %v886
      %v1047 = vadd.f32 %v336, %v891
      %v1048 = vadd.f32 %v337, %v894
      %v1049 = vadd.f32 %v338, %v899
      %v1050 = vadd.f32 %v339, %v902
      %v1051 = vadd.f32 %v340, %v907
      %v1052 = vadd.f32 %v341, %v910
      %v1053 = vadd.f32 %v342, %v915
      %v1054 = vadd.f32 %v343, %v918
      %v1055 = vadd.f32 %v344, %v923
      %v1056 = vadd.f32 %v345, %v926
      %v1057 = vadd.f32 %v346, %v931
      %v1058 = vadd.f32 %v347, %v934
      %v1059 = vadd.f32 %v348, %v939
      %v1060 = vadd.f32 %v349, %v942
      %v1061 = vadd.f32 %v350, %v947
      %v1062 = vadd.f32 %v351, %v950
      %v1063 = vadd.f32 %v352, %v955
      %v1064 = vadd.f32 %v353, %v958
      %v1065 = vadd.f32 %v354, %v963
      %v1066 = vadd.f32 %v355, %v966
      %v1067 = vadd.f32 %v356, %v971
      %v1068 = vadd.f32 %v357, %v974
      %v1069 = vadd.f32 %v358, %v979
      %v1070 = vadd.f32 %v359, %v982
      %v1071 = vadd.f32 %v360, %v987
      %v1072 = vadd.f32 %v361, %v990
      %v1073 = vadd.f32 %v362, %v995
      %v1074 = vadd.f32 %v363, %v998
      %v1075 = vadd.f32 %v364, %v1003
      %v1076 = vadd.f32 %v365, %v1006
      %v1077 = vadd.f32 %v366, %v1011
      %v1078 = vadd.f32 %v367, %v1014
      %v1079 = vadd.f32 %v368, %v1019
      %v1080 = vadd.f32 %v369, %v1022
      %v1081 = vadd.f32 %v370, %v1027
      %v1082 = vadd.f32 %v371, %v1030
      %1083 = vst [vmem:[#allocation2] sm:$0xff] %v1033
      %1084 = vst [vmem:[#allocation2 + $0x8] sm:$0xff] %v1034
      %1085 = vst [vmem:[#allocation2 + $0x10] sm:$0xff] %v1035
      %1086 = vst [vmem:[#allocation2 + $0x18] sm:$0xff] %v1036
      %1087 = vst [vmem:[#allocation2 + $0x20] sm:$0xff] %v1037
      %1088 = vst [vmem:[#allocation2 + $0x28] sm:$0xff] %v1038
      %1089 = vst [vmem:[#allocation2 + $0x30] sm:$0xff] %v1039
      %1090 = vst [vmem:[#allocation2 + $0x38] sm:$0xff] %v1040
      %1091 = vst [vmem:[#allocation2 + $0x40] sm:$0xff] %v1041
      %1092 = vst [vmem:[#allocation2 + $0x48] sm:$0xff] %v1042
      %1093 = vst [vmem:[#allocation2 + $0x50] sm:$0xff] %v1043
      %1094 = vst [vmem:[#allocation2 + $0x58] sm:$0xff] %v1044
      %1095 = vst [vmem:[#allocation2 + $0x60] sm:$0xff] %v1045
      %1096 = vst [vmem:[#allocation2 + $0x68] sm:$0xff] %v1046
      %1097 = vst [vmem:[#allocation2 + $0x70] sm:$0xff] %v1047
      %1098 = vst [vmem:[#allocation2 + $0x78] sm:$0xff] %v1048
      %1099 = vst [vmem:[#allocation2 + $0x80] sm:$0xff] %v1049
      %1100 = vst [vmem:[#allocation2 + $0x88] sm:$0xff] %v1050
      %1101 = vst [vmem:[#allocation2 + $0x90] sm:$0xff] %v1051
      %1102 = vst [vmem:[#allocation2 + $0x98] sm:$0xff] %v1052
      %1103 = vst [vmem:[#allocation2 + $0xa0] sm:$0xff] %v1053
      %1104 = vst [vmem:[#allocation2 + $0xa8] sm:$0xff] %v1054
      %1105 = vst [vmem:[#allocation2 + $0xb0] sm:$0xff] %v1055
      %1106 = vst [vmem:[#allocation2 + $0xb8] sm:$0xff] %v1056
      %1107 = vst [vmem:[#allocation2 + $0xc0] sm:$0xff] %v1057
      %1108 = vst [vmem:[#allocation2 + $0xc8] sm:$0xff] %v1058
      %1109 = vst [vmem:[#allocation2 + $0xd0] sm:$0xff] %v1059
      %1110 = vst [vmem:[#allocation2 + $0xd8] sm:$0xff] %v1060
      %1111 = vst [vmem:[#allocation2 + $0xe0] sm:$0xff] %v1061
      %1112 = vst [vmem:[#allocation2 + $0xe8] sm:$0xff] %v1062
      %1113 = vst [vmem:[#allocation2 + $0xf0] sm:$0xff] %v1063
      %1114 = vst [vmem:[#allocation2 + $0xf8] sm:$0xff] %v1064
      %1115 = vst [vmem:[#allocation2 + $0x100] sm:$0xff] %v1065
      %1116 = vst [vmem:[#allocation2 + $0x108] sm:$0xff] %v1066
      %1117 = vst [vmem:[#allocation2 + $0x110] sm:$0xff] %v1067
      %1118 = vst [vmem:[#allocation2 + $0x118] sm:$0xff] %v1068
      %1119 = vst [vmem:[#allocation2 + $0x120] sm:$0xff] %v1069
      %1120 = vst [vmem:[#allocation2 + $0x128] sm:$0xff] %v1070
      %1121 = vst [vmem:[#allocation2 + $0x130] sm:$0xff] %v1071
      %1122 = vst [vmem:[#allocation2 + $0x138] sm:$0xff] %v1072
      %1123 = vst [vmem:[#allocation2 + $0x140] sm:$0xff] %v1073
      %1124 = vst [vmem:[#allocation2 + $0x148] sm:$0xff] %v1074
      %1125 = vst [vmem:[#allocation2 + $0x150] sm:$0xff] %v1075
      %1126 = vst [vmem:[#allocation2 + $0x158] sm:$0xff] %v1076
      %1127 = vst [vmem:[#allocation2 + $0x160] sm:$0xff] %v1077
      %1128 = vst [vmem:[#allocation2 + $0x168] sm:$0xff] %v1078
      %1129 = vst [vmem:[#allocation2 + $0x170] sm:$0xff] %v1079
      %1130 = vst [vmem:[#allocation2 + $0x178] sm:$0xff] %v1080
      %1131 = vst [vmem:[#allocation2 + $0x180] sm:$0xff] %v1081
      %1132 = vst [vmem:[#allocation2 + $0x188] sm:$0xff] %v1082
      // Predicated region
      $region37: #{critic_forward.4} parent=31 // pred_check
        %p1133 = pneg %p268
      $region38: #{critic_forward.4} parent=31 // pred_check_branch
        %1135 = sbr.rel (%p1133) target = $region40
      $region39: #{critic_forward.4} parent=31 // pred_region
        %v1136 = vld [vmem:[#allocation2] sm:$0xff]
        %v1137 = vld [vmem:[#allocation2 + $0x8] sm:$0xff]
        %v1138 = vld [vmem:[#allocation2 + $0x10] sm:$0xff]
        %v1139 = vld [vmem:[#allocation2 + $0x18] sm:$0xff]
        %v1140 = vld [vmem:[#allocation2 + $0x20] sm:$0xff]
        %v1141 = vld [vmem:[#allocation2 + $0x28] sm:$0xff]
        %v1142 = vld [vmem:[#allocation2 + $0x30] sm:$0xff]
        %v1143 = vld [vmem:[#allocation2 + $0x38] sm:$0xff]
        %v1144 = vld [vmem:[#allocation2 + $0x40] sm:$0xff]
        %v1145 = vld [vmem:[#allocation2 + $0x48] sm:$0xff]
        %v1146 = vld [vmem:[#allocation2 + $0x50] sm:$0xff]
        %v1147 = vld [vmem:[#allocation2 + $0x58] sm:$0xff]
        %v1148 = vld [vmem:[#allocation2 + $0x60] sm:$0xff]
        %v1149 = vld [vmem:[#allocation2 + $0x68] sm:$0xff]
        %v1150 = vld [vmem:[#allocation2 + $0x70] sm:$0xff]
        %v1151 = vld [vmem:[#allocation2 + $0x78] sm:$0xff]
        %v1152 = vld [vmem:[#allocation2 + $0x80] sm:$0xff]
        %v1153 = vld [vmem:[#allocation2 + $0x88] sm:$0xff]
        %v1154 = vld [vmem:[#allocation2 + $0x90] sm:$0xff]
        %v1155 = vld [vmem:[#allocation2 + $0x98] sm:$0xff]
        %v1156 = vld [vmem:[#allocation2 + $0xa0] sm:$0xff]
        %v1157 = vld [vmem:[#allocation2 + $0xa8] sm:$0xff]
        %v1158 = vld [vmem:[#allocation2 + $0xb0] sm:$0xff]
        %v1159 = vld [vmem:[#allocation2 + $0xb8] sm:$0xff]
        %v1160 = vld [vmem:[#allocation2 + $0xc0] sm:$0xff]
        %v1161 = vld [vmem:[#allocation2 + $0xc8] sm:$0xff]
        %v1162 = vld [vmem:[#allocation2 + $0xd0] sm:$0xff]
        %v1163 = vld [vmem:[#allocation2 + $0xd8] sm:$0xff]
        %v1164 = vld [vmem:[#allocation2 + $0xe0] sm:$0xff]
        %v1165 = vld [vmem:[#allocation2 + $0xe8] sm:$0xff]
        %v1166 = vld [vmem:[#allocation2 + $0xf0] sm:$0xff]
        %v1167 = vld [vmem:[#allocation2 + $0xf8] sm:$0xff]
        %v1168 = vld [vmem:[#allocation2 + $0x100] sm:$0xff]
        %v1169 = vld [vmem:[#allocation2 + $0x108] sm:$0xff]
        %v1170 = vld [vmem:[#allocation2 + $0x110] sm:$0xff]
        %v1171 = vld [vmem:[#allocation2 + $0x118] sm:$0xff]
        %v1172 = vld [vmem:[#allocation2 + $0x120] sm:$0xff]
        %v1173 = vld [vmem:[#allocation2 + $0x128] sm:$0xff]
        %v1174 = vld [vmem:[#allocation2 + $0x130] sm:$0xff]
        %v1175 = vld [vmem:[#allocation2 + $0x138] sm:$0xff]
        %v1176 = vld [vmem:[#allocation2 + $0x140] sm:$0xff]
        %v1177 = vld [vmem:[#allocation2 + $0x148] sm:$0xff]
        %v1178 = vld [vmem:[#allocation2 + $0x150] sm:$0xff]
        %v1179 = vld [vmem:[#allocation2 + $0x158] sm:$0xff]
        %v1180 = vld [vmem:[#allocation2 + $0x160] sm:$0xff]
        %v1181 = vld [vmem:[#allocation2 + $0x168] sm:$0xff]
        %v1182 = vld [vmem:[#allocation2 + $0x170] sm:$0xff]
        %v1183 = vld [vmem:[#allocation2 + $0x178] sm:$0xff]
        %v1184 = vld [vmem:[#allocation2 + $0x180] sm:$0xff]
        %v1185 = vld [vmem:[#allocation2 + $0x188] sm:$0xff]
        %v1186 = vld [vmem:[%s257] sm:$0x1]
        %v1188 = vlaneseq
        %v1189 = vshrl.u32 %v1188, 7
        %v1190 = vsub.s32 0, %v1189
        %v1191 = vrot.slane %v1186, %v1190
        %v1193 = vadd.f32 %v1136, %v1191
        %v1194 = vadd.f32 %v1137, %v1191
        %v1195 = vadd.f32 %v1138, %v1191
        %v1196 = vadd.f32 %v1139, %v1191
        %v1197 = vadd.f32 %v1140, %v1191
        %v1198 = vadd.f32 %v1141, %v1191
        %v1199 = vadd.f32 %v1142, %v1191
        %v1200 = vadd.f32 %v1143, %v1191
        %v1201 = vadd.f32 %v1144, %v1191
        %v1202 = vadd.f32 %v1145, %v1191
        %v1203 = vadd.f32 %v1146, %v1191
        %v1204 = vadd.f32 %v1147, %v1191
        %v1205 = vadd.f32 %v1148, %v1191
        %v1206 = vadd.f32 %v1149, %v1191
        %v1207 = vadd.f32 %v1150, %v1191
        %v1208 = vadd.f32 %v1151, %v1191
        %v1209 = vadd.f32 %v1152, %v1191
        %v1210 = vadd.f32 %v1153, %v1191
        %v1211 = vadd.f32 %v1154, %v1191
        %v1212 = vadd.f32 %v1155, %v1191
        %v1213 = vadd.f32 %v1156, %v1191
        %v1214 = vadd.f32 %v1157, %v1191
        %v1215 = vadd.f32 %v1158, %v1191
        %v1216 = vadd.f32 %v1159, %v1191
        %v1217 = vadd.f32 %v1160, %v1191
        %v1218 = vadd.f32 %v1161, %v1191
        %v1219 = vadd.f32 %v1162, %v1191
        %v1220 = vadd.f32 %v1163, %v1191
        %v1221 = vadd.f32 %v1164, %v1191
        %v1222 = vadd.f32 %v1165, %v1191
        %v1223 = vadd.f32 %v1166, %v1191
        %v1224 = vadd.f32 %v1167, %v1191
        %v1225 = vadd.f32 %v1168, %v1191
        %v1226 = vadd.f32 %v1169, %v1191
        %v1227 = vadd.f32 %v1170, %v1191
        %v1228 = vadd.f32 %v1171, %v1191
        %v1229 = vadd.f32 %v1172, %v1191
        %v1230 = vadd.f32 %v1173, %v1191
        %v1231 = vadd.f32 %v1174, %v1191
        %v1232 = vadd.f32 %v1175, %v1191
        %v1233 = vadd.f32 %v1176, %v1191
        %v1234 = vadd.f32 %v1177, %v1191
        %v1235 = vadd.f32 %v1178, %v1191
        %v1236 = vadd.f32 %v1179, %v1191
        %v1237 = vadd.f32 %v1180, %v1191
        %v1238 = vadd.f32 %v1181, %v1191
        %v1239 = vadd.f32 %v1182, %v1191
        %v1240 = vadd.f32 %v1183, %v1191
        %v1241 = vadd.f32 %v1184, %v1191
        %v1242 = vadd.f32 %v1185, %v1191
        %v1243 = vmax.f32 %v1193, 0.0
        %v1244 = vmax.f32 %v1194, 0.0
        %v1245 = vmax.f32 %v1195, 0.0
        %v1246 = vmax.f32 %v1196, 0.0
        %v1247 = vmax.f32 %v1197, 0.0
        %v1248 = vmax.f32 %v1198, 0.0
        %v1249 = vmax.f32 %v1199, 0.0
        %v1250 = vmax.f32 %v1200, 0.0
        %v1251 = vmax.f32 %v1201, 0.0
        %v1252 = vmax.f32 %v1202, 0.0
        %v1253 = vmax.f32 %v1203, 0.0
        %v1254 = vmax.f32 %v1204, 0.0
        %v1255 = vmax.f32 %v1205, 0.0
        %v1256 = vmax.f32 %v1206, 0.0
        %v1257 = vmax.f32 %v1207, 0.0
        %v1258 = vmax.f32 %v1208, 0.0
        %v1259 = vmax.f32 %v1209, 0.0
        %v1260 = vmax.f32 %v1210, 0.0
        %v1261 = vmax.f32 %v1211, 0.0
        %v1262 = vmax.f32 %v1212, 0.0
        %v1263 = vmax.f32 %v1213, 0.0
        %v1264 = vmax.f32 %v1214, 0.0
        %v1265 = vmax.f32 %v1215, 0.0
        %v1266 = vmax.f32 %v1216, 0.0
        %v1267 = vmax.f32 %v1217, 0.0
        %v1268 = vmax.f32 %v1218, 0.0
        %v1269 = vmax.f32 %v1219, 0.0
        %v1270 = vmax.f32 %v1220, 0.0
        %v1271 = vmax.f32 %v1221, 0.0
        %v1272 = vmax.f32 %v1222, 0.0
        %v1273 = vmax.f32 %v1223, 0.0
        %v1274 = vmax.f32 %v1224, 0.0
        %v1275 = vmax.f32 %v1225, 0.0
        %v1276 = vmax.f32 %v1226, 0.0
        %v1277 = vmax.f32 %v1227, 0.0
        %v1278 = vmax.f32 %v1228, 0.0
        %v1279 = vmax.f32 %v1229, 0.0
        %v1280 = vmax.f32 %v1230, 0.0
        %v1281 = vmax.f32 %v1231, 0.0
        %v1282 = vmax.f32 %v1232, 0.0
        %v1283 = vmax.f32 %v1233, 0.0
        %v1284 = vmax.f32 %v1234, 0.0
        %v1285 = vmax.f32 %v1235, 0.0
        %v1286 = vmax.f32 %v1236, 0.0
        %v1287 = vmax.f32 %v1237, 0.0
        %v1288 = vmax.f32 %v1238, 0.0
        %v1289 = vmax.f32 %v1239, 0.0
        %v1290 = vmax.f32 %v1240, 0.0
        %v1291 = vmax.f32 %v1241, 0.0
        %v1292 = vmax.f32 %v1242, 0.0
        %v1293 = vpack.c.bf16 %v1244, %v1243
        %v1294 = vpack.c.bf16 %v1246, %v1245
        %v1295 = vpack.c.bf16 %v1248, %v1247
        %v1296 = vpack.c.bf16 %v1250, %v1249
        %v1297 = vpack.c.bf16 %v1252, %v1251
        %v1298 = vpack.c.bf16 %v1254, %v1253
        %v1299 = vpack.c.bf16 %v1256, %v1255
        %v1300 = vpack.c.bf16 %v1258, %v1257
        %v1301 = vpack.c.bf16 %v1260, %v1259
        %v1302 = vpack.c.bf16 %v1262, %v1261
        %v1303 = vpack.c.bf16 %v1264, %v1263
        %v1304 = vpack.c.bf16 %v1266, %v1265
        %v1305 = vpack.c.bf16 %v1268, %v1267
        %v1306 = vpack.c.bf16 %v1270, %v1269
        %v1307 = vpack.c.bf16 %v1272, %v1271
        %v1308 = vpack.c.bf16 %v1274, %v1273
        %v1309 = vpack.c.bf16 %v1276, %v1275
        %v1310 = vpack.c.bf16 %v1278, %v1277
        %v1311 = vpack.c.bf16 %v1280, %v1279
        %v1312 = vpack.c.bf16 %v1282, %v1281
        %v1313 = vpack.c.bf16 %v1284, %v1283
        %v1314 = vpack.c.bf16 %v1286, %v1285
        %v1315 = vpack.c.bf16 %v1288, %v1287
        %v1316 = vpack.c.bf16 %v1290, %v1289
        %v1317 = vpack.c.bf16 %v1292, %v1291
        %v1343 = vunpack.c.l.b16 %v1293
        %v1344 = vunpack.c.h.b16 %v1293
        %v1345 = vunpack.c.l.b16 %v1294
        %v1346 = vunpack.c.h.b16 %v1294
        %v1347 = vunpack.c.l.b16 %v1295
        %v1348 = vunpack.c.h.b16 %v1295
        %v1349 = vunpack.c.l.b16 %v1296
        %v1350 = vunpack.c.h.b16 %v1296
        %v1351 = vunpack.c.l.b16 %v1297
        %v1352 = vunpack.c.h.b16 %v1297
        %v1353 = vunpack.c.l.b16 %v1298
        %v1354 = vunpack.c.h.b16 %v1298
        %v1355 = vunpack.c.l.b16 %v1299
        %v1356 = vunpack.c.h.b16 %v1299
        %v1357 = vunpack.c.l.b16 %v1300
        %v1358 = vunpack.c.h.b16 %v1300
        %v1359 = vunpack.c.l.b16 %v1301
        %v1360 = vunpack.c.h.b16 %v1301
        %v1361 = vunpack.c.l.b16 %v1302
        %v1362 = vunpack.c.h.b16 %v1302
        %v1363 = vunpack.c.l.b16 %v1303
        %v1364 = vunpack.c.h.b16 %v1303
        %v1365 = vunpack.c.l.b16 %v1304
        %v1366 = vunpack.c.h.b16 %v1304
        %v1367 = vunpack.c.l.b16 %v1305
        %v1368 = vunpack.c.h.b16 %v1305
        %v1369 = vunpack.c.l.b16 %v1306
        %v1370 = vunpack.c.h.b16 %v1306
        %v1371 = vunpack.c.l.b16 %v1307
        %v1372 = vunpack.c.h.b16 %v1307
        %v1373 = vunpack.c.l.b16 %v1308
        %v1374 = vunpack.c.h.b16 %v1308
        %v1375 = vunpack.c.l.b16 %v1309
        %v1376 = vunpack.c.h.b16 %v1309
        %v1377 = vunpack.c.l.b16 %v1310
        %v1378 = vunpack.c.h.b16 %v1310
        %v1379 = vunpack.c.l.b16 %v1311
        %v1380 = vunpack.c.h.b16 %v1311
        %v1381 = vunpack.c.l.b16 %v1312
        %v1382 = vunpack.c.h.b16 %v1312
        %v1383 = vunpack.c.l.b16 %v1313
        %v1384 = vunpack.c.h.b16 %v1313
        %v1385 = vunpack.c.l.b16 %v1314
        %v1386 = vunpack.c.h.b16 %v1314
        %v1387 = vunpack.c.l.b16 %v1315
        %v1388 = vunpack.c.h.b16 %v1315
        %v1389 = vunpack.c.l.b16 %v1316
        %v1390 = vunpack.c.h.b16 %v1316
        %v1391 = vunpack.c.l.b16 %v1317
        %v1392 = vunpack.c.h.b16 %v1317
        %v1393 = vpack.c.b16 %v1343, %v1343
        %v1394 = vpack.c.b16 %v1344, %v1344
        %v1395 = vpack.c.b16 %v1345, %v1345
        %v1396 = vpack.c.b16 %v1346, %v1346
        %v1397 = vpack.c.b16 %v1347, %v1347
        %v1398 = vpack.c.b16 %v1348, %v1348
        %v1399 = vpack.c.b16 %v1349, %v1349
        %v1400 = vpack.c.b16 %v1350, %v1350
        %v1401 = vpack.c.b16 %v1351, %v1351
        %v1402 = vpack.c.b16 %v1352, %v1352
        %v1403 = vpack.c.b16 %v1353, %v1353
        %v1404 = vpack.c.b16 %v1354, %v1354
        %v1405 = vpack.c.b16 %v1355, %v1355
        %v1406 = vpack.c.b16 %v1356, %v1356
        %v1407 = vpack.c.b16 %v1357, %v1357
        %v1408 = vpack.c.b16 %v1358, %v1358
        %v1409 = vpack.c.b16 %v1359, %v1359
        %v1410 = vpack.c.b16 %v1360, %v1360
        %v1411 = vpack.c.b16 %v1361, %v1361
        %v1412 = vpack.c.b16 %v1362, %v1362
        %v1413 = vpack.c.b16 %v1363, %v1363
        %v1414 = vpack.c.b16 %v1364, %v1364
        %v1415 = vpack.c.b16 %v1365, %v1365
        %v1416 = vpack.c.b16 %v1366, %v1366
        %v1417 = vpack.c.b16 %v1367, %v1367
        %v1418 = vpack.c.b16 %v1368, %v1368
        %v1419 = vpack.c.b16 %v1369, %v1369
        %v1420 = vpack.c.b16 %v1370, %v1370
        %v1421 = vpack.c.b16 %v1371, %v1371
        %v1422 = vpack.c.b16 %v1372, %v1372
        %v1423 = vpack.c.b16 %v1373, %v1373
        %v1424 = vpack.c.b16 %v1374, %v1374
        %v1425 = vpack.c.b16 %v1375, %v1375
        %v1426 = vpack.c.b16 %v1376, %v1376
        %v1427 = vpack.c.b16 %v1377, %v1377
        %v1428 = vpack.c.b16 %v1378, %v1378
        %v1429 = vpack.c.b16 %v1379, %v1379
        %v1430 = vpack.c.b16 %v1380, %v1380
        %v1431 = vpack.c.b16 %v1381, %v1381
        %v1432 = vpack.c.b16 %v1382, %v1382
        %v1433 = vpack.c.b16 %v1383, %v1383
        %v1434 = vpack.c.b16 %v1384, %v1384
        %v1435 = vpack.c.b16 %v1385, %v1385
        %v1436 = vpack.c.b16 %v1386, %v1386
        %v1437 = vpack.c.b16 %v1387, %v1387
        %v1438 = vpack.c.b16 %v1388, %v1388
        %v1439 = vpack.c.b16 %v1389, %v1389
        %v1440 = vpack.c.b16 %v1390, %v1390
        %v1441 = vpack.c.b16 %v1391, %v1391
        %v1442 = vpack.c.b16 %v1392, %v1392
        %1493 = vst [vmem:[%s265] sm:$0xf] %v1393
        %1494 = vst [vmem:[%s265 + $0x4] sm:$0xf] %v1394
        %1495 = vst [vmem:[%s265 + $0x8] sm:$0xf] %v1395
        %1496 = vst [vmem:[%s265 + $0xc] sm:$0xf] %v1396
        %1497 = vst [vmem:[%s265 + $0x10] sm:$0xf] %v1397
        %1498 = vst [vmem:[%s265 + $0x14] sm:$0xf] %v1398
        %1499 = vst [vmem:[%s265 + $0x18] sm:$0xf] %v1399
        %1500 = vst [vmem:[%s265 + $0x1c] sm:$0xf] %v1400
        %1501 = vst [vmem:[%s265 + $0x20] sm:$0xf] %v1401
        %1502 = vst [vmem:[%s265 + $0x24] sm:$0xf] %v1402
        %1503 = vst [vmem:[%s265 + $0x28] sm:$0xf] %v1403
        %1504 = vst [vmem:[%s265 + $0x2c] sm:$0xf] %v1404
        %1505 = vst [vmem:[%s265 + $0x30] sm:$0xf] %v1405
        %1506 = vst [vmem:[%s265 + $0x34] sm:$0xf] %v1406
        %1507 = vst [vmem:[%s265 + $0x38] sm:$0xf] %v1407
        %1508 = vst [vmem:[%s265 + $0x3c] sm:$0xf] %v1408
        %1509 = vst [vmem:[%s265 + $0x40] sm:$0xf] %v1409
        %1510 = vst [vmem:[%s265 + $0x44] sm:$0xf] %v1410
        %1511 = vst [vmem:[%s265 + $0x48] sm:$0xf] %v1411
        %1512 = vst [vmem:[%s265 + $0x4c] sm:$0xf] %v1412
        %1513 = vst [vmem:[%s265 + $0x50] sm:$0xf] %v1413
        %1514 = vst [vmem:[%s265 + $0x54] sm:$0xf] %v1414
        %1515 = vst [vmem:[%s265 + $0x58] sm:$0xf] %v1415
        %1516 = vst [vmem:[%s265 + $0x5c] sm:$0xf] %v1416
        %1517 = vst [vmem:[%s265 + $0x60] sm:$0xf] %v1417
        %1518 = vst [vmem:[%s265 + $0x64] sm:$0xf] %v1418
        %1519 = vst [vmem:[%s265 + $0x68] sm:$0xf] %v1419
        %1520 = vst [vmem:[%s265 + $0x6c] sm:$0xf] %v1420
        %1521 = vst [vmem:[%s265 + $0x70] sm:$0xf] %v1421
        %1522 = vst [vmem:[%s265 + $0x74] sm:$0xf] %v1422
        %1523 = vst [vmem:[%s265 + $0x78] sm:$0xf] %v1423
        %1524 = vst [vmem:[%s265 + $0x7c] sm:$0xf] %v1424
        %1525 = vst [vmem:[%s265 + $0x80] sm:$0xf] %v1425
        %1526 = vst [vmem:[%s265 + $0x84] sm:$0xf] %v1426
        %1527 = vst [vmem:[%s265 + $0x88] sm:$0xf] %v1427
        %1528 = vst [vmem:[%s265 + $0x8c] sm:$0xf] %v1428
        %1529 = vst [vmem:[%s265 + $0x90] sm:$0xf] %v1429
        %1530 = vst [vmem:[%s265 + $0x94] sm:$0xf] %v1430
        %1531 = vst [vmem:[%s265 + $0x98] sm:$0xf] %v1431
        %1532 = vst [vmem:[%s265 + $0x9c] sm:$0xf] %v1432
        %1533 = vst [vmem:[%s265 + $0xa0] sm:$0xf] %v1433
        %1534 = vst [vmem:[%s265 + $0xa4] sm:$0xf] %v1434
        %1535 = vst [vmem:[%s265 + $0xa8] sm:$0xf] %v1435
        %1536 = vst [vmem:[%s265 + $0xac] sm:$0xf] %v1436
        %1537 = vst [vmem:[%s265 + $0xb0] sm:$0xf] %v1437
        %1538 = vst [vmem:[%s265 + $0xb4] sm:$0xf] %v1438
        %1539 = vst [vmem:[%s265 + $0xb8] sm:$0xf] %v1439
        %1540 = vst [vmem:[%s265 + $0xbc] sm:$0xf] %v1440
        %1541 = vst [vmem:[%s265 + $0xc0] sm:$0xf] %v1441
        %1542 = vst [vmem:[%s265 + $0xc4] sm:$0xf] %v1442
      $region40: #{critic_forward.4} parent=31 // pred_fallthru
        _
      %s1543 = smul.u32 50, %s19
      %p1544 = scmp.lt.s32.totalorder %s1543, 99
      %s1545 = scalar_select %p1544, %s1543, 99
      %p1546 = scmp.lt.s32.totalorder %s20, 0
      %s1547 = scalar_select %p1546, %s20, 0
      %s1548 = sadd.s32 %s1547, %s1545
      %s1549 = smul.addr %s1548, 4
      %s1550 = scalar_lea.vmem %s3, %s1549
      // Predicated region
      $region41: #{critic_forward.4} parent=31 // pred_check
        %p1551 = pneg %p135
      $region42: #{critic_forward.4} parent=31 // pred_check_branch
        %1553 = sbr.rel (%p1551) target = $region44
      $region43: #{critic_forward.4} parent=31 // pred_region
        %s1554 = smul.u32 50, %s19
      $region44: #{critic_forward.4} parent=31 // pred_fallthru
        _
    $region32: #{critic_forward.4} parent=5 // pred_fallthru
      _
    %p1555 = scmp.le.s32.totalorder 2, %s9
    // Predicated region
    $region45: #{critic_forward.4} parent=5 // pred_check
      %p1556 = pneg %p1555
    $region46: #{critic_forward.4} parent=5 // pred_check_branch
      %1558 = sbr.rel (%p1556) target = $region48
    $region47: #{critic_forward.4} parent=5 // pred_region
      %s1559 = ssub.s32 %s9, 2
      // Predicated region
      $region49: #{critic_forward.4} parent=47 // pred_check
        %p1560 = pneg %p141
      $region50: #{critic_forward.4} parent=47 // pred_check_branch
        %1562 = sbr.rel (%p1560) target = $region52
      $region51: #{critic_forward.4} parent=47 // pred_region
        %s1563 = smul.u32 50, %s22
        %p1564 = scmp.lt.s32.totalorder %s1563, 99
        %s1565 = scalar_select %p1564, %s1563, 99
        %p1566 = scmp.lt.s32.totalorder %s23, 0
        %s1567 = scalar_select %p1566, %s23, 0
        %s1568 = sadd.s32 %s1567, %s1565
        %s1569 = smul.addr %s1568, 4
        %s1570 = scalar_lea.vmem %s3, %s1569
      $region52: #{critic_forward.4} parent=47 // pred_fallthru
        _
    $region48: #{critic_forward.4} parent=5 // pred_fallthru
      _
  $region6: #{critic_forward.4} parent=0 // loop_footer
    %s13 = sadd.s32 1, %s9
  $region7: #{critic_forward.4} parent=0 // loop_footer_branch
    %8 = sbr.rel target = $region3
  $region8: #{critic_forward.4} parent=0 // loop_exit
    _

// kernel: critic_forward.5
$region0: #{critic_forward.5}
  #allocation0 [shape = 'u32[]', space=smem, size = 0x4, offset = 0x4, fixed_abs, tag = 'smem constant byte address 0x4 - core index']
  #allocation1 [shape = 'u32[144,128]{1,0:T(1,128)}', space=vmem, size = 0x12000, scoped, tag = 'internal scratch']
  #allocation2 [shape = 'f32[168,128]{1,0:T(8,128)}', space=vmem, size = 0x15000, scoped, tag = 'scratch operand']
  %s0 = inlined_call_operand.vmem [shape: bf16[168,512], index: 0, kind: input, shape index: {}]
  %s1 = inlined_call_operand.vmem [shape: bf16[512,128], index: 1, kind: input, shape index: {}]
  %s2 = inlined_call_operand.vmem [shape: f32[1,128], index: 2, kind: input, shape index: {}]
  %s3 = inlined_call_operand.vmem [shape: bf16[168,128], index: 3, kind: output, shape index: {}]
  %s4 = sld [smem:[#allocation0]]
  $region30: #{critic_forward.5} parent=0
    _
  %s6 = ssub.s32 1, %s4
  %s7 = scalar_select 0, %s6, %s4
  // Predicated region
  $region2: #{critic_forward.5} parent=0 // pred_check
    _
  $region3: #{critic_forward.5} parent=0 // pred_check_branch
    %9 = sbr.rel (0) target = $region5
  $region4: #{critic_forward.5} parent=0 // pred_region
    _
  $region5: #{critic_forward.5} parent=0 // pred_fallthru
    _
  // Predicated region
  $region6: #{critic_forward.5} parent=0 // pred_check
    _
  $region7: #{critic_forward.5} parent=0 // pred_check_branch
    %11 = sbr.rel (0) target = $region9
  $region8: #{critic_forward.5} parent=0 // pred_region
    _
  $region9: #{critic_forward.5} parent=0 // pred_fallthru
    _
  // Predicated region
  $region10: #{critic_forward.5} parent=0 // pred_check
    _
  $region11: #{critic_forward.5} parent=0 // pred_check_branch
    %13 = sbr.rel (0) target = $region13
  $region12: #{critic_forward.5} parent=0 // pred_region
    _
  $region13: #{critic_forward.5} parent=0 // pred_fallthru
    _
  %p15 = scmp.eq.s32.totalorder 0, 0
  // Predicated region
  $region14: #{critic_forward.5} parent=0 // pred_check
    %p16 = pneg %p15
  $region15: #{critic_forward.5} parent=0 // pred_check_branch
    %18 = sbr.rel (%p16) target = $region17
  $region16: #{critic_forward.5} parent=0 // pred_region
    %19 = vst [vmem:[#allocation2] sm:$0xff] 0.0
    %20 = vst [vmem:[#allocation2 + $0x8] sm:$0xff] 0.0
    %21 = vst [vmem:[#allocation2 + $0x10] sm:$0xff] 0.0
    %22 = vst [vmem:[#allocation2 + $0x18] sm:$0xff] 0.0
    %23 = vst [vmem:[#allocation2 + $0x20] sm:$0xff] 0.0
    %24 = vst [vmem:[#allocation2 + $0x28] sm:$0xff] 0.0
    %25 = vst [vmem:[#allocation2 + $0x30] sm:$0xff] 0.0
    %26 = vst [vmem:[#allocation2 + $0x38] sm:$0xff] 0.0
    %27 = vst [vmem:[#allocation2 + $0x40] sm:$0xff] 0.0
    %28 = vst [vmem:[#allocation2 + $0x48] sm:$0xff] 0.0
    %29 = vst [vmem:[#allocation2 + $0x50] sm:$0xff] 0.0
    %30 = vst [vmem:[#allocation2 + $0x58] sm:$0xff] 0.0
    %31 = vst [vmem:[#allocation2 + $0x60] sm:$0xff] 0.0
    %32 = vst [vmem:[#allocation2 + $0x68] sm:$0xff] 0.0
    %33 = vst [vmem:[#allocation2 + $0x70] sm:$0xff] 0.0
    %34 = vst [vmem:[#allocation2 + $0x78] sm:$0xff] 0.0
    %35 = vst [vmem:[#allocation2 + $0x80] sm:$0xff] 0.0
    %36 = vst [vmem:[#allocation2 + $0x88] sm:$0xff] 0.0
    %37 = vst [vmem:[#allocation2 + $0x90] sm:$0xff] 0.0
    %38 = vst [vmem:[#allocation2 + $0x98] sm:$0xff] 0.0
    %39 = vst [vmem:[#allocation2 + $0xa0] sm:$0xff] 0.0
  $region17: #{critic_forward.5} parent=0 // pred_fallthru
    _
  %v40 = vld [vmem:[#allocation2] sm:$0xff]
  %v41 = vld [vmem:[#allocation2 + $0x8] sm:$0xff]
  %v42 = vld [vmem:[#allocation2 + $0x10] sm:$0xff]
  %v43 = vld [vmem:[#allocation2 + $0x18] sm:$0xff]
  %v44 = vld [vmem:[#allocation2 + $0x20] sm:$0xff]
  %v45 = vld [vmem:[#allocation2 + $0x28] sm:$0xff]
  %v46 = vld [vmem:[#allocation2 + $0x30] sm:$0xff]
  %v47 = vld [vmem:[#allocation2 + $0x38] sm:$0xff]
  %v48 = vld [vmem:[#allocation2 + $0x40] sm:$0xff]
  %v49 = vld [vmem:[#allocation2 + $0x48] sm:$0xff]
  %v50 = vld [vmem:[#allocation2 + $0x50] sm:$0xff]
  %v51 = vld [vmem:[#allocation2 + $0x58] sm:$0xff]
  %v52 = vld [vmem:[#allocation2 + $0x60] sm:$0xff]
  %v53 = vld [vmem:[#allocation2 + $0x68] sm:$0xff]
  %v54 = vld [vmem:[#allocation2 + $0x70] sm:$0xff]
  %v55 = vld [vmem:[#allocation2 + $0x78] sm:$0xff]
  %v56 = vld [vmem:[#allocation2 + $0x80] sm:$0xff]
  %v57 = vld [vmem:[#allocation2 + $0x88] sm:$0xff]
  %v58 = vld [vmem:[#allocation2 + $0x90] sm:$0xff]
  %v59 = vld [vmem:[#allocation2 + $0x98] sm:$0xff]
  %v60 = vld [vmem:[#allocation2 + $0xa0] sm:$0xff]
  %v61 = vld [vmem:[%s0] sm:$0xff]
  %v62 = vld [vmem:[%s0 + $0x8] sm:$0xff]
  %v63 = vld [vmem:[%s0 + $0x10] sm:$0xff]
  %v64 = vld [vmem:[%s0 + $0x18] sm:$0xff]
  %v65 = vld [vmem:[%s0 + $0x20] sm:$0xff]
  %v66 = vld [vmem:[%s0 + $0x28] sm:$0xff]
  %v67 = vld [vmem:[%s0 + $0x30] sm:$0xff]
  %v68 = vld [vmem:[%s0 + $0x38] sm:$0xff]
  %v69 = vld [vmem:[%s0 + $0x40] sm:$0xff]
  %v70 = vld [vmem:[%s0 + $0x48] sm:$0xff]
  %v71 = vld [vmem:[%s0 + $0x50] sm:$0xff]
  %v72 = vld [vmem:[%s0 + $0x58] sm:$0xff]
  %v73 = vld [vmem:[%s0 + $0x60] sm:$0xff]
  %v74 = vld [vmem:[%s0 + $0x68] sm:$0xff]
  %v75 = vld [vmem:[%s0 + $0x70] sm:$0xff]
  %v76 = vld [vmem:[%s0 + $0x78] sm:$0xff]
  %v77 = vld [vmem:[%s0 + $0x80] sm:$0xff]
  %v78 = vld [vmem:[%s0 + $0x88] sm:$0xff]
  %v79 = vld [vmem:[%s0 + $0x90] sm:$0xff]
  %v80 = vld [vmem:[%s0 + $0x98] sm:$0xff]
  %v81 = vld [vmem:[%s0 + $0xa0] sm:$0xff]
  %v82 = vld [vmem:[%s0 + $0xa8] sm:$0xff]
  %v83 = vld [vmem:[%s0 + $0xb0] sm:$0xff]
  %v84 = vld [vmem:[%s0 + $0xb8] sm:$0xff]
  %v85 = vld [vmem:[%s0 + $0xc0] sm:$0xff]
  %v86 = vld [vmem:[%s0 + $0xc8] sm:$0xff]
  %v87 = vld [vmem:[%s0 + $0xd0] sm:$0xff]
  %v88 = vld [vmem:[%s0 + $0xd8] sm:$0xff]
  %v89 = vld [vmem:[%s0 + $0xe0] sm:$0xff]
  %v90 = vld [vmem:[%s0 + $0xe8] sm:$0xff]
  %v91 = vld [vmem:[%s0 + $0xf0] sm:$0xff]
  %v92 = vld [vmem:[%s0 + $0xf8] sm:$0xff]
  %v93 = vld [vmem:[%s0 + $0x100] sm:$0xff]
  %v94 = vld [vmem:[%s0 + $0x108] sm:$0xff]
  %v95 = vld [vmem:[%s0 + $0x110] sm:$0xff]
  %v96 = vld [vmem:[%s0 + $0x118] sm:$0xff]
  %v97 = vld [vmem:[%s0 + $0x120] sm:$0xff]
  %v98 = vld [vmem:[%s0 + $0x128] sm:$0xff]
  %v99 = vld [vmem:[%s0 + $0x130] sm:$0xff]
  %v100 = vld [vmem:[%s0 + $0x138] sm:$0xff]
  %v101 = vld [vmem:[%s0 + $0x140] sm:$0xff]
  %v102 = vld [vmem:[%s0 + $0x148] sm:$0xff]
  %v103 = vld [vmem:[%s1] sm:$0xf]
  %v104 = vld [vmem:[%s1 + $0x4] sm:$0xf]
  %v105 = vld [vmem:[%s1 + $0x8] sm:$0xf]
  %v106 = vld [vmem:[%s1 + $0xc] sm:$0xf]
  %v107 = vld [vmem:[%s1 + $0x10] sm:$0xf]
  %v108 = vld [vmem:[%s1 + $0x14] sm:$0xf]
  %v109 = vld [vmem:[%s1 + $0x18] sm:$0xf]
  %v110 = vld [vmem:[%s1 + $0x1c] sm:$0xf]
  %v111 = vld [vmem:[%s1 + $0x20] sm:$0xf]
  %v112 = vld [vmem:[%s1 + $0x24] sm:$0xf]
  %v113 = vld [vmem:[%s1 + $0x28] sm:$0xf]
  %v114 = vld [vmem:[%s1 + $0x2c] sm:$0xf]
  %v115 = vld [vmem:[%s1 + $0x30] sm:$0xf]
  %v116 = vld [vmem:[%s1 + $0x34] sm:$0xf]
  %v117 = vld [vmem:[%s1 + $0x38] sm:$0xf]
  %v118 = vld [vmem:[%s1 + $0x3c] sm:$0xf]
  %v119 = vld [vmem:[%s1 + $0x40] sm:$0xf]
  %v120 = vld [vmem:[%s1 + $0x44] sm:$0xf]
  %v121 = vld [vmem:[%s1 + $0x48] sm:$0xf]
  %v122 = vld [vmem:[%s1 + $0x4c] sm:$0xf]
  %v123 = vld [vmem:[%s1 + $0x50] sm:$0xf]
  %v124 = vld [vmem:[%s1 + $0x54] sm:$0xf]
  %v125 = vld [vmem:[%s1 + $0x58] sm:$0xf]
  %v126 = vld [vmem:[%s1 + $0x5c] sm:$0xf]
  %v127 = vld [vmem:[%s1 + $0x60] sm:$0xf]
  %v128 = vld [vmem:[%s1 + $0x64] sm:$0xf]
  %v129 = vld [vmem:[%s1 + $0x68] sm:$0xf]
  %v130 = vld [vmem:[%s1 + $0x6c] sm:$0xf]
  %v131 = vld [vmem:[%s1 + $0x70] sm:$0xf]
  %v132 = vld [vmem:[%s1 + $0x74] sm:$0xf]
  %v133 = vld [vmem:[%s1 + $0x78] sm:$0xf]
  %v134 = vld [vmem:[%s1 + $0x7c] sm:$0xf]
  %v135 = vld [vmem:[%s1 + $0x80] sm:$0xf]
  %v136 = vld [vmem:[%s1 + $0x84] sm:$0xf]
  %v137 = vld [vmem:[%s1 + $0x88] sm:$0xf]
  %v138 = vld [vmem:[%s1 + $0x8c] sm:$0xf]
  %v139 = vld [vmem:[%s1 + $0x90] sm:$0xf]
  %v140 = vld [vmem:[%s1 + $0x94] sm:$0xf]
  %v141 = vld [vmem:[%s1 + $0x98] sm:$0xf]
  %v142 = vld [vmem:[%s1 + $0x9c] sm:$0xf]
  %v143 = vld [vmem:[%s1 + $0xa0] sm:$0xf]
  %v144 = vld [vmem:[%s1 + $0xa4] sm:$0xf]
  %v145 = vld [vmem:[%s1 + $0xa8] sm:$0xf]
  %v146 = vld [vmem:[%s1 + $0xac] sm:$0xf]
  %v147 = vld [vmem:[%s1 + $0xb0] sm:$0xf]
  %v148 = vld [vmem:[%s1 + $0xb4] sm:$0xf]
  %v149 = vld [vmem:[%s1 + $0xb8] sm:$0xf]
  %v150 = vld [vmem:[%s1 + $0xbc] sm:$0xf]
  %v151 = vld [vmem:[%s1 + $0xc0] sm:$0xf]
  %v152 = vld [vmem:[%s1 + $0xc4] sm:$0xf]
  %v153 = vld [vmem:[%s1 + $0xc8] sm:$0xf]
  %v154 = vld [vmem:[%s1 + $0xcc] sm:$0xf]
  %v155 = vld [vmem:[%s1 + $0xd0] sm:$0xf]
  %v156 = vld [vmem:[%s1 + $0xd4] sm:$0xf]
  %v157 = vld [vmem:[%s1 + $0xd8] sm:$0xf]
  %v158 = vld [vmem:[%s1 + $0xdc] sm:$0xf]
  %v159 = vld [vmem:[%s1 + $0xe0] sm:$0xf]
  %v160 = vld [vmem:[%s1 + $0xe4] sm:$0xf]
  %v161 = vld [vmem:[%s1 + $0xe8] sm:$0xf]
  %v162 = vld [vmem:[%s1 + $0xec] sm:$0xf]
  %v163 = vld [vmem:[%s1 + $0xf0] sm:$0xf]
  %v164 = vld [vmem:[%s1 + $0xf4] sm:$0xf]
  %v165 = vld [vmem:[%s1 + $0xf8] sm:$0xf]
  %v166 = vld [vmem:[%s1 + $0xfc] sm:$0xf]
  %v209 = vunpack.c.l.b16 %v61
  %v210 = vunpack.c.h.b16 %v61
  %v211 = vunpack.c.l.b16 %v62
  %v212 = vunpack.c.h.b16 %v62
  %v213 = vunpack.c.l.b16 %v63
  %v214 = vunpack.c.h.b16 %v63
  %v215 = vunpack.c.l.b16 %v64
  %v216 = vunpack.c.h.b16 %v64
  %v217 = vunpack.c.l.b16 %v65
  %v218 = vunpack.c.h.b16 %v65
  %v219 = vunpack.c.l.b16 %v66
  %v220 = vunpack.c.h.b16 %v66
  %v221 = vunpack.c.l.b16 %v67
  %v222 = vunpack.c.h.b16 %v67
  %v223 = vunpack.c.l.b16 %v68
  %v224 = vunpack.c.h.b16 %v68
  %v225 = vunpack.c.l.b16 %v69
  %v226 = vunpack.c.h.b16 %v69
  %v227 = vunpack.c.l.b16 %v70
  %v228 = vunpack.c.h.b16 %v70
  %v229 = vunpack.c.l.b16 %v71
  %v230 = vunpack.c.h.b16 %v71
  %v231 = vunpack.c.l.b16 %v72
  %v232 = vunpack.c.h.b16 %v72
  %v233 = vunpack.c.l.b16 %v73
  %v234 = vunpack.c.h.b16 %v73
  %v235 = vunpack.c.l.b16 %v74
  %v236 = vunpack.c.h.b16 %v74
  %v237 = vunpack.c.l.b16 %v75
  %v238 = vunpack.c.h.b16 %v75
  %v239 = vunpack.c.l.b16 %v76
  %v240 = vunpack.c.h.b16 %v76
  %v241 = vunpack.c.l.b16 %v77
  %v242 = vunpack.c.h.b16 %v77
  %v243 = vunpack.c.l.b16 %v78
  %v244 = vunpack.c.h.b16 %v78
  %v245 = vunpack.c.l.b16 %v79
  %v246 = vunpack.c.h.b16 %v79
  %v247 = vunpack.c.l.b16 %v80
  %v248 = vunpack.c.h.b16 %v80
  %v249 = vunpack.c.l.b16 %v81
  %v250 = vunpack.c.h.b16 %v81
  %v251 = vunpack.c.l.b16 %v82
  %v252 = vunpack.c.h.b16 %v82
  %v253 = vunpack.c.l.b16 %v83
  %v254 = vunpack.c.h.b16 %v83
  %v255 = vunpack.c.l.b16 %v84
  %v256 = vunpack.c.h.b16 %v84
  %v257 = vunpack.c.l.b16 %v85
  %v258 = vunpack.c.h.b16 %v85
  %v259 = vunpack.c.l.b16 %v86
  %v260 = vunpack.c.h.b16 %v86
  %v261 = vunpack.c.l.b16 %v87
  %v262 = vunpack.c.h.b16 %v87
  %v263 = vunpack.c.l.b16 %v88
  %v264 = vunpack.c.h.b16 %v88
  %v265 = vunpack.c.l.b16 %v89
  %v266 = vunpack.c.h.b16 %v89
  %v267 = vunpack.c.l.b16 %v90
  %v268 = vunpack.c.h.b16 %v90
  %v269 = vunpack.c.l.b16 %v91
  %v270 = vunpack.c.h.b16 %v91
  %v271 = vunpack.c.l.b16 %v92
  %v272 = vunpack.c.h.b16 %v92
  %v273 = vunpack.c.l.b16 %v93
  %v274 = vunpack.c.h.b16 %v93
  %v275 = vunpack.c.l.b16 %v94
  %v276 = vunpack.c.h.b16 %v94
  %v277 = vunpack.c.l.b16 %v95
  %v278 = vunpack.c.h.b16 %v95
  %v279 = vunpack.c.l.b16 %v96
  %v280 = vunpack.c.h.b16 %v96
  %v281 = vunpack.c.l.b16 %v97
  %v282 = vunpack.c.h.b16 %v97
  %v283 = vunpack.c.l.b16 %v98
  %v284 = vunpack.c.h.b16 %v98
  %v285 = vunpack.c.l.b16 %v99
  %v286 = vunpack.c.h.b16 %v99
  %v287 = vunpack.c.l.b16 %v100
  %v288 = vunpack.c.h.b16 %v100
  %v289 = vunpack.c.l.b16 %v101
  %v290 = vunpack.c.h.b16 %v101
  %v291 = vunpack.c.l.b16 %v102
  %v292 = vunpack.c.h.b16 %v102
  %v293 = vpack.c.b16 %v213, %v209
  %v294 = vpack.c.b16 %v214, %v210
  %v295 = vpack.c.b16 %v215, %v211
  %v296 = vpack.c.b16 %v216, %v212
  %v297 = vpack.c.b16 %v221, %v217
  %v298 = vpack.c.b16 %v222, %v218
  %v299 = vpack.c.b16 %v223, %v219
  %v300 = vpack.c.b16 %v224, %v220
  %v301 = vpack.c.b16 %v229, %v225
  %v302 = vpack.c.b16 %v230, %v226
  %v303 = vpack.c.b16 %v231, %v227
  %v304 = vpack.c.b16 %v232, %v228
  %v305 = vpack.c.b16 %v237, %v233
  %v306 = vpack.c.b16 %v238, %v234
  %v307 = vpack.c.b16 %v239, %v235
  %v308 = vpack.c.b16 %v240, %v236
  %v309 = vpack.c.b16 %v245, %v241
  %v310 = vpack.c.b16 %v246, %v242
  %v311 = vpack.c.b16 %v247, %v243
  %v312 = vpack.c.b16 %v248, %v244
  %v313 = vpack.c.b16 %v253, %v249
  %v314 = vpack.c.b16 %v254, %v250
  %v315 = vpack.c.b16 %v255, %v251
  %v316 = vpack.c.b16 %v256, %v252
  %v317 = vpack.c.b16 %v261, %v257
  %v318 = vpack.c.b16 %v262, %v258
  %v319 = vpack.c.b16 %v263, %v259
  %v320 = vpack.c.b16 %v264, %v260
  %v321 = vpack.c.b16 %v269, %v265
  %v322 = vpack.c.b16 %v270, %v266
  %v323 = vpack.c.b16 %v271, %v267
  %v324 = vpack.c.b16 %v272, %v268
  %v325 = vpack.c.b16 %v277, %v273
  %v326 = vpack.c.b16 %v278, %v274
  %v327 = vpack.c.b16 %v279, %v275
  %v328 = vpack.c.b16 %v280, %v276
  %v329 = vpack.c.b16 %v285, %v281
  %v330 = vpack.c.b16 %v286, %v282
  %v331 = vpack.c.b16 %v287, %v283
  %v332 = vpack.c.b16 %v288, %v284
  %v333 = vpack.c.b16 %v289, %v289
  %v334 = vpack.c.b16 %v290, %v290
  %v335 = vpack.c.b16 %v291, %v291
  %v336 = vpack.c.b16 %v292, %v292
  %v445 = vunpack.c.l.b16 %v103
  %v446 = vunpack.c.l.b16 %v104
  %v447 = vunpack.c.l.b16 %v105
  %v448 = vunpack.c.l.b16 %v106
  %v449 = vunpack.c.l.b16 %v107
  %v450 = vunpack.c.l.b16 %v108
  %v451 = vunpack.c.l.b16 %v109
  %v452 = vunpack.c.l.b16 %v110
  %v453 = vunpack.c.l.b16 %v111
  %v454 = vunpack.c.l.b16 %v112
  %v455 = vunpack.c.l.b16 %v113
  %v456 = vunpack.c.l.b16 %v114
  %v457 = vunpack.c.l.b16 %v115
  %v458 = vunpack.c.l.b16 %v116
  %v459 = vunpack.c.l.b16 %v117
  %v460 = vunpack.c.l.b16 %v118
  %v461 = vunpack.c.l.b16 %v119
  %v462 = vunpack.c.l.b16 %v120
  %v463 = vunpack.c.l.b16 %v121
  %v464 = vunpack.c.l.b16 %v122
  %v465 = vunpack.c.l.b16 %v123
  %v466 = vunpack.c.l.b16 %v124
  %v467 = vunpack.c.l.b16 %v125
  %v468 = vunpack.c.l.b16 %v126
  %v469 = vunpack.c.l.b16 %v127
  %v470 = vunpack.c.l.b16 %v128
  %v471 = vunpack.c.l.b16 %v129
  %v472 = vunpack.c.l.b16 %v130
  %v473 = vunpack.c.l.b16 %v131
  %v474 = vunpack.c.l.b16 %v132
  %v475 = vunpack.c.l.b16 %v133
  %v476 = vunpack.c.l.b16 %v134
  %v477 = vunpack.c.l.b16 %v135
  %v478 = vunpack.c.l.b16 %v136
  %v479 = vunpack.c.l.b16 %v137
  %v480 = vunpack.c.l.b16 %v138
  %v481 = vunpack.c.l.b16 %v139
  %v482 = vunpack.c.l.b16 %v140
  %v483 = vunpack.c.l.b16 %v141
  %v484 = vunpack.c.l.b16 %v142
  %v485 = vunpack.c.l.b16 %v143
  %v486 = vunpack.c.l.b16 %v144
  %v487 = vunpack.c.l.b16 %v145
  %v488 = vunpack.c.l.b16 %v146
  %v489 = vunpack.c.l.b16 %v147
  %v490 = vunpack.c.l.b16 %v148
  %v491 = vunpack.c.l.b16 %v149
  %v492 = vunpack.c.l.b16 %v150
  %v493 = vunpack.c.l.b16 %v151
  %v494 = vunpack.c.l.b16 %v152
  %v495 = vunpack.c.l.b16 %v153
  %v496 = vunpack.c.l.b16 %v154
  %v497 = vunpack.c.l.b16 %v155
  %v498 = vunpack.c.l.b16 %v156
  %v499 = vunpack.c.l.b16 %v157
  %v500 = vunpack.c.l.b16 %v158
  %v501 = vunpack.c.l.b16 %v159
  %v502 = vunpack.c.l.b16 %v160
  %v503 = vunpack.c.l.b16 %v161
  %v504 = vunpack.c.l.b16 %v162
  %v505 = vunpack.c.l.b16 %v163
  %v506 = vunpack.c.l.b16 %v164
  %v507 = vunpack.c.l.b16 %v165
  %v508 = vunpack.c.l.b16 %v166
  %v509 = vpack.c.b16 %v446, %v445
  %v510 = vpack.c.b16 %v448, %v447
  %v511 = vpack.c.b16 %v450, %v449
  %v512 = vpack.c.b16 %v452, %v451
  %v513 = vpack.c.b16 %v454, %v453
  %v514 = vpack.c.b16 %v456, %v455
  %v515 = vpack.c.b16 %v458, %v457
  %v516 = vpack.c.b16 %v460, %v459
  %v517 = vpack.c.b16 %v462, %v461
  %v518 = vpack.c.b16 %v464, %v463
  %v519 = vpack.c.b16 %v466, %v465
  %v520 = vpack.c.b16 %v468, %v467
  %v521 = vpack.c.b16 %v470, %v469
  %v522 = vpack.c.b16 %v472, %v471
  %v523 = vpack.c.b16 %v474, %v473
  %v524 = vpack.c.b16 %v476, %v475
  %v525 = vpack.c.b16 %v478, %v477
  %v526 = vpack.c.b16 %v480, %v479
  %v527 = vpack.c.b16 %v482, %v481
  %v528 = vpack.c.b16 %v484, %v483
  %v529 = vpack.c.b16 %v486, %v485
  %v530 = vpack.c.b16 %v488, %v487
  %v531 = vpack.c.b16 %v490, %v489
  %v532 = vpack.c.b16 %v492, %v491
  %v533 = vpack.c.b16 %v494, %v493
  %v534 = vpack.c.b16 %v496, %v495
  %v535 = vpack.c.b16 %v498, %v497
  %v536 = vpack.c.b16 %v500, %v499
  %v537 = vpack.c.b16 %v502, %v501
  %v538 = vpack.c.b16 %v504, %v503
  %v539 = vpack.c.b16 %v506, %v505
  %v540 = vpack.c.b16 %v508, %v507
  %573 = vmatprep.subr.bf16.mxu0 0
  %574 = vmatpush1.bf16.msra.mxu0 %v516
  %575 = vmatprep.subr.bf16.mxu0 0
  %576 = vmatpush1.bf16.msra.mxu0 %v515
  %577 = vmatprep.subr.bf16.mxu0 0
  %578 = vmatpush1.bf16.msra.mxu0 %v514
  %579 = vmatprep.subr.bf16.mxu0 0
  %580 = vmatpush1.bf16.msra.mxu0 %v513
  %581 = vmatprep.subr.bf16.mxu0 0
  %582 = vmatpush1.bf16.msra.mxu0 %v512
  %583 = vmatprep.subr.bf16.mxu0 0
  %584 = vmatpush1.bf16.msra.mxu0 %v511
  %585 = vmatprep.subr.bf16.mxu0 0
  %586 = vmatpush1.bf16.msra.mxu0 %v510
  %587 = vmatprep.subr.bf16.mxu0 0
  %588 = vmatpush1.bf16.msra.mxu0 %v509
  %589 = vmatprep.subr.bf16.mxu0 0
  %590 = vmatpush2.bf16.msra.mxu0 %v524
  %591 = vmatprep.subr.bf16.mxu0 0
  %592 = vmatpush2.bf16.msra.mxu0 %v523
  %593 = vmatprep.subr.bf16.mxu0 0
  %594 = vmatpush2.bf16.msra.mxu0 %v522
  %595 = vmatprep.subr.bf16.mxu0 0
  %596 = vmatpush2.bf16.msra.mxu0 %v521
  %597 = vmatprep.subr.bf16.mxu0 0
  %598 = vmatpush2.bf16.msra.mxu0 %v520
  %599 = vmatprep.subr.bf16.mxu0 0
  %600 = vmatpush2.bf16.msra.mxu0 %v519
  %601 = vmatprep.subr.bf16.mxu0 0
  %602 = vmatpush2.bf16.msra.mxu0 %v518
  %603 = vmatprep.subr.bf16.mxu0 0
  %604 = vmatpush2.bf16.msra.mxu0 %v517
  %605 = vmatprep.mubr.bf16.mxu0 %v294
  %606 = vmatmul.mubr.bf16.gmra.mxu0 %v293
  %v607 = vpop.f32.mrf.mxu0
  %v608 = vadd.f32 0.0, %v607
  %v609 = vpop.f32.mrf.mxu0
  %v610 = vpop.f32.mrf.mxu0
  %v611 = vadd.f32 0.0, %v610
  %v612 = vpop.f32.mrf.mxu0
  %613 = vmatprep.mubr.bf16.mxu0 %v298
  %614 = vmatmul.mubr.bf16.gmra.mxu0 %v297
  %v615 = vpop.f32.mrf.mxu0
  %v616 = vadd.f32 0.0, %v615
  %v617 = vpop.f32.mrf.mxu0
  %v618 = vpop.f32.mrf.mxu0
  %v619 = vadd.f32 0.0, %v618
  %v620 = vpop.f32.mrf.mxu0
  %621 = vmatprep.mubr.bf16.mxu0 %v302
  %622 = vmatmul.mubr.bf16.gmra.mxu0 %v301
  %v623 = vpop.f32.mrf.mxu0
  %v624 = vadd.f32 0.0, %v623
  %v625 = vpop.f32.mrf.mxu0
  %v626 = vpop.f32.mrf.mxu0
  %v627 = vadd.f32 0.0, %v626
  %v628 = vpop.f32.mrf.mxu0
  %629 = vmatprep.mubr.bf16.mxu0 %v306
  %630 = vmatmul.mubr.bf16.gmra.mxu0 %v305
  %v631 = vpop.f32.mrf.mxu0
  %v632 = vadd.f32 0.0, %v631
  %v633 = vpop.f32.mrf.mxu0
  %v634 = vpop.f32.mrf.mxu0
  %v635 = vadd.f32 0.0, %v634
  %v636 = vpop.f32.mrf.mxu0
  %637 = vmatprep.mubr.bf16.mxu0 %v310
  %638 = vmatmul.mubr.bf16.gmra.mxu0 %v309
  %v639 = vpop.f32.mrf.mxu0
  %v640 = vadd.f32 0.0, %v639
  %v641 = vpop.f32.mrf.mxu0
  %v642 = vpop.f32.mrf.mxu0
  %v643 = vadd.f32 0.0, %v642
  %v644 = vpop.f32.mrf.mxu0
  %645 = vmatprep.mubr.bf16.mxu0 %v314
  %646 = vmatmul.mubr.bf16.gmra.mxu0 %v313
  %v647 = vpop.f32.mrf.mxu0
  %v648 = vadd.f32 0.0, %v647
  %v649 = vpop.f32.mrf.mxu0
  %v650 = vpop.f32.mrf.mxu0
  %v651 = vadd.f32 0.0, %v650
  %v652 = vpop.f32.mrf.mxu0
  %653 = vmatprep.mubr.bf16.mxu0 %v318
  %654 = vmatmul.mubr.bf16.gmra.mxu0 %v317
  %v655 = vpop.f32.mrf.mxu0
  %v656 = vadd.f32 0.0, %v655
  %v657 = vpop.f32.mrf.mxu0
  %v658 = vpop.f32.mrf.mxu0
  %v659 = vadd.f32 0.0, %v658
  %v660 = vpop.f32.mrf.mxu0
  %661 = vmatprep.mubr.bf16.mxu0 %v322
  %662 = vmatmul.mubr.bf16.gmra.mxu0 %v321
  %v663 = vpop.f32.mrf.mxu0
  %v664 = vadd.f32 0.0, %v663
  %v665 = vpop.f32.mrf.mxu0
  %v666 = vpop.f32.mrf.mxu0
  %v667 = vadd.f32 0.0, %v666
  %v668 = vpop.f32.mrf.mxu0
  %669 = vmatprep.mubr.bf16.mxu0 %v326
  %670 = vmatmul.mubr.bf16.gmra.mxu0 %v325
  %v671 = vpop.f32.mrf.mxu0
  %v672 = vadd.f32 0.0, %v671
  %v673 = vpop.f32.mrf.mxu0
  %v674 = vpop.f32.mrf.mxu0
  %v675 = vadd.f32 0.0, %v674
  %v676 = vpop.f32.mrf.mxu0
  %677 = vmatprep.mubr.bf16.mxu0 %v330
  %678 = vmatmul.mubr.bf16.gmra.mxu0 %v329
  %v679 = vpop.f32.mrf.mxu0
  %v680 = vadd.f32 0.0, %v679
  %v681 = vpop.f32.mrf.mxu0
  %v682 = vpop.f32.mrf.mxu0
  %v683 = vadd.f32 0.0, %v682
  %v684 = vpop.f32.mrf.mxu0
  %685 = vmatprep.mubr.bf16.mxu0 %v334
  %686 = vmatmul.mubr.bf16.gmra.mxu0 %v333
  %v687 = vpop.f32.mrf.mxu0
  %v688 = vadd.f32 0.0, %v687
  %v689 = vpop.f32.mrf.mxu0
  %v690 = vpop.f32.mrf.mxu0
  %v691 = vpop.f32.mrf.mxu0
  %692 = vdwg.mxu0
  %693 = vmatprep.subr.bf16.mxu0 0
  %694 = vmatpush1.bf16.msra.mxu0 %v532
  %695 = vmatprep.subr.bf16.mxu0 0
  %696 = vmatpush1.bf16.msra.mxu0 %v531
  %697 = vmatprep.subr.bf16.mxu0 0
  %698 = vmatpush1.bf16.msra.mxu0 %v530
  %699 = vmatprep.subr.bf16.mxu0 0
  %700 = vmatpush1.bf16.msra.mxu0 %v529
  %701 = vmatprep.subr.bf16.mxu0 0
  %702 = vmatpush1.bf16.msra.mxu0 %v528
  %703 = vmatprep.subr.bf16.mxu0 0
  %704 = vmatpush1.bf16.msra.mxu0 %v527
  %705 = vmatprep.subr.bf16.mxu0 0
  %706 = vmatpush1.bf16.msra.mxu0 %v526
  %707 = vmatprep.subr.bf16.mxu0 0
  %708 = vmatpush1.bf16.msra.mxu0 %v525
  %709 = vmatprep.subr.bf16.mxu0 0
  %710 = vmatpush2.bf16.msra.mxu0 %v540
  %711 = vmatprep.subr.bf16.mxu0 0
  %712 = vmatpush2.bf16.msra.mxu0 %v539
  %713 = vmatprep.subr.bf16.mxu0 0
  %714 = vmatpush2.bf16.msra.mxu0 %v538
  %715 = vmatprep.subr.bf16.mxu0 0
  %716 = vmatpush2.bf16.msra.mxu0 %v537
  %717 = vmatprep.subr.bf16.mxu0 0
  %718 = vmatpush2.bf16.msra.mxu0 %v536
  %719 = vmatprep.subr.bf16.mxu0 0
  %720 = vmatpush2.bf16.msra.mxu0 %v535
  %721 = vmatprep.subr.bf16.mxu0 0
  %722 = vmatpush2.bf16.msra.mxu0 %v534
  %723 = vmatprep.subr.bf16.mxu0 0
  %724 = vmatpush2.bf16.msra.mxu0 %v533
  %725 = vmatprep.mubr.bf16.mxu0 %v296
  %726 = vmatmul.mubr.bf16.gmra.mxu0 %v295
  %v727 = vpop.f32.mrf.mxu0
  %v728 = vadd.f32 %v608, %v727
  %v729 = vpop.f32.mrf.mxu0
  %v730 = vpop.f32.mrf.mxu0
  %v731 = vadd.f32 %v611, %v730
  %v732 = vpop.f32.mrf.mxu0
  %733 = vmatprep.mubr.bf16.mxu0 %v300
  %734 = vmatmul.mubr.bf16.gmra.mxu0 %v299
  %v735 = vpop.f32.mrf.mxu0
  %v736 = vadd.f32 %v616, %v735
  %v737 = vpop.f32.mrf.mxu0
  %v738 = vpop.f32.mrf.mxu0
  %v739 = vadd.f32 %v619, %v738
  %v740 = vpop.f32.mrf.mxu0
  %741 = vmatprep.mubr.bf16.mxu0 %v304
  %742 = vmatmul.mubr.bf16.gmra.mxu0 %v303
  %v743 = vpop.f32.mrf.mxu0
  %v744 = vadd.f32 %v624, %v743
  %v745 = vpop.f32.mrf.mxu0
  %v746 = vpop.f32.mrf.mxu0
  %v747 = vadd.f32 %v627, %v746
  %v748 = vpop.f32.mrf.mxu0
  %749 = vmatprep.mubr.bf16.mxu0 %v308
  %750 = vmatmul.mubr.bf16.gmra.mxu0 %v307
  %v751 = vpop.f32.mrf.mxu0
  %v752 = vadd.f32 %v632, %v751
  %v753 = vpop.f32.mrf.mxu0
  %v754 = vpop.f32.mrf.mxu0
  %v755 = vadd.f32 %v635, %v754
  %v756 = vpop.f32.mrf.mxu0
  %757 = vmatprep.mubr.bf16.mxu0 %v312
  %758 = vmatmul.mubr.bf16.gmra.mxu0 %v311
  %v759 = vpop.f32.mrf.mxu0
  %v760 = vadd.f32 %v640, %v759
  %v761 = vpop.f32.mrf.mxu0
  %v762 = vpop.f32.mrf.mxu0
  %v763 = vadd.f32 %v643, %v762
  %v764 = vpop.f32.mrf.mxu0
  %765 = vmatprep.mubr.bf16.mxu0 %v316
  %766 = vmatmul.mubr.bf16.gmra.mxu0 %v315
  %v767 = vpop.f32.mrf.mxu0
  %v768 = vadd.f32 %v648, %v767
  %v769 = vpop.f32.mrf.mxu0
  %v770 = vpop.f32.mrf.mxu0
  %v771 = vadd.f32 %v651, %v770
  %v772 = vpop.f32.mrf.mxu0
  %773 = vmatprep.mubr.bf16.mxu0 %v320
  %774 = vmatmul.mubr.bf16.gmra.mxu0 %v319
  %v775 = vpop.f32.mrf.mxu0
  %v776 = vadd.f32 %v656, %v775
  %v777 = vpop.f32.mrf.mxu0
  %v778 = vpop.f32.mrf.mxu0
  %v779 = vadd.f32 %v659, %v778
  %v780 = vpop.f32.mrf.mxu0
  %781 = vmatprep.mubr.bf16.mxu0 %v324
  %782 = vmatmul.mubr.bf16.gmra.mxu0 %v323
  %v783 = vpop.f32.mrf.mxu0
  %v784 = vadd.f32 %v664, %v783
  %v785 = vpop.f32.mrf.mxu0
  %v786 = vpop.f32.mrf.mxu0
  %v787 = vadd.f32 %v667, %v786
  %v788 = vpop.f32.mrf.mxu0
  %789 = vmatprep.mubr.bf16.mxu0 %v328
  %790 = vmatmul.mubr.bf16.gmra.mxu0 %v327
  %v791 = vpop.f32.mrf.mxu0
  %v792 = vadd.f32 %v672, %v791
  %v793 = vpop.f32.mrf.mxu0
  %v794 = vpop.f32.mrf.mxu0
  %v795 = vadd.f32 %v675, %v794
  %v796 = vpop.f32.mrf.mxu0
  %797 = vmatprep.mubr.bf16.mxu0 %v332
  %798 = vmatmul.mubr.bf16.gmra.mxu0 %v331
  %v799 = vpop.f32.mrf.mxu0
  %v800 = vadd.f32 %v680, %v799
  %v801 = vpop.f32.mrf.mxu0
  %v802 = vpop.f32.mrf.mxu0
  %v803 = vadd.f32 %v683, %v802
  %v804 = vpop.f32.mrf.mxu0
  %805 = vmatprep.mubr.bf16.mxu0 %v336
  %806 = vmatmul.mubr.bf16.gmra.mxu0 %v335
  %v807 = vpop.f32.mrf.mxu0
  %v808 = vadd.f32 %v688, %v807
  %v809 = vpop.f32.mrf.mxu0
  %v810 = vpop.f32.mrf.mxu0
  %v811 = vpop.f32.mrf.mxu0
  %812 = vdwg.mxu0
  %v813 = vadd.f32 %v40, %v728
  %v814 = vadd.f32 %v41, %v731
  %v815 = vadd.f32 %v42, %v736
  %v816 = vadd.f32 %v43, %v739
  %v817 = vadd.f32 %v44, %v744
  %v818 = vadd.f32 %v45, %v747
  %v819 = vadd.f32 %v46, %v752
  %v820 = vadd.f32 %v47, %v755
  %v821 = vadd.f32 %v48, %v760
  %v822 = vadd.f32 %v49, %v763
  %v823 = vadd.f32 %v50, %v768
  %v824 = vadd.f32 %v51, %v771
  %v825 = vadd.f32 %v52, %v776
  %v826 = vadd.f32 %v53, %v779
  %v827 = vadd.f32 %v54, %v784
  %v828 = vadd.f32 %v55, %v787
  %v829 = vadd.f32 %v56, %v792
  %v830 = vadd.f32 %v57, %v795
  %v831 = vadd.f32 %v58, %v800
  %v832 = vadd.f32 %v59, %v803
  %v833 = vadd.f32 %v60, %v808
  %834 = vst [vmem:[#allocation2] sm:$0xff] %v813
  %835 = vst [vmem:[#allocation2 + $0x8] sm:$0xff] %v814
  %836 = vst [vmem:[#allocation2 + $0x10] sm:$0xff] %v815
  %837 = vst [vmem:[#allocation2 + $0x18] sm:$0xff] %v816
  %838 = vst [vmem:[#allocation2 + $0x20] sm:$0xff] %v817
  %839 = vst [vmem:[#allocation2 + $0x28] sm:$0xff] %v818
  %840 = vst [vmem:[#allocation2 + $0x30] sm:$0xff] %v819
  %841 = vst [vmem:[#allocation2 + $0x38] sm:$0xff] %v820
  %842 = vst [vmem:[#allocation2 + $0x40] sm:$0xff] %v821
  %843 = vst [vmem:[#allocation2 + $0x48] sm:$0xff] %v822
  %844 = vst [vmem:[#allocation2 + $0x50] sm:$0xff] %v823
  %845 = vst [vmem:[#allocation2 + $0x58] sm:$0xff] %v824
  %846 = vst [vmem:[#allocation2 + $0x60] sm:$0xff] %v825
  %847 = vst [vmem:[#allocation2 + $0x68] sm:$0xff] %v826
  %848 = vst [vmem:[#allocation2 + $0x70] sm:$0xff] %v827
  %849 = vst [vmem:[#allocation2 + $0x78] sm:$0xff] %v828
  %850 = vst [vmem:[#allocation2 + $0x80] sm:$0xff] %v829
  %851 = vst [vmem:[#allocation2 + $0x88] sm:$0xff] %v830
  %852 = vst [vmem:[#allocation2 + $0x90] sm:$0xff] %v831
  %853 = vst [vmem:[#allocation2 + $0x98] sm:$0xff] %v832
  %854 = vst [vmem:[#allocation2 + $0xa0] sm:$0xff] %v833
  // Predicated region
  $region18: #{critic_forward.5} parent=0 // pred_check
    %p855 = pneg %p15
  $region19: #{critic_forward.5} parent=0 // pred_check_branch
    %857 = sbr.rel (%p855) target = $region21
  $region20: #{critic_forward.5} parent=0 // pred_region
    %v858 = vld [vmem:[#allocation2] sm:$0xff]
    %v859 = vld [vmem:[#allocation2 + $0x8] sm:$0xff]
    %v860 = vld [vmem:[#allocation2 + $0x10] sm:$0xff]
    %v861 = vld [vmem:[#allocation2 + $0x18] sm:$0xff]
    %v862 = vld [vmem:[#allocation2 + $0x20] sm:$0xff]
    %v863 = vld [vmem:[#allocation2 + $0x28] sm:$0xff]
    %v864 = vld [vmem:[#allocation2 + $0x30] sm:$0xff]
    %v865 = vld [vmem:[#allocation2 + $0x38] sm:$0xff]
    %v866 = vld [vmem:[#allocation2 + $0x40] sm:$0xff]
    %v867 = vld [vmem:[#allocation2 + $0x48] sm:$0xff]
    %v868 = vld [vmem:[#allocation2 + $0x50] sm:$0xff]
    %v869 = vld [vmem:[#allocation2 + $0x58] sm:$0xff]
    %v870 = vld [vmem:[#allocation2 + $0x60] sm:$0xff]
    %v871 = vld [vmem:[#allocation2 + $0x68] sm:$0xff]
    %v872 = vld [vmem:[#allocation2 + $0x70] sm:$0xff]
    %v873 = vld [vmem:[#allocation2 + $0x78] sm:$0xff]
    %v874 = vld [vmem:[#allocation2 + $0x80] sm:$0xff]
    %v875 = vld [vmem:[#allocation2 + $0x88] sm:$0xff]
    %v876 = vld [vmem:[#allocation2 + $0x90] sm:$0xff]
    %v877 = vld [vmem:[#allocation2 + $0x98] sm:$0xff]
    %v878 = vld [vmem:[#allocation2 + $0xa0] sm:$0xff]
    %v879 = vld [vmem:[%s2] sm:$0x1]
    %v881 = vlaneseq
    %v882 = vshrl.u32 %v881, 7
    %v883 = vsub.s32 0, %v882
    %v884 = vrot.slane %v879, %v883
    %v886 = vadd.f32 %v858, %v884
    %v887 = vadd.f32 %v859, %v884
    %v888 = vadd.f32 %v860, %v884
    %v889 = vadd.f32 %v861, %v884
    %v890 = vadd.f32 %v862, %v884
    %v891 = vadd.f32 %v863, %v884
    %v892 = vadd.f32 %v864, %v884
    %v893 = vadd.f32 %v865, %v884
    %v894 = vadd.f32 %v866, %v884
    %v895 = vadd.f32 %v867, %v884
    %v896 = vadd.f32 %v868, %v884
    %v897 = vadd.f32 %v869, %v884
    %v898 = vadd.f32 %v870, %v884
    %v899 = vadd.f32 %v871, %v884
    %v900 = vadd.f32 %v872, %v884
    %v901 = vadd.f32 %v873, %v884
    %v902 = vadd.f32 %v874, %v884
    %v903 = vadd.f32 %v875, %v884
    %v904 = vadd.f32 %v876, %v884
    %v905 = vadd.f32 %v877, %v884
    %v906 = vadd.f32 %v878, %v884
    %v907 = vmax.f32 %v886, 0.0
    %v908 = vmax.f32 %v887, 0.0
    %v909 = vmax.f32 %v888, 0.0
    %v910 = vmax.f32 %v889, 0.0
    %v911 = vmax.f32 %v890, 0.0
    %v912 = vmax.f32 %v891, 0.0
    %v913 = vmax.f32 %v892, 0.0
    %v914 = vmax.f32 %v893, 0.0
    %v915 = vmax.f32 %v894, 0.0
    %v916 = vmax.f32 %v895, 0.0
    %v917 = vmax.f32 %v896, 0.0
    %v918 = vmax.f32 %v897, 0.0
    %v919 = vmax.f32 %v898, 0.0
    %v920 = vmax.f32 %v899, 0.0
    %v921 = vmax.f32 %v900, 0.0
    %v922 = vmax.f32 %v901, 0.0
    %v923 = vmax.f32 %v902, 0.0
    %v924 = vmax.f32 %v903, 0.0
    %v925 = vmax.f32 %v904, 0.0
    %v926 = vmax.f32 %v905, 0.0
    %v927 = vmax.f32 %v906, 0.0
    %v928 = vpack.c.bf16 %v908, %v907
    %v929 = vpack.c.bf16 %v910, %v909
    %v930 = vpack.c.bf16 %v912, %v911
    %v931 = vpack.c.bf16 %v914, %v913
    %v932 = vpack.c.bf16 %v916, %v915
    %v933 = vpack.c.bf16 %v918, %v917
    %v934 = vpack.c.bf16 %v920, %v919
    %v935 = vpack.c.bf16 %v922, %v921
    %v936 = vpack.c.bf16 %v924, %v923
    %v937 = vpack.c.bf16 %v926, %v925
    %v938 = vpack.c.bf16 %v927, %v927
    %v950 = vunpack.c.l.b16 %v928
    %v951 = vunpack.c.h.b16 %v928
    %v952 = vunpack.c.l.b16 %v929
    %v953 = vunpack.c.h.b16 %v929
    %v954 = vunpack.c.l.b16 %v930
    %v955 = vunpack.c.h.b16 %v930
    %v956 = vunpack.c.l.b16 %v931
    %v957 = vunpack.c.h.b16 %v931
    %v958 = vunpack.c.l.b16 %v932
    %v959 = vunpack.c.h.b16 %v932
    %v960 = vunpack.c.l.b16 %v933
    %v961 = vunpack.c.h.b16 %v933
    %v962 = vunpack.c.l.b16 %v934
    %v963 = vunpack.c.h.b16 %v934
    %v964 = vunpack.c.l.b16 %v935
    %v965 = vunpack.c.h.b16 %v935
    %v966 = vunpack.c.l.b16 %v936
    %v967 = vunpack.c.h.b16 %v936
    %v968 = vunpack.c.l.b16 %v937
    %v969 = vunpack.c.h.b16 %v937
    %v970 = vunpack.c.l.b16 %v938
    %v971 = vpack.c.b16 %v950, %v950
    %v972 = vpack.c.b16 %v951, %v951
    %v973 = vpack.c.b16 %v952, %v952
    %v974 = vpack.c.b16 %v953, %v953
    %v975 = vpack.c.b16 %v954, %v954
    %v976 = vpack.c.b16 %v955, %v955
    %v977 = vpack.c.b16 %v956, %v956
    %v978 = vpack.c.b16 %v957, %v957
    %v979 = vpack.c.b16 %v958, %v958
    %v980 = vpack.c.b16 %v959, %v959
    %v981 = vpack.c.b16 %v960, %v960
    %v982 = vpack.c.b16 %v961, %v961
    %v983 = vpack.c.b16 %v962, %v962
    %v984 = vpack.c.b16 %v963, %v963
    %v985 = vpack.c.b16 %v964, %v964
    %v986 = vpack.c.b16 %v965, %v965
    %v987 = vpack.c.b16 %v966, %v966
    %v988 = vpack.c.b16 %v967, %v967
    %v989 = vpack.c.b16 %v968, %v968
    %v990 = vpack.c.b16 %v969, %v969
    %v991 = vpack.c.b16 %v970, %v970
    %1013 = vst [vmem:[%s3] sm:$0xf] %v971
    %1014 = vst [vmem:[%s3 + $0x4] sm:$0xf] %v972
    %1015 = vst [vmem:[%s3 + $0x8] sm:$0xf] %v973
    %1016 = vst [vmem:[%s3 + $0xc] sm:$0xf] %v974
    %1017 = vst [vmem:[%s3 + $0x10] sm:$0xf] %v975
    %1018 = vst [vmem:[%s3 + $0x14] sm:$0xf] %v976
    %1019 = vst [vmem:[%s3 + $0x18] sm:$0xf] %v977
    %1020 = vst [vmem:[%s3 + $0x1c] sm:$0xf] %v978
    %1021 = vst [vmem:[%s3 + $0x20] sm:$0xf] %v979
    %1022 = vst [vmem:[%s3 + $0x24] sm:$0xf] %v980
    %1023 = vst [vmem:[%s3 + $0x28] sm:$0xf] %v981
    %1024 = vst [vmem:[%s3 + $0x2c] sm:$0xf] %v982
    %1025 = vst [vmem:[%s3 + $0x30] sm:$0xf] %v983
    %1026 = vst [vmem:[%s3 + $0x34] sm:$0xf] %v984
    %1027 = vst [vmem:[%s3 + $0x38] sm:$0xf] %v985
    %1028 = vst [vmem:[%s3 + $0x3c] sm:$0xf] %v986
    %1029 = vst [vmem:[%s3 + $0x40] sm:$0xf] %v987
    %1030 = vst [vmem:[%s3 + $0x44] sm:$0xf] %v988
    %1031 = vst [vmem:[%s3 + $0x48] sm:$0xf] %v989
    %1032 = vst [vmem:[%s3 + $0x4c] sm:$0xf] %v990
    %1033 = vst [vmem:[%s3 + $0x50] sm:$0xf] %v991
  $region21: #{critic_forward.5} parent=0 // pred_fallthru
    _
  // Predicated region
  $region22: #{critic_forward.5} parent=0 // pred_check
    _
  $region23: #{critic_forward.5} parent=0 // pred_check_branch
    %1035 = sbr.rel (0) target = $region25
  $region24: #{critic_forward.5} parent=0 // pred_region
    _
  $region25: #{critic_forward.5} parent=0 // pred_fallthru
    _
  // Predicated region
  $region26: #{critic_forward.5} parent=0 // pred_check
    _
  $region27: #{critic_forward.5} parent=0 // pred_check_branch
    %1037 = sbr.rel (0) target = $region29
  $region28: #{critic_forward.5} parent=0 // pred_region
    _
  $region29: #{critic_forward.5} parent=0 // pred_fallthru
    _

// kernel: critic_forward.6
$region0: #{critic_forward.6}
  #allocation0 [shape = 'u32[]', space=smem, size = 0x4, offset = 0x4, fixed_abs, tag = 'smem constant byte address 0x4 - core index']
  #allocation1 [shape = 'u32[144,128]{1,0:T(1,128)}', space=vmem, size = 0x12000, scoped, tag = 'internal scratch']
  #allocation2 [shape = 'f32[104,128]{1,0:T(8,128)}', space=vmem, size = 0xd000, scoped, tag = 'scratch operand']
  %s0 = inlined_call_operand.vmem [shape: bf16[104,640], index: 0, kind: input, shape index: {}]
  %s1 = inlined_call_operand.vmem [shape: bf16[640,128], index: 1, kind: input, shape index: {}]
  %s2 = inlined_call_operand.vmem [shape: f32[1,128], index: 2, kind: input, shape index: {}]
  %s3 = inlined_call_operand.vmem [shape: bf16[104,128], index: 3, kind: output, shape index: {}]
  %s4 = sld [smem:[#allocation0]]
  $region30: #{critic_forward.6} parent=0
    _
  %s6 = ssub.s32 1, %s4
  %s7 = scalar_select 0, %s6, %s4
  // Predicated region
  $region2: #{critic_forward.6} parent=0 // pred_check
    _
  $region3: #{critic_forward.6} parent=0 // pred_check_branch
    %9 = sbr.rel (0) target = $region5
  $region4: #{critic_forward.6} parent=0 // pred_region
    _
  $region5: #{critic_forward.6} parent=0 // pred_fallthru
    _
  // Predicated region
  $region6: #{critic_forward.6} parent=0 // pred_check
    _
  $region7: #{critic_forward.6} parent=0 // pred_check_branch
    %11 = sbr.rel (0) target = $region9
  $region8: #{critic_forward.6} parent=0 // pred_region
    _
  $region9: #{critic_forward.6} parent=0 // pred_fallthru
    _
  // Predicated region
  $region10: #{critic_forward.6} parent=0 // pred_check
    _
  $region11: #{critic_forward.6} parent=0 // pred_check_branch
    %13 = sbr.rel (0) target = $region13
  $region12: #{critic_forward.6} parent=0 // pred_region
    _
  $region13: #{critic_forward.6} parent=0 // pred_fallthru
    _
  %p15 = scmp.eq.s32.totalorder 0, 0
  // Predicated region
  $region14: #{critic_forward.6} parent=0 // pred_check
    %p16 = pneg %p15
  $region15: #{critic_forward.6} parent=0 // pred_check_branch
    %18 = sbr.rel (%p16) target = $region17
  $region16: #{critic_forward.6} parent=0 // pred_region
    %19 = vst [vmem:[#allocation2] sm:$0xff] 0.0
    %20 = vst [vmem:[#allocation2 + $0x8] sm:$0xff] 0.0
    %21 = vst [vmem:[#allocation2 + $0x10] sm:$0xff] 0.0
    %22 = vst [vmem:[#allocation2 + $0x18] sm:$0xff] 0.0
    %23 = vst [vmem:[#allocation2 + $0x20] sm:$0xff] 0.0
    %24 = vst [vmem:[#allocation2 + $0x28] sm:$0xff] 0.0
    %25 = vst [vmem:[#allocation2 + $0x30] sm:$0xff] 0.0
    %26 = vst [vmem:[#allocation2 + $0x38] sm:$0xff] 0.0
    %27 = vst [vmem:[#allocation2 + $0x40] sm:$0xff] 0.0
    %28 = vst [vmem:[#allocation2 + $0x48] sm:$0xff] 0.0
    %29 = vst [vmem:[#allocation2 + $0x50] sm:$0xff] 0.0
    %30 = vst [vmem:[#allocation2 + $0x58] sm:$0xff] 0.0
    %31 = vst [vmem:[#allocation2 + $0x60] sm:$0xff] 0.0
  $region17: #{critic_forward.6} parent=0 // pred_fallthru
    _
  %v32 = vld [vmem:[#allocation2] sm:$0xff]
  %v33 = vld [vmem:[#allocation2 + $0x8] sm:$0xff]
  %v34 = vld [vmem:[#allocation2 + $0x10] sm:$0xff]
  %v35 = vld [vmem:[#allocation2 + $0x18] sm:$0xff]
  %v36 = vld [vmem:[#allocation2 + $0x20] sm:$0xff]
  %v37 = vld [vmem:[#allocation2 + $0x28] sm:$0xff]
  %v38 = vld [vmem:[#allocation2 + $0x30] sm:$0xff]
  %v39 = vld [vmem:[#allocation2 + $0x38] sm:$0xff]
  %v40 = vld [vmem:[#allocation2 + $0x40] sm:$0xff]
  %v41 = vld [vmem:[#allocation2 + $0x48] sm:$0xff]
  %v42 = vld [vmem:[#allocation2 + $0x50] sm:$0xff]
  %v43 = vld [vmem:[#allocation2 + $0x58] sm:$0xff]
  %v44 = vld [vmem:[#allocation2 + $0x60] sm:$0xff]
  %v45 = vld [vmem:[%s0] sm:$0xff]
  %v46 = vld [vmem:[%s0 + $0x8] sm:$0xff]
  %v47 = vld [vmem:[%s0 + $0x10] sm:$0xf]
  %v48 = vld [vmem:[%s0 + $0x14] sm:$0xff]
  %v49 = vld [vmem:[%s0 + $0x1c] sm:$0xff]
  %v50 = vld [vmem:[%s0 + $0x24] sm:$0xf]
  %v51 = vld [vmem:[%s0 + $0x28] sm:$0xff]
  %v52 = vld [vmem:[%s0 + $0x30] sm:$0xff]
  %v53 = vld [vmem:[%s0 + $0x38] sm:$0xf]
  %v54 = vld [vmem:[%s0 + $0x3c] sm:$0xff]
  %v55 = vld [vmem:[%s0 + $0x44] sm:$0xff]
  %v56 = vld [vmem:[%s0 + $0x4c] sm:$0xf]
  %v57 = vld [vmem:[%s0 + $0x50] sm:$0xff]
  %v58 = vld [vmem:[%s0 + $0x58] sm:$0xff]
  %v59 = vld [vmem:[%s0 + $0x60] sm:$0xf]
  %v60 = vld [vmem:[%s0 + $0x64] sm:$0xff]
  %v61 = vld [vmem:[%s0 + $0x6c] sm:$0xff]
  %v62 = vld [vmem:[%s0 + $0x74] sm:$0xf]
  %v63 = vld [vmem:[%s0 + $0x78] sm:$0xff]
  %v64 = vld [vmem:[%s0 + $0x80] sm:$0xff]
  %v65 = vld [vmem:[%s0 + $0x88] sm:$0xf]
  %v66 = vld [vmem:[%s0 + $0x8c] sm:$0xff]
  %v67 = vld [vmem:[%s0 + $0x94] sm:$0xff]
  %v68 = vld [vmem:[%s0 + $0x9c] sm:$0xf]
  %v69 = vld [vmem:[%s0 + $0xa0] sm:$0xff]
  %v70 = vld [vmem:[%s0 + $0xa8] sm:$0xff]
  %v71 = vld [vmem:[%s0 + $0xb0] sm:$0xf]
  %v72 = vld [vmem:[%s0 + $0xb4] sm:$0xff]
  %v73 = vld [vmem:[%s0 + $0xbc] sm:$0xff]
  %v74 = vld [vmem:[%s0 + $0xc4] sm:$0xf]
  %v75 = vld [vmem:[%s0 + $0xc8] sm:$0xff]
  %v76 = vld [vmem:[%s0 + $0xd0] sm:$0xff]
  %v77 = vld [vmem:[%s0 + $0xd8] sm:$0xf]
  %v78 = vld [vmem:[%s0 + $0xdc] sm:$0xff]
  %v79 = vld [vmem:[%s0 + $0xe4] sm:$0xff]
  %v80 = vld [vmem:[%s0 + $0xec] sm:$0xf]
  %v81 = vld [vmem:[%s0 + $0xf0] sm:$0xff]
  %v82 = vld [vmem:[%s0 + $0xf8] sm:$0xff]
  %v83 = vld [vmem:[%s0 + $0x100] sm:$0xf]
  %v84 = vld [vmem:[%s1] sm:$0xf]
  %v85 = vld [vmem:[%s1 + $0x4] sm:$0xf]
  %v86 = vld [vmem:[%s1 + $0x8] sm:$0xf]
  %v87 = vld [vmem:[%s1 + $0xc] sm:$0xf]
  %v88 = vld [vmem:[%s1 + $0x10] sm:$0xf]
  %v89 = vld [vmem:[%s1 + $0x14] sm:$0xf]
  %v90 = vld [vmem:[%s1 + $0x18] sm:$0xf]
  %v91 = vld [vmem:[%s1 + $0x1c] sm:$0xf]
  %v92 = vld [vmem:[%s1 + $0x20] sm:$0xf]
  %v93 = vld [vmem:[%s1 + $0x24] sm:$0xf]
  %v94 = vld [vmem:[%s1 + $0x28] sm:$0xf]
  %v95 = vld [vmem:[%s1 + $0x2c] sm:$0xf]
  %v96 = vld [vmem:[%s1 + $0x30] sm:$0xf]
  %v97 = vld [vmem:[%s1 + $0x34] sm:$0xf]
  %v98 = vld [vmem:[%s1 + $0x38] sm:$0xf]
  %v99 = vld [vmem:[%s1 + $0x3c] sm:$0xf]
  %v100 = vld [vmem:[%s1 + $0x40] sm:$0xf]
  %v101 = vld [vmem:[%s1 + $0x44] sm:$0xf]
  %v102 = vld [vmem:[%s1 + $0x48] sm:$0xf]
  %v103 = vld [vmem:[%s1 + $0x4c] sm:$0xf]
  %v104 = vld [vmem:[%s1 + $0x50] sm:$0xf]
  %v105 = vld [vmem:[%s1 + $0x54] sm:$0xf]
  %v106 = vld [vmem:[%s1 + $0x58] sm:$0xf]
  %v107 = vld [vmem:[%s1 + $0x5c] sm:$0xf]
  %v108 = vld [vmem:[%s1 + $0x60] sm:$0xf]
  %v109 = vld [vmem:[%s1 + $0x64] sm:$0xf]
  %v110 = vld [vmem:[%s1 + $0x68] sm:$0xf]
  %v111 = vld [vmem:[%s1 + $0x6c] sm:$0xf]
  %v112 = vld [vmem:[%s1 + $0x70] sm:$0xf]
  %v113 = vld [vmem:[%s1 + $0x74] sm:$0xf]
  %v114 = vld [vmem:[%s1 + $0x78] sm:$0xf]
  %v115 = vld [vmem:[%s1 + $0x7c] sm:$0xf]
  %v116 = vld [vmem:[%s1 + $0x80] sm:$0xf]
  %v117 = vld [vmem:[%s1 + $0x84] sm:$0xf]
  %v118 = vld [vmem:[%s1 + $0x88] sm:$0xf]
  %v119 = vld [vmem:[%s1 + $0x8c] sm:$0xf]
  %v120 = vld [vmem:[%s1 + $0x90] sm:$0xf]
  %v121 = vld [vmem:[%s1 + $0x94] sm:$0xf]
  %v122 = vld [vmem:[%s1 + $0x98] sm:$0xf]
  %v123 = vld [vmem:[%s1 + $0x9c] sm:$0xf]
  %v124 = vld [vmem:[%s1 + $0xa0] sm:$0xf]
  %v125 = vld [vmem:[%s1 + $0xa4] sm:$0xf]
  %v126 = vld [vmem:[%s1 + $0xa8] sm:$0xf]
  %v127 = vld [vmem:[%s1 + $0xac] sm:$0xf]
  %v128 = vld [vmem:[%s1 + $0xb0] sm:$0xf]
  %v129 = vld [vmem:[%s1 + $0xb4] sm:$0xf]
  %v130 = vld [vmem:[%s1 + $0xb8] sm:$0xf]
  %v131 = vld [vmem:[%s1 + $0xbc] sm:$0xf]
  %v132 = vld [vmem:[%s1 + $0xc0] sm:$0xf]
  %v133 = vld [vmem:[%s1 + $0xc4] sm:$0xf]
  %v134 = vld [vmem:[%s1 + $0xc8] sm:$0xf]
  %v135 = vld [vmem:[%s1 + $0xcc] sm:$0xf]
  %v136 = vld [vmem:[%s1 + $0xd0] sm:$0xf]
  %v137 = vld [vmem:[%s1 + $0xd4] sm:$0xf]
  %v138 = vld [vmem:[%s1 + $0xd8] sm:$0xf]
  %v139 = vld [vmem:[%s1 + $0xdc] sm:$0xf]
  %v140 = vld [vmem:[%s1 + $0xe0] sm:$0xf]
  %v141 = vld [vmem:[%s1 + $0xe4] sm:$0xf]
  %v142 = vld [vmem:[%s1 + $0xe8] sm:$0xf]
  %v143 = vld [vmem:[%s1 + $0xec] sm:$0xf]
  %v144 = vld [vmem:[%s1 + $0xf0] sm:$0xf]
  %v145 = vld [vmem:[%s1 + $0xf4] sm:$0xf]
  %v146 = vld [vmem:[%s1 + $0xf8] sm:$0xf]
  %v147 = vld [vmem:[%s1 + $0xfc] sm:$0xf]
  %v148 = vld [vmem:[%s1 + $0x100] sm:$0xf]
  %v149 = vld [vmem:[%s1 + $0x104] sm:$0xf]
  %v150 = vld [vmem:[%s1 + $0x108] sm:$0xf]
  %v151 = vld [vmem:[%s1 + $0x10c] sm:$0xf]
  %v152 = vld [vmem:[%s1 + $0x110] sm:$0xf]
  %v153 = vld [vmem:[%s1 + $0x114] sm:$0xf]
  %v154 = vld [vmem:[%s1 + $0x118] sm:$0xf]
  %v155 = vld [vmem:[%s1 + $0x11c] sm:$0xf]
  %v156 = vld [vmem:[%s1 + $0x120] sm:$0xf]
  %v157 = vld [vmem:[%s1 + $0x124] sm:$0xf]
  %v158 = vld [vmem:[%s1 + $0x128] sm:$0xf]
  %v159 = vld [vmem:[%s1 + $0x12c] sm:$0xf]
  %v160 = vld [vmem:[%s1 + $0x130] sm:$0xf]
  %v161 = vld [vmem:[%s1 + $0x134] sm:$0xf]
  %v162 = vld [vmem:[%s1 + $0x138] sm:$0xf]
  %v163 = vld [vmem:[%s1 + $0x13c] sm:$0xf]
  %v203 = vunpack.c.l.b16 %v45
  %v204 = vunpack.c.h.b16 %v45
  %v205 = vunpack.c.l.b16 %v46
  %v206 = vunpack.c.h.b16 %v46
  %v207 = vunpack.c.l.b16 %v47
  %v208 = vunpack.c.l.b16 %v48
  %v209 = vunpack.c.h.b16 %v48
  %v210 = vunpack.c.l.b16 %v49
  %v211 = vunpack.c.h.b16 %v49
  %v212 = vunpack.c.l.b16 %v50
  %v213 = vunpack.c.l.b16 %v51
  %v214 = vunpack.c.h.b16 %v51
  %v215 = vunpack.c.l.b16 %v52
  %v216 = vunpack.c.h.b16 %v52
  %v217 = vunpack.c.l.b16 %v53
  %v218 = vunpack.c.l.b16 %v54
  %v219 = vunpack.c.h.b16 %v54
  %v220 = vunpack.c.l.b16 %v55
  %v221 = vunpack.c.h.b16 %v55
  %v222 = vunpack.c.l.b16 %v56
  %v223 = vunpack.c.l.b16 %v57
  %v224 = vunpack.c.h.b16 %v57
  %v225 = vunpack.c.l.b16 %v58
  %v226 = vunpack.c.h.b16 %v58
  %v227 = vunpack.c.l.b16 %v59
  %v228 = vunpack.c.l.b16 %v60
  %v229 = vunpack.c.h.b16 %v60
  %v230 = vunpack.c.l.b16 %v61
  %v231 = vunpack.c.h.b16 %v61
  %v232 = vunpack.c.l.b16 %v62
  %v233 = vunpack.c.l.b16 %v63
  %v234 = vunpack.c.h.b16 %v63
  %v235 = vunpack.c.l.b16 %v64
  %v236 = vunpack.c.h.b16 %v64
  %v237 = vunpack.c.l.b16 %v65
  %v238 = vunpack.c.l.b16 %v66
  %v239 = vunpack.c.h.b16 %v66
  %v240 = vunpack.c.l.b16 %v67
  %v241 = vunpack.c.h.b16 %v67
  %v242 = vunpack.c.l.b16 %v68
  %v243 = vunpack.c.l.b16 %v69
  %v244 = vunpack.c.h.b16 %v69
  %v245 = vunpack.c.l.b16 %v70
  %v246 = vunpack.c.h.b16 %v70
  %v247 = vunpack.c.l.b16 %v71
  %v248 = vunpack.c.l.b16 %v72
  %v249 = vunpack.c.h.b16 %v72
  %v250 = vunpack.c.l.b16 %v73
  %v251 = vunpack.c.h.b16 %v73
  %v252 = vunpack.c.l.b16 %v74
  %v253 = vunpack.c.l.b16 %v75
  %v254 = vunpack.c.h.b16 %v75
  %v255 = vunpack.c.l.b16 %v76
  %v256 = vunpack.c.h.b16 %v76
  %v257 = vunpack.c.l.b16 %v77
  %v258 = vunpack.c.l.b16 %v78
  %v259 = vunpack.c.h.b16 %v78
  %v260 = vunpack.c.l.b16 %v79
  %v261 = vunpack.c.h.b16 %v79
  %v262 = vunpack.c.l.b16 %v80
  %v263 = vunpack.c.l.b16 %v81
  %v264 = vunpack.c.h.b16 %v81
  %v265 = vunpack.c.l.b16 %v82
  %v266 = vunpack.c.h.b16 %v82
  %v267 = vunpack.c.l.b16 %v83
  %v268 = vpack.c.b16 %v208, %v203
  %v269 = vpack.c.b16 %v209, %v204
  %v270 = vpack.c.b16 %v210, %v205
  %v271 = vpack.c.b16 %v211, %v206
  %v272 = vpack.c.b16 %v212, %v207
  %v273 = vpack.c.b16 %v218, %v213
  %v274 = vpack.c.b16 %v219, %v214
  %v275 = vpack.c.b16 %v220, %v215
  %v276 = vpack.c.b16 %v221, %v216
  %v277 = vpack.c.b16 %v222, %v217
  %v278 = vpack.c.b16 %v228, %v223
  %v279 = vpack.c.b16 %v229, %v224
  %v280 = vpack.c.b16 %v230, %v225
  %v281 = vpack.c.b16 %v231, %v226
  %v282 = vpack.c.b16 %v232, %v227
  %v283 = vpack.c.b16 %v238, %v233
  %v284 = vpack.c.b16 %v239, %v234
  %v285 = vpack.c.b16 %v240, %v235
  %v286 = vpack.c.b16 %v241, %v236
  %v287 = vpack.c.b16 %v242, %v237
  %v288 = vpack.c.b16 %v248, %v243
  %v289 = vpack.c.b16 %v249, %v244
  %v290 = vpack.c.b16 %v250, %v245
  %v291 = vpack.c.b16 %v251, %v246
  %v292 = vpack.c.b16 %v252, %v247
  %v293 = vpack.c.b16 %v258, %v253
  %v294 = vpack.c.b16 %v259, %v254
  %v295 = vpack.c.b16 %v260, %v255
  %v296 = vpack.c.b16 %v261, %v256
  %v297 = vpack.c.b16 %v262, %v257
  %v298 = vpack.c.b16 %v263, %v263
  %v299 = vpack.c.b16 %v264, %v264
  %v300 = vpack.c.b16 %v265, %v265
  %v301 = vpack.c.b16 %v266, %v266
  %v302 = vpack.c.b16 %v267, %v267
  %v418 = vunpack.c.l.b16 %v84
  %v419 = vunpack.c.l.b16 %v85
  %v420 = vunpack.c.l.b16 %v86
  %v421 = vunpack.c.l.b16 %v87
  %v422 = vunpack.c.l.b16 %v88
  %v423 = vunpack.c.l.b16 %v89
  %v424 = vunpack.c.l.b16 %v90
  %v425 = vunpack.c.l.b16 %v91
  %v426 = vunpack.c.l.b16 %v92
  %v427 = vunpack.c.l.b16 %v93
  %v428 = vunpack.c.l.b16 %v94
  %v429 = vunpack.c.l.b16 %v95
  %v430 = vunpack.c.l.b16 %v96
  %v431 = vunpack.c.l.b16 %v97
  %v432 = vunpack.c.l.b16 %v98
  %v433 = vunpack.c.l.b16 %v99
  %v434 = vunpack.c.l.b16 %v100
  %v435 = vunpack.c.l.b16 %v101
  %v436 = vunpack.c.l.b16 %v102
  %v437 = vunpack.c.l.b16 %v103
  %v438 = vunpack.c.l.b16 %v104
  %v439 = vunpack.c.l.b16 %v105
  %v440 = vunpack.c.l.b16 %v106
  %v441 = vunpack.c.l.b16 %v107
  %v442 = vunpack.c.l.b16 %v108
  %v443 = vunpack.c.l.b16 %v109
  %v444 = vunpack.c.l.b16 %v110
  %v445 = vunpack.c.l.b16 %v111
  %v446 = vunpack.c.l.b16 %v112
  %v447 = vunpack.c.l.b16 %v113
  %v448 = vunpack.c.l.b16 %v114
  %v449 = vunpack.c.l.b16 %v115
  %v450 = vunpack.c.l.b16 %v116
  %v451 = vunpack.c.l.b16 %v117
  %v452 = vunpack.c.l.b16 %v118
  %v453 = vunpack.c.l.b16 %v119
  %v454 = vunpack.c.l.b16 %v120
  %v455 = vunpack.c.l.b16 %v121
  %v456 = vunpack.c.l.b16 %v122
  %v457 = vunpack.c.l.b16 %v123
  %v458 = vunpack.c.l.b16 %v124
  %v459 = vunpack.c.l.b16 %v125
  %v460 = vunpack.c.l.b16 %v126
  %v461 = vunpack.c.l.b16 %v127
  %v462 = vunpack.c.l.b16 %v128
  %v463 = vunpack.c.l.b16 %v129
  %v464 = vunpack.c.l.b16 %v130
  %v465 = vunpack.c.l.b16 %v131
  %v466 = vunpack.c.l.b16 %v132
  %v467 = vunpack.c.l.b16 %v133
  %v468 = vunpack.c.l.b16 %v134
  %v469 = vunpack.c.l.b16 %v135
  %v470 = vunpack.c.l.b16 %v136
  %v471 = vunpack.c.l.b16 %v137
  %v472 = vunpack.c.l.b16 %v138
  %v473 = vunpack.c.l.b16 %v139
  %v474 = vunpack.c.l.b16 %v140
  %v475 = vunpack.c.l.b16 %v141
  %v476 = vunpack.c.l.b16 %v142
  %v477 = vunpack.c.l.b16 %v143
  %v478 = vunpack.c.l.b16 %v144
  %v479 = vunpack.c.l.b16 %v145
  %v480 = vunpack.c.l.b16 %v146
  %v481 = vunpack.c.l.b16 %v147
  %v482 = vunpack.c.l.b16 %v148
  %v483 = vunpack.c.l.b16 %v149
  %v484 = vunpack.c.l.b16 %v150
  %v485 = vunpack.c.l.b16 %v151
  %v486 = vunpack.c.l.b16 %v152
  %v487 = vunpack.c.l.b16 %v153
  %v488 = vunpack.c.l.b16 %v154
  %v489 = vunpack.c.l.b16 %v155
  %v490 = vunpack.c.l.b16 %v156
  %v491 = vunpack.c.l.b16 %v157
  %v492 = vunpack.c.l.b16 %v158
  %v493 = vunpack.c.l.b16 %v159
  %v494 = vunpack.c.l.b16 %v160
  %v495 = vunpack.c.l.b16 %v161
  %v496 = vunpack.c.l.b16 %v162
  %v497 = vunpack.c.l.b16 %v163
  %v498 = vpack.c.b16 %v419, %v418
  %v499 = vpack.c.b16 %v421, %v420
  %v500 = vpack.c.b16 %v423, %v422
  %v501 = vpack.c.b16 %v425, %v424
  %v502 = vpack.c.b16 %v427, %v426
  %v503 = vpack.c.b16 %v429, %v428
  %v504 = vpack.c.b16 %v431, %v430
  %v505 = vpack.c.b16 %v433, %v432
  %v506 = vpack.c.b16 %v435, %v434
  %v507 = vpack.c.b16 %v437, %v436
  %v508 = vpack.c.b16 %v439, %v438
  %v509 = vpack.c.b16 %v441, %v440
  %v510 = vpack.c.b16 %v443, %v442
  %v511 = vpack.c.b16 %v445, %v444
  %v512 = vpack.c.b16 %v447, %v446
  %v513 = vpack.c.b16 %v449, %v448
  %v514 = vpack.c.b16 %v451, %v450
  %v515 = vpack.c.b16 %v453, %v452
  %v516 = vpack.c.b16 %v455, %v454
  %v517 = vpack.c.b16 %v457, %v456
  %v518 = vpack.c.b16 %v459, %v458
  %v519 = vpack.c.b16 %v461, %v460
  %v520 = vpack.c.b16 %v463, %v462
  %v521 = vpack.c.b16 %v465, %v464
  %v522 = vpack.c.b16 %v467, %v466
  %v523 = vpack.c.b16 %v469, %v468
  %v524 = vpack.c.b16 %v471, %v470
  %v525 = vpack.c.b16 %v473, %v472
  %v526 = vpack.c.b16 %v475, %v474
  %v527 = vpack.c.b16 %v477, %v476
  %v528 = vpack.c.b16 %v479, %v478
  %v529 = vpack.c.b16 %v481, %v480
  %v530 = vpack.c.b16 %v483, %v482
  %v531 = vpack.c.b16 %v485, %v484
  %v532 = vpack.c.b16 %v487, %v486
  %v533 = vpack.c.b16 %v489, %v488
  %v534 = vpack.c.b16 %v491, %v490
  %v535 = vpack.c.b16 %v493, %v492
  %v536 = vpack.c.b16 %v495, %v494
  %v537 = vpack.c.b16 %v497, %v496
  %578 = vmatprep.subr.bf16.mxu0 0
  %579 = vmatpush1.bf16.msra.mxu0 %v505
  %580 = vmatprep.subr.bf16.mxu0 0
  %581 = vmatpush1.bf16.msra.mxu0 %v504
  %582 = vmatprep.subr.bf16.mxu0 0
  %583 = vmatpush1.bf16.msra.mxu0 %v503
  %584 = vmatprep.subr.bf16.mxu0 0
  %585 = vmatpush1.bf16.msra.mxu0 %v502
  %586 = vmatprep.subr.bf16.mxu0 0
  %587 = vmatpush1.bf16.msra.mxu0 %v501
  %588 = vmatprep.subr.bf16.mxu0 0
  %589 = vmatpush1.bf16.msra.mxu0 %v500
  %590 = vmatprep.subr.bf16.mxu0 0
  %591 = vmatpush1.bf16.msra.mxu0 %v499
  %592 = vmatprep.subr.bf16.mxu0 0
  %593 = vmatpush1.bf16.msra.mxu0 %v498
  %594 = vmatprep.subr.bf16.mxu0 0
  %595 = vmatpush2.bf16.msra.mxu0 %v513
  %596 = vmatprep.subr.bf16.mxu0 0
  %597 = vmatpush2.bf16.msra.mxu0 %v512
  %598 = vmatprep.subr.bf16.mxu0 0
  %599 = vmatpush2.bf16.msra.mxu0 %v511
  %600 = vmatprep.subr.bf16.mxu0 0
  %601 = vmatpush2.bf16.msra.mxu0 %v510
  %602 = vmatprep.subr.bf16.mxu0 0
  %603 = vmatpush2.bf16.msra.mxu0 %v509
  %604 = vmatprep.subr.bf16.mxu0 0
  %605 = vmatpush2.bf16.msra.mxu0 %v508
  %606 = vmatprep.subr.bf16.mxu0 0
  %607 = vmatpush2.bf16.msra.mxu0 %v507
  %608 = vmatprep.subr.bf16.mxu0 0
  %609 = vmatpush2.bf16.msra.mxu0 %v506
  %610 = vmatprep.mubr.bf16.mxu0 %v269
  %611 = vmatmul.mubr.bf16.gmra.mxu0 %v268
  %v612 = vpop.f32.mrf.mxu0
  %v613 = vadd.f32 0.0, %v612
  %v614 = vpop.f32.mrf.mxu0
  %v615 = vpop.f32.mrf.mxu0
  %v616 = vadd.f32 0.0, %v615
  %v617 = vpop.f32.mrf.mxu0
  %618 = vmatprep.mubr.bf16.mxu0 %v274
  %619 = vmatmul.mubr.bf16.gmra.mxu0 %v273
  %v620 = vpop.f32.mrf.mxu0
  %v621 = vadd.f32 0.0, %v620
  %v622 = vpop.f32.mrf.mxu0
  %v623 = vpop.f32.mrf.mxu0
  %v624 = vadd.f32 0.0, %v623
  %v625 = vpop.f32.mrf.mxu0
  %626 = vmatprep.mubr.bf16.mxu0 %v279
  %627 = vmatmul.mubr.bf16.gmra.mxu0 %v278
  %v628 = vpop.f32.mrf.mxu0
  %v629 = vadd.f32 0.0, %v628
  %v630 = vpop.f32.mrf.mxu0
  %v631 = vpop.f32.mrf.mxu0
  %v632 = vadd.f32 0.0, %v631
  %v633 = vpop.f32.mrf.mxu0
  %634 = vmatprep.mubr.bf16.mxu0 %v284
  %635 = vmatmul.mubr.bf16.gmra.mxu0 %v283
  %v636 = vpop.f32.mrf.mxu0
  %v637 = vadd.f32 0.0, %v636
  %v638 = vpop.f32.mrf.mxu0
  %v639 = vpop.f32.mrf.mxu0
  %v640 = vadd.f32 0.0, %v639
  %v641 = vpop.f32.mrf.mxu0
  %642 = vmatprep.mubr.bf16.mxu0 %v289
  %643 = vmatmul.mubr.bf16.gmra.mxu0 %v288
  %v644 = vpop.f32.mrf.mxu0
  %v645 = vadd.f32 0.0, %v644
  %v646 = vpop.f32.mrf.mxu0
  %v647 = vpop.f32.mrf.mxu0
  %v648 = vadd.f32 0.0, %v647
  %v649 = vpop.f32.mrf.mxu0
  %650 = vmatprep.mubr.bf16.mxu0 %v294
  %651 = vmatmul.mubr.bf16.gmra.mxu0 %v293
  %v652 = vpop.f32.mrf.mxu0
  %v653 = vadd.f32 0.0, %v652
  %v654 = vpop.f32.mrf.mxu0
  %v655 = vpop.f32.mrf.mxu0
  %v656 = vadd.f32 0.0, %v655
  %v657 = vpop.f32.mrf.mxu0
  %658 = vmatprep.mubr.bf16.mxu0 %v299
  %659 = vmatmul.mubr.bf16.gmra.mxu0 %v298
  %v660 = vpop.f32.mrf.mxu0
  %v661 = vadd.f32 0.0, %v660
  %v662 = vpop.f32.mrf.mxu0
  %v663 = vpop.f32.mrf.mxu0
  %v664 = vpop.f32.mrf.mxu0
  %665 = vdwg.mxu0
  %666 = vmatprep.subr.bf16.mxu0 0
  %667 = vmatpush1.bf16.msra.mxu0 %v521
  %668 = vmatprep.subr.bf16.mxu0 0
  %669 = vmatpush1.bf16.msra.mxu0 %v520
  %670 = vmatprep.subr.bf16.mxu0 0
  %671 = vmatpush1.bf16.msra.mxu0 %v519
  %672 = vmatprep.subr.bf16.mxu0 0
  %673 = vmatpush1.bf16.msra.mxu0 %v518
  %674 = vmatprep.subr.bf16.mxu0 0
  %675 = vmatpush1.bf16.msra.mxu0 %v517
  %676 = vmatprep.subr.bf16.mxu0 0
  %677 = vmatpush1.bf16.msra.mxu0 %v516
  %678 = vmatprep.subr.bf16.mxu0 0
  %679 = vmatpush1.bf16.msra.mxu0 %v515
  %680 = vmatprep.subr.bf16.mxu0 0
  %681 = vmatpush1.bf16.msra.mxu0 %v514
  %682 = vmatprep.subr.bf16.mxu0 0
  %683 = vmatpush2.bf16.msra.mxu0 %v529
  %684 = vmatprep.subr.bf16.mxu0 0
  %685 = vmatpush2.bf16.msra.mxu0 %v528
  %686 = vmatprep.subr.bf16.mxu0 0
  %687 = vmatpush2.bf16.msra.mxu0 %v527
  %688 = vmatprep.subr.bf16.mxu0 0
  %689 = vmatpush2.bf16.msra.mxu0 %v526
  %690 = vmatprep.subr.bf16.mxu0 0
  %691 = vmatpush2.bf16.msra.mxu0 %v525
  %692 = vmatprep.subr.bf16.mxu0 0
  %693 = vmatpush2.bf16.msra.mxu0 %v524
  %694 = vmatprep.subr.bf16.mxu0 0
  %695 = vmatpush2.bf16.msra.mxu0 %v523
  %696 = vmatprep.subr.bf16.mxu0 0
  %697 = vmatpush2.bf16.msra.mxu0 %v522
  %698 = vmatprep.mubr.bf16.mxu0 %v271
  %699 = vmatmul.mubr.bf16.gmra.mxu0 %v270
  %v700 = vpop.f32.mrf.mxu0
  %v701 = vadd.f32 %v613, %v700
  %v702 = vpop.f32.mrf.mxu0
  %v703 = vpop.f32.mrf.mxu0
  %v704 = vadd.f32 %v616, %v703
  %v705 = vpop.f32.mrf.mxu0
  %706 = vmatprep.mubr.bf16.mxu0 %v276
  %707 = vmatmul.mubr.bf16.gmra.mxu0 %v275
  %v708 = vpop.f32.mrf.mxu0
  %v709 = vadd.f32 %v621, %v708
  %v710 = vpop.f32.mrf.mxu0
  %v711 = vpop.f32.mrf.mxu0
  %v712 = vadd.f32 %v624, %v711
  %v713 = vpop.f32.mrf.mxu0
  %714 = vmatprep.mubr.bf16.mxu0 %v281
  %715 = vmatmul.mubr.bf16.gmra.mxu0 %v280
  %v716 = vpop.f32.mrf.mxu0
  %v717 = vadd.f32 %v629, %v716
  %v718 = vpop.f32.mrf.mxu0
  %v719 = vpop.f32.mrf.mxu0
  %v720 = vadd.f32 %v632, %v719
  %v721 = vpop.f32.mrf.mxu0
  %722 = vmatprep.mubr.bf16.mxu0 %v286
  %723 = vmatmul.mubr.bf16.gmra.mxu0 %v285
  %v724 = vpop.f32.mrf.mxu0
  %v725 = vadd.f32 %v637, %v724
  %v726 = vpop.f32.mrf.mxu0
  %v727 = vpop.f32.mrf.mxu0
  %v728 = vadd.f32 %v640, %v727
  %v729 = vpop.f32.mrf.mxu0
  %730 = vmatprep.mubr.bf16.mxu0 %v291
  %731 = vmatmul.mubr.bf16.gmra.mxu0 %v290
  %v732 = vpop.f32.mrf.mxu0
  %v733 = vadd.f32 %v645, %v732
  %v734 = vpop.f32.mrf.mxu0
  %v735 = vpop.f32.mrf.mxu0
  %v736 = vadd.f32 %v648, %v735
  %v737 = vpop.f32.mrf.mxu0
  %738 = vmatprep.mubr.bf16.mxu0 %v296
  %739 = vmatmul.mubr.bf16.gmra.mxu0 %v295
  %v740 = vpop.f32.mrf.mxu0
  %v741 = vadd.f32 %v653, %v740
  %v742 = vpop.f32.mrf.mxu0
  %v743 = vpop.f32.mrf.mxu0
  %v744 = vadd.f32 %v656, %v743
  %v745 = vpop.f32.mrf.mxu0
  %746 = vmatprep.mubr.bf16.mxu0 %v301
  %747 = vmatmul.mubr.bf16.gmra.mxu0 %v300
  %v748 = vpop.f32.mrf.mxu0
  %v749 = vadd.f32 %v661, %v748
  %v750 = vpop.f32.mrf.mxu0
  %v751 = vpop.f32.mrf.mxu0
  %v752 = vpop.f32.mrf.mxu0
  %753 = vdwg.mxu0
  %754 = vmatprep.subr.bf16.mxu0 0
  %755 = vmatpush1.bf16.msra.mxu0 %v537
  %756 = vmatprep.subr.bf16.mxu0 0
  %757 = vmatpush1.bf16.msra.mxu0 %v536
  %758 = vmatprep.subr.bf16.mxu0 0
  %759 = vmatpush1.bf16.msra.mxu0 %v535
  %760 = vmatprep.subr.bf16.mxu0 0
  %761 = vmatpush1.bf16.msra.mxu0 %v534
  %762 = vmatprep.subr.bf16.mxu0 0
  %763 = vmatpush1.bf16.msra.mxu0 %v533
  %764 = vmatprep.subr.bf16.mxu0 0
  %765 = vmatpush1.bf16.msra.mxu0 %v532
  %766 = vmatprep.subr.bf16.mxu0 0
  %767 = vmatpush1.bf16.msra.mxu0 %v531
  %768 = vmatprep.subr.bf16.mxu0 0
  %769 = vmatpush1.bf16.msra.mxu0 %v530
  %770 = vmatprep.subr.bf16.mxu0 0
  %771 = vmatpush2.bf16.msra.mxu0 0
  %772 = vmatprep.subr.bf16.mxu0 0
  %773 = vmatpush2.bf16.msra.mxu0 0
  %774 = vmatprep.subr.bf16.mxu0 0
  %775 = vmatpush2.bf16.msra.mxu0 0
  %776 = vmatprep.subr.bf16.mxu0 0
  %777 = vmatpush2.bf16.msra.mxu0 0
  %778 = vmatprep.subr.bf16.mxu0 0
  %779 = vmatpush2.bf16.msra.mxu0 0
  %780 = vmatprep.subr.bf16.mxu0 0
  %781 = vmatpush2.bf16.msra.mxu0 0
  %782 = vmatprep.subr.bf16.mxu0 0
  %783 = vmatpush2.bf16.msra.mxu0 0
  %784 = vmatprep.subr.bf16.mxu0 0
  %785 = vmatpush2.bf16.msra.mxu0 0
  %786 = vmatprep.mubr.bf16.mxu0 0
  %787 = vmatmul.mubr.bf16.gmra.mxu0 %v272
  %v788 = vpop.f32.mrf.mxu0
  %v789 = vadd.f32 %v701, %v788
  %v790 = vpop.f32.mrf.mxu0
  %v791 = vpop.f32.mrf.mxu0
  %v792 = vadd.f32 %v704, %v791
  %v793 = vpop.f32.mrf.mxu0
  %794 = vmatprep.mubr.bf16.mxu0 0
  %795 = vmatmul.mubr.bf16.gmra.mxu0 %v277
  %v796 = vpop.f32.mrf.mxu0
  %v797 = vadd.f32 %v709, %v796
  %v798 = vpop.f32.mrf.mxu0
  %v799 = vpop.f32.mrf.mxu0
  %v800 = vadd.f32 %v712, %v799
  %v801 = vpop.f32.mrf.mxu0
  %802 = vmatprep.mubr.bf16.mxu0 0
  %803 = vmatmul.mubr.bf16.gmra.mxu0 %v282
  %v804 = vpop.f32.mrf.mxu0
  %v805 = vadd.f32 %v717, %v804
  %v806 = vpop.f32.mrf.mxu0
  %v807 = vpop.f32.mrf.mxu0
  %v808 = vadd.f32 %v720, %v807
  %v809 = vpop.f32.mrf.mxu0
  %810 = vmatprep.mubr.bf16.mxu0 0
  %811 = vmatmul.mubr.bf16.gmra.mxu0 %v287
  %v812 = vpop.f32.mrf.mxu0
  %v813 = vadd.f32 %v725, %v812
  %v814 = vpop.f32.mrf.mxu0
  %v815 = vpop.f32.mrf.mxu0
  %v816 = vadd.f32 %v728, %v815
  %v817 = vpop.f32.mrf.mxu0
  %818 = vmatprep.mubr.bf16.mxu0 0
  %819 = vmatmul.mubr.bf16.gmra.mxu0 %v292
  %v820 = vpop.f32.mrf.mxu0
  %v821 = vadd.f32 %v733, %v820
  %v822 = vpop.f32.mrf.mxu0
  %v823 = vpop.f32.mrf.mxu0
  %v824 = vadd.f32 %v736, %v823
  %v825 = vpop.f32.mrf.mxu0
  %826 = vmatprep.mubr.bf16.mxu0 0
  %827 = vmatmul.mubr.bf16.gmra.mxu0 %v297
  %v828 = vpop.f32.mrf.mxu0
  %v829 = vadd.f32 %v741, %v828
  %v830 = vpop.f32.mrf.mxu0
  %v831 = vpop.f32.mrf.mxu0
  %v832 = vadd.f32 %v744, %v831
  %v833 = vpop.f32.mrf.mxu0
  %834 = vmatprep.mubr.bf16.mxu0 0
  %835 = vmatmul.mubr.bf16.gmra.mxu0 %v302
  %v836 = vpop.f32.mrf.mxu0
  %v837 = vadd.f32 %v749, %v836
  %v838 = vpop.f32.mrf.mxu0
  %v839 = vpop.f32.mrf.mxu0
  %v840 = vpop.f32.mrf.mxu0
  %841 = vdwg.mxu0
  %v842 = vadd.f32 %v32, %v789
  %v843 = vadd.f32 %v33, %v792
  %v844 = vadd.f32 %v34, %v797
  %v845 = vadd.f32 %v35, %v800
  %v846 = vadd.f32 %v36, %v805
  %v847 = vadd.f32 %v37, %v808
  %v848 = vadd.f32 %v38, %v813
  %v849 = vadd.f32 %v39, %v816
  %v850 = vadd.f32 %v40, %v821
  %v851 = vadd.f32 %v41, %v824
  %v852 = vadd.f32 %v42, %v829
  %v853 = vadd.f32 %v43, %v832
  %v854 = vadd.f32 %v44, %v837
  %855 = vst [vmem:[#allocation2] sm:$0xff] %v842
  %856 = vst [vmem:[#allocation2 + $0x8] sm:$0xff] %v843
  %857 = vst [vmem:[#allocation2 + $0x10] sm:$0xff] %v844
  %858 = vst [vmem:[#allocation2 + $0x18] sm:$0xff] %v845
  %859 = vst [vmem:[#allocation2 + $0x20] sm:$0xff] %v846
  %860 = vst [vmem:[#allocation2 + $0x28] sm:$0xff] %v847
  %861 = vst [vmem:[#allocation2 + $0x30] sm:$0xff] %v848
  %862 = vst [vmem:[#allocation2 + $0x38] sm:$0xff] %v849
  %863 = vst [vmem:[#allocation2 + $0x40] sm:$0xff] %v850
  %864 = vst [vmem:[#allocation2 + $0x48] sm:$0xff] %v851
  %865 = vst [vmem:[#allocation2 + $0x50] sm:$0xff] %v852
  %866 = vst [vmem:[#allocation2 + $0x58] sm:$0xff] %v853
  %867 = vst [vmem:[#allocation2 + $0x60] sm:$0xff] %v854
  // Predicated region
  $region18: #{critic_forward.6} parent=0 // pred_check
    %p868 = pneg %p15
  $region19: #{critic_forward.6} parent=0 // pred_check_branch
    %870 = sbr.rel (%p868) target = $region21
  $region20: #{critic_forward.6} parent=0 // pred_region
    %v871 = vld [vmem:[#allocation2] sm:$0xff]
    %v872 = vld [vmem:[#allocation2 + $0x8] sm:$0xff]
    %v873 = vld [vmem:[#allocation2 + $0x10] sm:$0xff]
    %v874 = vld [vmem:[#allocation2 + $0x18] sm:$0xff]
    %v875 = vld [vmem:[#allocation2 + $0x20] sm:$0xff]
    %v876 = vld [vmem:[#allocation2 + $0x28] sm:$0xff]
    %v877 = vld [vmem:[#allocation2 + $0x30] sm:$0xff]
    %v878 = vld [vmem:[#allocation2 + $0x38] sm:$0xff]
    %v879 = vld [vmem:[#allocation2 + $0x40] sm:$0xff]
    %v880 = vld [vmem:[#allocation2 + $0x48] sm:$0xff]
    %v881 = vld [vmem:[#allocation2 + $0x50] sm:$0xff]
    %v882 = vld [vmem:[#allocation2 + $0x58] sm:$0xff]
    %v883 = vld [vmem:[#allocation2 + $0x60] sm:$0xff]
    %v884 = vld [vmem:[%s2] sm:$0x1]
    %v886 = vlaneseq
    %v887 = vshrl.u32 %v886, 7
    %v888 = vsub.s32 0, %v887
    %v889 = vrot.slane %v884, %v888
    %v891 = vadd.f32 %v871, %v889
    %v892 = vadd.f32 %v872, %v889
    %v893 = vadd.f32 %v873, %v889
    %v894 = vadd.f32 %v874, %v889
    %v895 = vadd.f32 %v875, %v889
    %v896 = vadd.f32 %v876, %v889
    %v897 = vadd.f32 %v877, %v889
    %v898 = vadd.f32 %v878, %v889
    %v899 = vadd.f32 %v879, %v889
    %v900 = vadd.f32 %v880, %v889
    %v901 = vadd.f32 %v881, %v889
    %v902 = vadd.f32 %v882, %v889
    %v903 = vadd.f32 %v883, %v889
    %v904 = vmax.f32 %v891, 0.0
    %v905 = vmax.f32 %v892, 0.0
    %v906 = vmax.f32 %v893, 0.0
    %v907 = vmax.f32 %v894, 0.0
    %v908 = vmax.f32 %v895, 0.0
    %v909 = vmax.f32 %v896, 0.0
    %v910 = vmax.f32 %v897, 0.0
    %v911 = vmax.f32 %v898, 0.0
    %v912 = vmax.f32 %v899, 0.0
    %v913 = vmax.f32 %v900, 0.0
    %v914 = vmax.f32 %v901, 0.0
    %v915 = vmax.f32 %v902, 0.0
    %v916 = vmax.f32 %v903, 0.0
    %v917 = vpack.c.bf16 %v905, %v904
    %v918 = vpack.c.bf16 %v907, %v906
    %v919 = vpack.c.bf16 %v909, %v908
    %v920 = vpack.c.bf16 %v911, %v910
    %v921 = vpack.c.bf16 %v913, %v912
    %v922 = vpack.c.bf16 %v915, %v914
    %v923 = vpack.c.bf16 %v916, %v916
    %v931 = vunpack.c.l.b16 %v917
    %v932 = vunpack.c.h.b16 %v917
    %v933 = vunpack.c.l.b16 %v918
    %v934 = vunpack.c.h.b16 %v918
    %v935 = vunpack.c.l.b16 %v919
    %v936 = vunpack.c.h.b16 %v919
    %v937 = vunpack.c.l.b16 %v920
    %v938 = vunpack.c.h.b16 %v920
    %v939 = vunpack.c.l.b16 %v921
    %v940 = vunpack.c.h.b16 %v921
    %v941 = vunpack.c.l.b16 %v922
    %v942 = vunpack.c.h.b16 %v922
    %v943 = vunpack.c.l.b16 %v923
    %v944 = vpack.c.b16 %v931, %v931
    %v945 = vpack.c.b16 %v932, %v932
    %v946 = vpack.c.b16 %v933, %v933
    %v947 = vpack.c.b16 %v934, %v934
    %v948 = vpack.c.b16 %v935, %v935
    %v949 = vpack.c.b16 %v936, %v936
    %v950 = vpack.c.b16 %v937, %v937
    %v951 = vpack.c.b16 %v938, %v938
    %v952 = vpack.c.b16 %v939, %v939
    %v953 = vpack.c.b16 %v940, %v940
    %v954 = vpack.c.b16 %v941, %v941
    %v955 = vpack.c.b16 %v942, %v942
    %v956 = vpack.c.b16 %v943, %v943
    %970 = vst [vmem:[%s3] sm:$0xf] %v944
    %971 = vst [vmem:[%s3 + $0x4] sm:$0xf] %v945
    %972 = vst [vmem:[%s3 + $0x8] sm:$0xf] %v946
    %973 = vst [vmem:[%s3 + $0xc] sm:$0xf] %v947
    %974 = vst [vmem:[%s3 + $0x10] sm:$0xf] %v948
    %975 = vst [vmem:[%s3 + $0x14] sm:$0xf] %v949
    %976 = vst [vmem:[%s3 + $0x18] sm:$0xf] %v950
    %977 = vst [vmem:[%s3 + $0x1c] sm:$0xf] %v951
    %978 = vst [vmem:[%s3 + $0x20] sm:$0xf] %v952
    %979 = vst [vmem:[%s3 + $0x24] sm:$0xf] %v953
    %980 = vst [vmem:[%s3 + $0x28] sm:$0xf] %v954
    %981 = vst [vmem:[%s3 + $0x2c] sm:$0xf] %v955
    %982 = vst [vmem:[%s3 + $0x30] sm:$0xf] %v956
  $region21: #{critic_forward.6} parent=0 // pred_fallthru
    _
  // Predicated region
  $region22: #{critic_forward.6} parent=0 // pred_check
    _
  $region23: #{critic_forward.6} parent=0 // pred_check_branch
    %984 = sbr.rel (0) target = $region25
  $region24: #{critic_forward.6} parent=0 // pred_region
    _
  $region25: #{critic_forward.6} parent=0 // pred_fallthru
    _
  // Predicated region
  $region26: #{critic_forward.6} parent=0 // pred_check
    _
  $region27: #{critic_forward.6} parent=0 // pred_check_branch
    %986 = sbr.rel (0) target = $region29
  $region28: #{critic_forward.6} parent=0 // pred_region
    _
  $region29: #{critic_forward.6} parent=0 // pred_fallthru
    _

// kernel: critic_forward.7
$region0: #{critic_forward.7}
  #allocation0 [shape = 'u32[]', space=smem, size = 0x4, offset = 0x4, fixed_abs, tag = 'smem constant byte address 0x4 - core index']
  #allocation1 [shape = 'u32[144,128]{1,0:T(1,128)}', space=vmem, size = 0x12000, scoped, tag = 'internal scratch']
  #allocation2 [shape = 'f32[8,512]{1,0:T(8,128)}', space=vmem, size = 0x4000, scoped, tag = 'scratch operand']
  %s0 = inlined_call_operand.vmem [shape: bf16[8,3200], index: 0, kind: input, shape index: {}]
  %s1 = inlined_call_operand.vmem [shape: bf16[3200,512], index: 1, kind: input, shape index: {}]
  %s2 = inlined_call_operand.vmem [shape: f32[1,512], index: 2, kind: input, shape index: {}]
  %s3 = inlined_call_operand.vmem [shape: bf16[512,128], index: 3, kind: input, shape index: {}]
  %s4 = inlined_call_operand.vmem [shape: f32[1,128], index: 4, kind: input, shape index: {}]
  %s5 = inlined_call_operand.vmem [shape: f32[8,128], index: 5, kind: output, shape index: {}]
  %s6 = sld [smem:[#allocation0]]
  $region61: #{critic_forward.7} parent=0
    _
  %s8 = ssub.s32 1, %s6
  %s9 = scalar_select 0, %s8, %s6
  loop: start=0, step=1, limit=7
  $region2: #{critic_forward.7} parent=0 // loop_pre_header
    _
  $region3: #{critic_forward.7} parent=0 // loop_header
    %s11 = sphi 0, %s15
    %p12 = scmp.ge.s32.totalorder %s11, 7
    %s18 = sphi 0, %s30
    %s19 = sphi 0, %s26
    %s20 = sphi 0, %s18
    %s21 = sphi 0, %s19
    %s22 = sphi 0, %s20
    %s23 = sphi 0, %s21
    %s35 = sphi 0, %s37
    %s38 = sphi 0, %s35
    %s39 = sphi 0, %s38
    %s55 = sphi 0, %s39
    %s61 = sphi 0, %s63
    %s64 = sphi 0, %s61
    %s65 = sphi 0, %s64
    %s81 = sphi 0, %s65
    %s85 = sphi 0, %s85
    %s87 = sphi 0, %s85
    %s88 = sphi 0, %s87
    %s102 = sphi 0, %s88
    %s106 = sphi 0, %s106
    %s108 = sphi 0, %s106
    %s109 = sphi 0, %s108
    %s123 = sphi 0, %s109
    %s127 = sphi 0, %s127
    %s129 = sphi 0, %s127
    %s130 = sphi 0, %s129
    %s144 = sphi 0, %s130
    %s150 = sphi 0, %s152
    %s153 = sphi 0, %s150
    %s154 = sphi 0, %s153
    %s170 = sphi 0, %s154
  $region4: #{critic_forward.7} parent=0 // loop_header_branch
    %14 = sbr.rel (%p12) target = $region8
  $region5: #{critic_forward.7} parent=0 // loop_body
    %s16 = ssub.s32 %s11, 1
    %s17 = ssub.s32 %s11, 2
    %s24 = sadd.s32 1, %s19
    %p25 = scmp.ge.s32.totalorder %s24, 5
    %s26 = scalar_select %p25, 0, %s24
    %s27 = sadd.s32 1, %s18
    %s28 = scalar_select %p25, %s27, %s18
    %p29 = scmp.ge.s32.totalorder %s28, 1
    %s30 = scalar_select %p29, 0, %s28
    %s31 = ssub.s32 %s18, %s30
    %s32 = ssub.s32 %s19, %s26
    %s33 = sor.u32 %s31, %s32
    %p34 = scmp.eq.s32.totalorder %s33, 0
    %s36 = sadd.s32 %s35, 1
    %s37 = scalar_select %p34, %s35, %s36
    %p40 = pneg %p34
    %p41 = scmp.eq.s32.totalorder %s11, 4
    %p42 = por %p40, %p41
    %p43 = scmp.ne.s32.totalorder %s35, %s38
    %p44 = scmp.eq.s32.totalorder %s11, 0
    %p45 = por %p43, %p44
    %p46 = scmp.ne.s32.totalorder %s35, %s38
    %p47 = scmp.eq.s32.totalorder %s16, 4
    %p48 = por %p46, %p47
    %p49 = scmp.ne.s32.totalorder %s38, %s39
    %p50 = scmp.eq.s32.totalorder %s16, 0
    %p51 = por %p49, %p50
    %p52 = scmp.ne.s32.totalorder %s38, %s39
    %p53 = scmp.eq.s32.totalorder %s17, 4
    %p54 = por %p52, %p53
    %p56 = scmp.ne.s32.totalorder %s39, %s55
    %p57 = scmp.eq.s32.totalorder %s17, 0
    %p58 = por %p56, %p57
    %s59 = ssub.s32 %s19, %s26
    %p60 = scmp.eq.s32.totalorder %s59, 0
    %s62 = sadd.s32 %s61, 1
    %s63 = scalar_select %p60, %s61, %s62
    %p66 = pneg %p60
    %p67 = scmp.eq.s32.totalorder %s11, 4
    %p68 = por %p66, %p67
    %p69 = scmp.ne.s32.totalorder %s61, %s64
    %p70 = scmp.eq.s32.totalorder %s11, 0
    %p71 = por %p69, %p70
    %p72 = scmp.ne.s32.totalorder %s61, %s64
    %p73 = scmp.eq.s32.totalorder %s16, 4
    %p74 = por %p72, %p73
    %p75 = scmp.ne.s32.totalorder %s64, %s65
    %p76 = scmp.eq.s32.totalorder %s16, 0
    %p77 = por %p75, %p76
    %p78 = scmp.ne.s32.totalorder %s64, %s65
    %p79 = scmp.eq.s32.totalorder %s17, 4
    %p80 = por %p78, %p79
    %p82 = scmp.ne.s32.totalorder %s65, %s81
    %p83 = scmp.eq.s32.totalorder %s17, 0
    %p84 = por %p82, %p83
    %s86 = sadd.s32 %s85, 1
    %p89 = scmp.eq.s32.totalorder %s11, 4
    %p90 = scmp.ne.s32.totalorder %s85, %s87
    %p91 = scmp.eq.s32.totalorder %s11, 0
    %p92 = por %p90, %p91
    %p93 = scmp.ne.s32.totalorder %s85, %s87
    %p94 = scmp.eq.s32.totalorder %s16, 4
    %p95 = por %p93, %p94
    %p96 = scmp.ne.s32.totalorder %s87, %s88
    %p97 = scmp.eq.s32.totalorder %s16, 0
    %p98 = por %p96, %p97
    %p99 = scmp.ne.s32.totalorder %s87, %s88
    %p100 = scmp.eq.s32.totalorder %s17, 4
    %p101 = por %p99, %p100
    %p103 = scmp.ne.s32.totalorder %s88, %s102
    %p104 = scmp.eq.s32.totalorder %s17, 0
    %p105 = por %p103, %p104
    %s107 = sadd.s32 %s106, 1
    %p110 = scmp.eq.s32.totalorder %s11, 4
    %p111 = scmp.ne.s32.totalorder %s106, %s108
    %p112 = scmp.eq.s32.totalorder %s11, 0
    %p113 = por %p111, %p112
    %p114 = scmp.ne.s32.totalorder %s106, %s108
    %p115 = scmp.eq.s32.totalorder %s16, 4
    %p116 = por %p114, %p115
    %p117 = scmp.ne.s32.totalorder %s108, %s109
    %p118 = scmp.eq.s32.totalorder %s16, 0
    %p119 = por %p117, %p118
    %p120 = scmp.ne.s32.totalorder %s108, %s109
    %p121 = scmp.eq.s32.totalorder %s17, 4
    %p122 = por %p120, %p121
    %p124 = scmp.ne.s32.totalorder %s109, %s123
    %p125 = scmp.eq.s32.totalorder %s17, 0
    %p126 = por %p124, %p125
    %s128 = sadd.s32 %s127, 1
    %p131 = scmp.eq.s32.totalorder %s11, 4
    %p132 = scmp.ne.s32.totalorder %s127, %s129
    %p133 = scmp.eq.s32.totalorder %s11, 0
    %p134 = por %p132, %p133
    %p135 = scmp.ne.s32.totalorder %s127, %s129
    %p136 = scmp.eq.s32.totalorder %s16, 4
    %p137 = por %p135, %p136
    %p138 = scmp.ne.s32.totalorder %s129, %s130
    %p139 = scmp.eq.s32.totalorder %s16, 0
    %p140 = por %p138, %p139
    %p141 = scmp.ne.s32.totalorder %s129, %s130
    %p142 = scmp.eq.s32.totalorder %s17, 4
    %p143 = por %p141, %p142
    %p145 = scmp.ne.s32.totalorder %s130, %s144
    %p146 = scmp.eq.s32.totalorder %s17, 0
    %p147 = por %p145, %p146
    %s148 = ssub.s32 %s18, %s30
    %p149 = scmp.eq.s32.totalorder %s148, 0
    %s151 = sadd.s32 %s150, 1
    %s152 = scalar_select %p149, %s150, %s151
    %p155 = pneg %p149
    %p156 = scmp.eq.s32.totalorder %s11, 4
    %p157 = por %p155, %p156
    %p158 = scmp.ne.s32.totalorder %s150, %s153
    %p159 = scmp.eq.s32.totalorder %s11, 0
    %p160 = por %p158, %p159
    %p161 = scmp.ne.s32.totalorder %s150, %s153
    %p162 = scmp.eq.s32.totalorder %s16, 4
    %p163 = por %p161, %p162
    %p164 = scmp.ne.s32.totalorder %s153, %s154
    %p165 = scmp.eq.s32.totalorder %s16, 0
    %p166 = por %p164, %p165
    %p167 = scmp.ne.s32.totalorder %s153, %s154
    %p168 = scmp.eq.s32.totalorder %s17, 4
    %p169 = por %p167, %p168
    %p171 = scmp.ne.s32.totalorder %s154, %s170
    %p172 = scmp.eq.s32.totalorder %s17, 0
    %p173 = por %p171, %p172
    %p174 = scmp.le.s32.totalorder 1, %s11
    %p175 = scmp.lt.s32.totalorder %s11, 6
    %p176 = pnand %p174, %p175
    %p177 = pneg %p176
    // Predicated region
    $region9: #{critic_forward.7} parent=5 // pred_check
      _
    $region10: #{critic_forward.7} parent=5 // pred_check_branch
      %179 = sbr.rel (%p176) target = $region12
    $region11: #{critic_forward.7} parent=5 // pred_region
      %s180 = ssub.s32 %s11, 1
      // Predicated region
      $region13: #{critic_forward.7} parent=11 // pred_check
        %p181 = pneg %p98
      $region14: #{critic_forward.7} parent=11 // pred_check_branch
        %183 = sbr.rel (%p181) target = $region16
      $region15: #{critic_forward.7} parent=11 // pred_region
        _
      $region16: #{critic_forward.7} parent=11 // pred_fallthru
        _
      // Predicated region
      $region17: #{critic_forward.7} parent=11 // pred_check
        %p184 = pneg %p119
      $region18: #{critic_forward.7} parent=11 // pred_check_branch
        %186 = sbr.rel (%p184) target = $region20
      $region19: #{critic_forward.7} parent=11 // pred_region
        _
      $region20: #{critic_forward.7} parent=11 // pred_fallthru
        _
      // Predicated region
      $region21: #{critic_forward.7} parent=11 // pred_check
        %p187 = pneg %p140
      $region22: #{critic_forward.7} parent=11 // pred_check_branch
        %189 = sbr.rel (%p187) target = $region24
      $region23: #{critic_forward.7} parent=11 // pred_region
        _
      $region24: #{critic_forward.7} parent=11 // pred_fallthru
        _
    $region12: #{critic_forward.7} parent=5 // pred_fallthru
      _
    %p190 = scmp.lt.s32.totalorder %s11, 5
    // Predicated region
    $region25: #{critic_forward.7} parent=5 // pred_check
      %p191 = pneg %p190
    $region26: #{critic_forward.7} parent=5 // pred_check_branch
      %193 = sbr.rel (%p191) target = $region28
    $region27: #{critic_forward.7} parent=5 // pred_region
      // Predicated region
      $region29: #{critic_forward.7} parent=27 // pred_check
        %p194 = pneg %p45
      $region30: #{critic_forward.7} parent=27 // pred_check_branch
        %196 = sbr.rel (%p194) target = $region32
      $region31: #{critic_forward.7} parent=27 // pred_region
        %s197 = smul.u32 5, %s19
        %p198 = scmp.lt.s32.totalorder %s18, 0
        %s199 = scalar_select %p198, %s18, 0
        %p200 = scmp.lt.s32.totalorder %s197, 24
        %s201 = scalar_select %p200, %s197, 24
        %s202 = smul.addr %s199, 25
        %s203 = sadd.s32 %s201, %s202
        %s204 = smul.addr %s203, 4
        %s205 = scalar_lea.vmem %s0, %s204
        %s206 = smul.u32 5, %s19
      $region32: #{critic_forward.7} parent=27 // pred_fallthru
        _
      // Predicated region
      $region33: #{critic_forward.7} parent=27 // pred_check
        %p207 = pneg %p71
      $region34: #{critic_forward.7} parent=27 // pred_check_branch
        %209 = sbr.rel (%p207) target = $region36
      $region35: #{critic_forward.7} parent=27 // pred_region
        %s210 = smul.u32 80, %s19
        %p211 = scmp.lt.s32.totalorder %s210, 399
        %s212 = scalar_select %p211, %s210, 399
        %s213 = smul.addr %s212, 4
        %s214 = smul.addr %s213, 4
        %s215 = scalar_lea.vmem %s1, %s214
        %s216 = smul.u32 80, %s19
      $region36: #{critic_forward.7} parent=27 // pred_fallthru
        _
    $region28: #{critic_forward.7} parent=5 // pred_fallthru
      _
    %p217 = scmp.le.s32.totalorder 1, %s11
    %p218 = scmp.lt.s32.totalorder %s11, 6
    %p219 = pnand %p217, %p218
    %p220 = pneg %p219
    // Predicated region
    $region37: #{critic_forward.7} parent=5 // pred_check
      _
    $region38: #{critic_forward.7} parent=5 // pred_check_branch
      %222 = sbr.rel (%p219) target = $region40
    $region39: #{critic_forward.7} parent=5 // pred_region
      %s223 = ssub.s32 %s11, 1
      %s224 = smul.u32 5, %s21
      %p225 = scmp.lt.s32.totalorder %s20, 0
      %s226 = scalar_select %p225, %s20, 0
      %p227 = scmp.lt.s32.totalorder %s224, 24
      %s228 = scalar_select %p227, %s224, 24
      %s229 = smul.addr %s226, 25
      %s230 = sadd.s32 %s228, %s229
      %s231 = smul.addr %s230, 4
      %s232 = scalar_lea.vmem %s0, %s231
      %p233 = pneg %p51
      %p234 = pneg %p48
      %s235 = smul.u32 80, %s21
      %p236 = scmp.lt.s32.totalorder %s235, 399
      %s237 = scalar_select %p236, %s235, 399
      %s238 = smul.addr %s237, 4
      %s239 = smul.addr %s238, 4
      %s240 = scalar_lea.vmem %s1, %s239
      %p241 = pneg %p77
      %p242 = pneg %p74
      %p243 = pneg %p98
      %p244 = pneg %p95
      %p245 = pneg %p119
      %p246 = pneg %p116
      %p247 = pneg %p140
      %p248 = pneg %p137
      %p249 = pneg %p166
      %p250 = pneg %p163
      %p251 = scmp.lt.s32.totalorder %s20, 0
      %s252 = scalar_select %p251, %s20, 0
      %s253 = smul.addr %s252, 8
      %s254 = scalar_lea.vmem %s5, %s253
      %s255 = smul.u32 5, %s21
      %p256 = scmp.lt.s32.totalorder %s20, 0
      %s257 = scalar_select %p256, %s20, 0
      %p258 = scmp.lt.s32.totalorder %s255, 24
      %s259 = scalar_select %p258, %s255, 24
      %s260 = smul.addr %s257, 25
      %s261 = sadd.s32 %s259, %s260
      %s262 = smul.addr %s261, 4
      %s263 = scalar_lea.vmem %s0, %s262
      %s264 = smul.u32 5, %s21
      %s265 = smul.u32 80, %s21
      %p266 = scmp.lt.s32.totalorder %s265, 399
      %s267 = scalar_select %p266, %s265, 399
      %s268 = smul.addr %s267, 4
      %s269 = smul.addr %s268, 4
      %s270 = scalar_lea.vmem %s1, %s269
      %s271 = smul.u32 80, %s21
      %p272 = scmp.lt.s32.totalorder %s20, 0
      %s273 = scalar_select %p272, %s20, 0
      %s274 = smul.addr %s273, 8
      %s275 = scalar_lea.vmem %s5, %s274
      %p277 = scmp.eq.s32.totalorder %s21, 0
      // Predicated region
      $region41: #{critic_forward.7} parent=39 // pred_check
        %p278 = pneg %p277
      $region42: #{critic_forward.7} parent=39 // pred_check_branch
        %280 = sbr.rel (%p278) target = $region44
      $region43: #{critic_forward.7} parent=39 // pred_region
        %281 = vst [vmem:[#allocation2] sm:$0xff] 0.0
        %282 = vst [vmem:[#allocation2 + $0x8] sm:$0xff] 0.0
        %283 = vst [vmem:[#allocation2 + $0x10] sm:$0xff] 0.0
        %284 = vst [vmem:[#allocation2 + $0x18] sm:$0xff] 0.0
      $region44: #{critic_forward.7} parent=39 // pred_fallthru
        _
      %v285 = vld [vmem:[#allocation2] sm:$0xff]
      %v286 = vld [vmem:[#allocation2 + $0x8] sm:$0xff]
      %v287 = vld [vmem:[#allocation2 + $0x10] sm:$0xff]
      %v288 = vld [vmem:[#allocation2 + $0x18] sm:$0xff]
      %v289 = vld [vmem:[%s263] sm:$0xff]
      %v290 = vld [vmem:[%s263 + $0x8] sm:$0xff]
      %v291 = vld [vmem:[%s263 + $0x10] sm:$0xf]
      %v292 = vld [vmem:[%s270] sm:$0xff]
      %v293 = vld [vmem:[%s270 + $0x8] sm:$0xff]
      %v294 = vld [vmem:[%s270 + $0x10] sm:$0xff]
      %v295 = vld [vmem:[%s270 + $0x18] sm:$0xff]
      %v296 = vld [vmem:[%s270 + $0x20] sm:$0xff]
      %v297 = vld [vmem:[%s270 + $0x28] sm:$0xff]
      %v298 = vld [vmem:[%s270 + $0x30] sm:$0xff]
      %v299 = vld [vmem:[%s270 + $0x38] sm:$0xff]
      %v300 = vld [vmem:[%s270 + $0x40] sm:$0xff]
      %v301 = vld [vmem:[%s270 + $0x48] sm:$0xff]
      %v302 = vld [vmem:[%s270 + $0x50] sm:$0xff]
      %v303 = vld [vmem:[%s270 + $0x58] sm:$0xff]
      %v304 = vld [vmem:[%s270 + $0x60] sm:$0xff]
      %v305 = vld [vmem:[%s270 + $0x68] sm:$0xff]
      %v306 = vld [vmem:[%s270 + $0x70] sm:$0xff]
      %v307 = vld [vmem:[%s270 + $0x78] sm:$0xff]
      %v308 = vld [vmem:[%s270 + $0x80] sm:$0xff]
      %v309 = vld [vmem:[%s270 + $0x88] sm:$0xff]
      %v310 = vld [vmem:[%s270 + $0x90] sm:$0xff]
      %v311 = vld [vmem:[%s270 + $0x98] sm:$0xff]
      %v312 = vld [vmem:[%s270 + $0xa0] sm:$0xff]
      %v313 = vld [vmem:[%s270 + $0xa8] sm:$0xff]
      %v314 = vld [vmem:[%s270 + $0xb0] sm:$0xff]
      %v315 = vld [vmem:[%s270 + $0xb8] sm:$0xff]
      %v316 = vld [vmem:[%s270 + $0xc0] sm:$0xff]
      %v317 = vld [vmem:[%s270 + $0xc8] sm:$0xff]
      %v318 = vld [vmem:[%s270 + $0xd0] sm:$0xff]
      %v319 = vld [vmem:[%s270 + $0xd8] sm:$0xff]
      %v320 = vld [vmem:[%s270 + $0xe0] sm:$0xff]
      %v321 = vld [vmem:[%s270 + $0xe8] sm:$0xff]
      %v322 = vld [vmem:[%s270 + $0xf0] sm:$0xff]
      %v323 = vld [vmem:[%s270 + $0xf8] sm:$0xff]
      %v324 = vld [vmem:[%s270 + $0x100] sm:$0xff]
      %v325 = vld [vmem:[%s270 + $0x108] sm:$0xff]
      %v326 = vld [vmem:[%s270 + $0x110] sm:$0xff]
      %v327 = vld [vmem:[%s270 + $0x118] sm:$0xff]
      %v328 = vld [vmem:[%s270 + $0x120] sm:$0xff]
      %v329 = vld [vmem:[%s270 + $0x128] sm:$0xff]
      %v330 = vld [vmem:[%s270 + $0x130] sm:$0xff]
      %v331 = vld [vmem:[%s270 + $0x138] sm:$0xff]
      %v332 = vld [vmem:[%s270 + $0x140] sm:$0xff]
      %v333 = vld [vmem:[%s270 + $0x148] sm:$0xff]
      %v334 = vld [vmem:[%s270 + $0x150] sm:$0xff]
      %v335 = vld [vmem:[%s270 + $0x158] sm:$0xff]
      %v336 = vld [vmem:[%s270 + $0x160] sm:$0xff]
      %v337 = vld [vmem:[%s270 + $0x168] sm:$0xff]
      %v338 = vld [vmem:[%s270 + $0x170] sm:$0xff]
      %v339 = vld [vmem:[%s270 + $0x178] sm:$0xff]
      %v340 = vld [vmem:[%s270 + $0x180] sm:$0xff]
      %v341 = vld [vmem:[%s270 + $0x188] sm:$0xff]
      %v342 = vld [vmem:[%s270 + $0x190] sm:$0xff]
      %v343 = vld [vmem:[%s270 + $0x198] sm:$0xff]
      %v344 = vld [vmem:[%s270 + $0x1a0] sm:$0xff]
      %v345 = vld [vmem:[%s270 + $0x1a8] sm:$0xff]
      %v346 = vld [vmem:[%s270 + $0x1b0] sm:$0xff]
      %v347 = vld [vmem:[%s270 + $0x1b8] sm:$0xff]
      %v348 = vld [vmem:[%s270 + $0x1c0] sm:$0xff]
      %v349 = vld [vmem:[%s270 + $0x1c8] sm:$0xff]
      %v350 = vld [vmem:[%s270 + $0x1d0] sm:$0xff]
      %v351 = vld [vmem:[%s270 + $0x1d8] sm:$0xff]
      %v352 = vld [vmem:[%s270 + $0x1e0] sm:$0xff]
      %v353 = vld [vmem:[%s270 + $0x1e8] sm:$0xff]
      %v354 = vld [vmem:[%s270 + $0x1f0] sm:$0xff]
      %v355 = vld [vmem:[%s270 + $0x1f8] sm:$0xff]
      %v356 = vld [vmem:[%s270 + $0x200] sm:$0xff]
      %v357 = vld [vmem:[%s270 + $0x208] sm:$0xff]
      %v358 = vld [vmem:[%s270 + $0x210] sm:$0xff]
      %v359 = vld [vmem:[%s270 + $0x218] sm:$0xff]
      %v360 = vld [vmem:[%s270 + $0x220] sm:$0xff]
      %v361 = vld [vmem:[%s270 + $0x228] sm:$0xff]
      %v362 = vld [vmem:[%s270 + $0x230] sm:$0xff]
      %v363 = vld [vmem:[%s270 + $0x238] sm:$0xff]
      %v364 = vld [vmem:[%s270 + $0x240] sm:$0xff]
      %v365 = vld [vmem:[%s270 + $0x248] sm:$0xff]
      %v366 = vld [vmem:[%s270 + $0x250] sm:$0xff]
      %v367 = vld [vmem:[%s270 + $0x258] sm:$0xff]
      %v368 = vld [vmem:[%s270 + $0x260] sm:$0xff]
      %v369 = vld [vmem:[%s270 + $0x268] sm:$0xff]
      %v370 = vld [vmem:[%s270 + $0x270] sm:$0xff]
      %v371 = vld [vmem:[%s270 + $0x278] sm:$0xff]
      %v372 = vld [vmem:[%s270 + $0x280] sm:$0xff]
      %v373 = vld [vmem:[%s270 + $0x288] sm:$0xff]
      %v374 = vld [vmem:[%s270 + $0x290] sm:$0xff]
      %v375 = vld [vmem:[%s270 + $0x298] sm:$0xff]
      %v376 = vld [vmem:[%s270 + $0x2a0] sm:$0xff]
      %v377 = vld [vmem:[%s270 + $0x2a8] sm:$0xff]
      %v378 = vld [vmem:[%s270 + $0x2b0] sm:$0xff]
      %v379 = vld [vmem:[%s270 + $0x2b8] sm:$0xff]
      %v380 = vld [vmem:[%s270 + $0x2c0] sm:$0xff]
      %v381 = vld [vmem:[%s270 + $0x2c8] sm:$0xff]
      %v382 = vld [vmem:[%s270 + $0x2d0] sm:$0xff]
      %v383 = vld [vmem:[%s270 + $0x2d8] sm:$0xff]
      %v384 = vld [vmem:[%s270 + $0x2e0] sm:$0xff]
      %v385 = vld [vmem:[%s270 + $0x2e8] sm:$0xff]
      %v386 = vld [vmem:[%s270 + $0x2f0] sm:$0xff]
      %v387 = vld [vmem:[%s270 + $0x2f8] sm:$0xff]
      %v388 = vld [vmem:[%s270 + $0x300] sm:$0xff]
      %v389 = vld [vmem:[%s270 + $0x308] sm:$0xff]
      %v390 = vld [vmem:[%s270 + $0x310] sm:$0xff]
      %v391 = vld [vmem:[%s270 + $0x318] sm:$0xff]
      %v392 = vld [vmem:[%s270 + $0x320] sm:$0xff]
      %v393 = vld [vmem:[%s270 + $0x328] sm:$0xff]
      %v394 = vld [vmem:[%s270 + $0x330] sm:$0xff]
      %v395 = vld [vmem:[%s270 + $0x338] sm:$0xff]
      %v396 = vld [vmem:[%s270 + $0x340] sm:$0xff]
      %v397 = vld [vmem:[%s270 + $0x348] sm:$0xff]
      %v398 = vld [vmem:[%s270 + $0x350] sm:$0xff]
      %v399 = vld [vmem:[%s270 + $0x358] sm:$0xff]
      %v400 = vld [vmem:[%s270 + $0x360] sm:$0xff]
      %v401 = vld [vmem:[%s270 + $0x368] sm:$0xff]
      %v402 = vld [vmem:[%s270 + $0x370] sm:$0xff]
      %v403 = vld [vmem:[%s270 + $0x378] sm:$0xff]
      %v404 = vld [vmem:[%s270 + $0x380] sm:$0xff]
      %v405 = vld [vmem:[%s270 + $0x388] sm:$0xff]
      %v406 = vld [vmem:[%s270 + $0x390] sm:$0xff]
      %v407 = vld [vmem:[%s270 + $0x398] sm:$0xff]
      %v408 = vld [vmem:[%s270 + $0x3a0] sm:$0xff]
      %v409 = vld [vmem:[%s270 + $0x3a8] sm:$0xff]
      %v410 = vld [vmem:[%s270 + $0x3b0] sm:$0xff]
      %v411 = vld [vmem:[%s270 + $0x3b8] sm:$0xff]
      %v412 = vld [vmem:[%s270 + $0x3c0] sm:$0xff]
      %v413 = vld [vmem:[%s270 + $0x3c8] sm:$0xff]
      %v414 = vld [vmem:[%s270 + $0x3d0] sm:$0xff]
      %v415 = vld [vmem:[%s270 + $0x3d8] sm:$0xff]
      %v416 = vld [vmem:[%s270 + $0x3e0] sm:$0xff]
      %v417 = vld [vmem:[%s270 + $0x3e8] sm:$0xff]
      %v418 = vld [vmem:[%s270 + $0x3f0] sm:$0xff]
      %v419 = vld [vmem:[%s270 + $0x3f8] sm:$0xff]
      %v420 = vld [vmem:[%s270 + $0x400] sm:$0xff]
      %v421 = vld [vmem:[%s270 + $0x408] sm:$0xff]
      %v422 = vld [vmem:[%s270 + $0x410] sm:$0xff]
      %v423 = vld [vmem:[%s270 + $0x418] sm:$0xff]
      %v424 = vld [vmem:[%s270 + $0x420] sm:$0xff]
      %v425 = vld [vmem:[%s270 + $0x428] sm:$0xff]
      %v426 = vld [vmem:[%s270 + $0x430] sm:$0xff]
      %v427 = vld [vmem:[%s270 + $0x438] sm:$0xff]
      %v428 = vld [vmem:[%s270 + $0x440] sm:$0xff]
      %v429 = vld [vmem:[%s270 + $0x448] sm:$0xff]
      %v430 = vld [vmem:[%s270 + $0x450] sm:$0xff]
      %v431 = vld [vmem:[%s270 + $0x458] sm:$0xff]
      %v432 = vld [vmem:[%s270 + $0x460] sm:$0xff]
      %v433 = vld [vmem:[%s270 + $0x468] sm:$0xff]
      %v434 = vld [vmem:[%s270 + $0x470] sm:$0xff]
      %v435 = vld [vmem:[%s270 + $0x478] sm:$0xff]
      %v436 = vld [vmem:[%s270 + $0x480] sm:$0xff]
      %v437 = vld [vmem:[%s270 + $0x488] sm:$0xff]
      %v438 = vld [vmem:[%s270 + $0x490] sm:$0xff]
      %v439 = vld [vmem:[%s270 + $0x498] sm:$0xff]
      %v440 = vld [vmem:[%s270 + $0x4a0] sm:$0xff]
      %v441 = vld [vmem:[%s270 + $0x4a8] sm:$0xff]
      %v442 = vld [vmem:[%s270 + $0x4b0] sm:$0xff]
      %v443 = vld [vmem:[%s270 + $0x4b8] sm:$0xff]
      %v444 = vld [vmem:[%s270 + $0x4c0] sm:$0xff]
      %v445 = vld [vmem:[%s270 + $0x4c8] sm:$0xff]
      %v446 = vld [vmem:[%s270 + $0x4d0] sm:$0xff]
      %v447 = vld [vmem:[%s270 + $0x4d8] sm:$0xff]
      %v448 = vld [vmem:[%s270 + $0x4e0] sm:$0xff]
      %v449 = vld [vmem:[%s270 + $0x4e8] sm:$0xff]
      %v450 = vld [vmem:[%s270 + $0x4f0] sm:$0xff]
      %v451 = vld [vmem:[%s270 + $0x4f8] sm:$0xff]
      %v455 = vunpack.c.l.b16 %v289
      %v456 = vunpack.c.h.b16 %v289
      %v457 = vunpack.c.l.b16 %v290
      %v458 = vunpack.c.h.b16 %v290
      %v459 = vunpack.c.l.b16 %v291
      %v460 = vpack.c.b16 %v455, %v455
      %v461 = vpack.c.b16 %v456, %v456
      %v462 = vpack.c.b16 %v457, %v457
      %v463 = vpack.c.b16 %v458, %v458
      %v464 = vpack.c.b16 %v459, %v459
      %v630 = vunpack.c.l.b16 %v292
      %v631 = vunpack.c.h.b16 %v292
      %v632 = vunpack.c.l.b16 %v293
      %v633 = vunpack.c.h.b16 %v293
      %v634 = vunpack.c.l.b16 %v294
      %v635 = vunpack.c.h.b16 %v294
      %v636 = vunpack.c.l.b16 %v295
      %v637 = vunpack.c.h.b16 %v295
      %v638 = vunpack.c.l.b16 %v296
      %v639 = vunpack.c.h.b16 %v296
      %v640 = vunpack.c.l.b16 %v297
      %v641 = vunpack.c.h.b16 %v297
      %v642 = vunpack.c.l.b16 %v298
      %v643 = vunpack.c.h.b16 %v298
      %v644 = vunpack.c.l.b16 %v299
      %v645 = vunpack.c.h.b16 %v299
      %v646 = vunpack.c.l.b16 %v300
      %v647 = vunpack.c.h.b16 %v300
      %v648 = vunpack.c.l.b16 %v301
      %v649 = vunpack.c.h.b16 %v301
      %v650 = vunpack.c.l.b16 %v302
      %v651 = vunpack.c.h.b16 %v302
      %v652 = vunpack.c.l.b16 %v303
      %v653 = vunpack.c.h.b16 %v303
      %v654 = vunpack.c.l.b16 %v304
      %v655 = vunpack.c.h.b16 %v304
      %v656 = vunpack.c.l.b16 %v305
      %v657 = vunpack.c.h.b16 %v305
      %v658 = vunpack.c.l.b16 %v306
      %v659 = vunpack.c.h.b16 %v306
      %v660 = vunpack.c.l.b16 %v307
      %v661 = vunpack.c.h.b16 %v307
      %v662 = vunpack.c.l.b16 %v308
      %v663 = vunpack.c.h.b16 %v308
      %v664 = vunpack.c.l.b16 %v309
      %v665 = vunpack.c.h.b16 %v309
      %v666 = vunpack.c.l.b16 %v310
      %v667 = vunpack.c.h.b16 %v310
      %v668 = vunpack.c.l.b16 %v311
      %v669 = vunpack.c.h.b16 %v311
      %v670 = vunpack.c.l.b16 %v312
      %v671 = vunpack.c.h.b16 %v312
      %v672 = vunpack.c.l.b16 %v313
      %v673 = vunpack.c.h.b16 %v313
      %v674 = vunpack.c.l.b16 %v314
      %v675 = vunpack.c.h.b16 %v314
      %v676 = vunpack.c.l.b16 %v315
      %v677 = vunpack.c.h.b16 %v315
      %v678 = vunpack.c.l.b16 %v316
      %v679 = vunpack.c.h.b16 %v316
      %v680 = vunpack.c.l.b16 %v317
      %v681 = vunpack.c.h.b16 %v317
      %v682 = vunpack.c.l.b16 %v318
      %v683 = vunpack.c.h.b16 %v318
      %v684 = vunpack.c.l.b16 %v319
      %v685 = vunpack.c.h.b16 %v319
      %v686 = vunpack.c.l.b16 %v320
      %v687 = vunpack.c.h.b16 %v320
      %v688 = vunpack.c.l.b16 %v321
      %v689 = vunpack.c.h.b16 %v321
      %v690 = vunpack.c.l.b16 %v322
      %v691 = vunpack.c.h.b16 %v322
      %v692 = vunpack.c.l.b16 %v323
      %v693 = vunpack.c.h.b16 %v323
      %v694 = vunpack.c.l.b16 %v324
      %v695 = vunpack.c.h.b16 %v324
      %v696 = vunpack.c.l.b16 %v325
      %v697 = vunpack.c.h.b16 %v325
      %v698 = vunpack.c.l.b16 %v326
      %v699 = vunpack.c.h.b16 %v326
      %v700 = vunpack.c.l.b16 %v327
      %v701 = vunpack.c.h.b16 %v327
      %v702 = vunpack.c.l.b16 %v328
      %v703 = vunpack.c.h.b16 %v328
      %v704 = vunpack.c.l.b16 %v329
      %v705 = vunpack.c.h.b16 %v329
      %v706 = vunpack.c.l.b16 %v330
      %v707 = vunpack.c.h.b16 %v330
      %v708 = vunpack.c.l.b16 %v331
      %v709 = vunpack.c.h.b16 %v331
      %v710 = vunpack.c.l.b16 %v332
      %v711 = vunpack.c.h.b16 %v332
      %v712 = vunpack.c.l.b16 %v333
      %v713 = vunpack.c.h.b16 %v333
      %v714 = vunpack.c.l.b16 %v334
      %v715 = vunpack.c.h.b16 %v334
      %v716 = vunpack.c.l.b16 %v335
      %v717 = vunpack.c.h.b16 %v335
      %v718 = vunpack.c.l.b16 %v336
      %v719 = vunpack.c.h.b16 %v336
      %v720 = vunpack.c.l.b16 %v337
      %v721 = vunpack.c.h.b16 %v337
      %v722 = vunpack.c.l.b16 %v338
      %v723 = vunpack.c.h.b16 %v338
      %v724 = vunpack.c.l.b16 %v339
      %v725 = vunpack.c.h.b16 %v339
      %v726 = vunpack.c.l.b16 %v340
      %v727 = vunpack.c.h.b16 %v340
      %v728 = vunpack.c.l.b16 %v341
      %v729 = vunpack.c.h.b16 %v341
      %v730 = vunpack.c.l.b16 %v342
      %v731 = vunpack.c.h.b16 %v342
      %v732 = vunpack.c.l.b16 %v343
      %v733 = vunpack.c.h.b16 %v343
      %v734 = vunpack.c.l.b16 %v344
      %v735 = vunpack.c.h.b16 %v344
      %v736 = vunpack.c.l.b16 %v345
      %v737 = vunpack.c.h.b16 %v345
      %v738 = vunpack.c.l.b16 %v346
      %v739 = vunpack.c.h.b16 %v346
      %v740 = vunpack.c.l.b16 %v347
      %v741 = vunpack.c.h.b16 %v347
      %v742 = vunpack.c.l.b16 %v348
      %v743 = vunpack.c.h.b16 %v348
      %v744 = vunpack.c.l.b16 %v349
      %v745 = vunpack.c.h.b16 %v349
      %v746 = vunpack.c.l.b16 %v350
      %v747 = vunpack.c.h.b16 %v350
      %v748 = vunpack.c.l.b16 %v351
      %v749 = vunpack.c.h.b16 %v351
      %v750 = vunpack.c.l.b16 %v352
      %v751 = vunpack.c.h.b16 %v352
      %v752 = vunpack.c.l.b16 %v353
      %v753 = vunpack.c.h.b16 %v353
      %v754 = vunpack.c.l.b16 %v354
      %v755 = vunpack.c.h.b16 %v354
      %v756 = vunpack.c.l.b16 %v355
      %v757 = vunpack.c.h.b16 %v355
      %v758 = vunpack.c.l.b16 %v356
      %v759 = vunpack.c.h.b16 %v356
      %v760 = vunpack.c.l.b16 %v357
      %v761 = vunpack.c.h.b16 %v357
      %v762 = vunpack.c.l.b16 %v358
      %v763 = vunpack.c.h.b16 %v358
      %v764 = vunpack.c.l.b16 %v359
      %v765 = vunpack.c.h.b16 %v359
      %v766 = vunpack.c.l.b16 %v360
      %v767 = vunpack.c.h.b16 %v360
      %v768 = vunpack.c.l.b16 %v361
      %v769 = vunpack.c.h.b16 %v361
      %v770 = vunpack.c.l.b16 %v362
      %v771 = vunpack.c.h.b16 %v362
      %v772 = vunpack.c.l.b16 %v363
      %v773 = vunpack.c.h.b16 %v363
      %v774 = vunpack.c.l.b16 %v364
      %v775 = vunpack.c.h.b16 %v364
      %v776 = vunpack.c.l.b16 %v365
      %v777 = vunpack.c.h.b16 %v365
      %v778 = vunpack.c.l.b16 %v366
      %v779 = vunpack.c.h.b16 %v366
      %v780 = vunpack.c.l.b16 %v367
      %v781 = vunpack.c.h.b16 %v367
      %v782 = vunpack.c.l.b16 %v368
      %v783 = vunpack.c.h.b16 %v368
      %v784 = vunpack.c.l.b16 %v369
      %v785 = vunpack.c.h.b16 %v369
      %v786 = vunpack.c.l.b16 %v370
      %v787 = vunpack.c.h.b16 %v370
      %v788 = vunpack.c.l.b16 %v371
      %v789 = vunpack.c.h.b16 %v371
      %v790 = vunpack.c.l.b16 %v372
      %v791 = vunpack.c.h.b16 %v372
      %v792 = vunpack.c.l.b16 %v373
      %v793 = vunpack.c.h.b16 %v373
      %v794 = vunpack.c.l.b16 %v374
      %v795 = vunpack.c.h.b16 %v374
      %v796 = vunpack.c.l.b16 %v375
      %v797 = vunpack.c.h.b16 %v375
      %v798 = vunpack.c.l.b16 %v376
      %v799 = vunpack.c.h.b16 %v376
      %v800 = vunpack.c.l.b16 %v377
      %v801 = vunpack.c.h.b16 %v377
      %v802 = vunpack.c.l.b16 %v378
      %v803 = vunpack.c.h.b16 %v378
      %v804 = vunpack.c.l.b16 %v379
      %v805 = vunpack.c.h.b16 %v379
      %v806 = vunpack.c.l.b16 %v380
      %v807 = vunpack.c.h.b16 %v380
      %v808 = vunpack.c.l.b16 %v381
      %v809 = vunpack.c.h.b16 %v381
      %v810 = vunpack.c.l.b16 %v382
      %v811 = vunpack.c.h.b16 %v382
      %v812 = vunpack.c.l.b16 %v383
      %v813 = vunpack.c.h.b16 %v383
      %v814 = vunpack.c.l.b16 %v384
      %v815 = vunpack.c.h.b16 %v384
      %v816 = vunpack.c.l.b16 %v385
      %v817 = vunpack.c.h.b16 %v385
      %v818 = vunpack.c.l.b16 %v386
      %v819 = vunpack.c.h.b16 %v386
      %v820 = vunpack.c.l.b16 %v387
      %v821 = vunpack.c.h.b16 %v387
      %v822 = vunpack.c.l.b16 %v388
      %v823 = vunpack.c.h.b16 %v388
      %v824 = vunpack.c.l.b16 %v389
      %v825 = vunpack.c.h.b16 %v389
      %v826 = vunpack.c.l.b16 %v390
      %v827 = vunpack.c.h.b16 %v390
      %v828 = vunpack.c.l.b16 %v391
      %v829 = vunpack.c.h.b16 %v391
      %v830 = vunpack.c.l.b16 %v392
      %v831 = vunpack.c.h.b16 %v392
      %v832 = vunpack.c.l.b16 %v393
      %v833 = vunpack.c.h.b16 %v393
      %v834 = vunpack.c.l.b16 %v394
      %v835 = vunpack.c.h.b16 %v394
      %v836 = vunpack.c.l.b16 %v395
      %v837 = vunpack.c.h.b16 %v395
      %v838 = vunpack.c.l.b16 %v396
      %v839 = vunpack.c.h.b16 %v396
      %v840 = vunpack.c.l.b16 %v397
      %v841 = vunpack.c.h.b16 %v397
      %v842 = vunpack.c.l.b16 %v398
      %v843 = vunpack.c.h.b16 %v398
      %v844 = vunpack.c.l.b16 %v399
      %v845 = vunpack.c.h.b16 %v399
      %v846 = vunpack.c.l.b16 %v400
      %v847 = vunpack.c.h.b16 %v400
      %v848 = vunpack.c.l.b16 %v401
      %v849 = vunpack.c.h.b16 %v401
      %v850 = vunpack.c.l.b16 %v402
      %v851 = vunpack.c.h.b16 %v402
      %v852 = vunpack.c.l.b16 %v403
      %v853 = vunpack.c.h.b16 %v403
      %v854 = vunpack.c.l.b16 %v404
      %v855 = vunpack.c.h.b16 %v404
      %v856 = vunpack.c.l.b16 %v405
      %v857 = vunpack.c.h.b16 %v405
      %v858 = vunpack.c.l.b16 %v406
      %v859 = vunpack.c.h.b16 %v406
      %v860 = vunpack.c.l.b16 %v407
      %v861 = vunpack.c.h.b16 %v407
      %v862 = vunpack.c.l.b16 %v408
      %v863 = vunpack.c.h.b16 %v408
      %v864 = vunpack.c.l.b16 %v409
      %v865 = vunpack.c.h.b16 %v409
      %v866 = vunpack.c.l.b16 %v410
      %v867 = vunpack.c.h.b16 %v410
      %v868 = vunpack.c.l.b16 %v411
      %v869 = vunpack.c.h.b16 %v411
      %v870 = vunpack.c.l.b16 %v412
      %v871 = vunpack.c.h.b16 %v412
      %v872 = vunpack.c.l.b16 %v413
      %v873 = vunpack.c.h.b16 %v413
      %v874 = vunpack.c.l.b16 %v414
      %v875 = vunpack.c.h.b16 %v414
      %v876 = vunpack.c.l.b16 %v415
      %v877 = vunpack.c.h.b16 %v415
      %v878 = vunpack.c.l.b16 %v416
      %v879 = vunpack.c.h.b16 %v416
      %v880 = vunpack.c.l.b16 %v417
      %v881 = vunpack.c.h.b16 %v417
      %v882 = vunpack.c.l.b16 %v418
      %v883 = vunpack.c.h.b16 %v418
      %v884 = vunpack.c.l.b16 %v419
      %v885 = vunpack.c.h.b16 %v419
      %v886 = vunpack.c.l.b16 %v420
      %v887 = vunpack.c.h.b16 %v420
      %v888 = vunpack.c.l.b16 %v421
      %v889 = vunpack.c.h.b16 %v421
      %v890 = vunpack.c.l.b16 %v422
      %v891 = vunpack.c.h.b16 %v422
      %v892 = vunpack.c.l.b16 %v423
      %v893 = vunpack.c.h.b16 %v423
      %v894 = vunpack.c.l.b16 %v424
      %v895 = vunpack.c.h.b16 %v424
      %v896 = vunpack.c.l.b16 %v425
      %v897 = vunpack.c.h.b16 %v425
      %v898 = vunpack.c.l.b16 %v426
      %v899 = vunpack.c.h.b16 %v426
      %v900 = vunpack.c.l.b16 %v427
      %v901 = vunpack.c.h.b16 %v427
      %v902 = vunpack.c.l.b16 %v428
      %v903 = vunpack.c.h.b16 %v428
      %v904 = vunpack.c.l.b16 %v429
      %v905 = vunpack.c.h.b16 %v429
      %v906 = vunpack.c.l.b16 %v430
      %v907 = vunpack.c.h.b16 %v430
      %v908 = vunpack.c.l.b16 %v431
      %v909 = vunpack.c.h.b16 %v431
      %v910 = vunpack.c.l.b16 %v432
      %v911 = vunpack.c.h.b16 %v432
      %v912 = vunpack.c.l.b16 %v433
      %v913 = vunpack.c.h.b16 %v433
      %v914 = vunpack.c.l.b16 %v434
      %v915 = vunpack.c.h.b16 %v434
      %v916 = vunpack.c.l.b16 %v435
      %v917 = vunpack.c.h.b16 %v435
      %v918 = vunpack.c.l.b16 %v436
      %v919 = vunpack.c.h.b16 %v436
      %v920 = vunpack.c.l.b16 %v437
      %v921 = vunpack.c.h.b16 %v437
      %v922 = vunpack.c.l.b16 %v438
      %v923 = vunpack.c.h.b16 %v438
      %v924 = vunpack.c.l.b16 %v439
      %v925 = vunpack.c.h.b16 %v439
      %v926 = vunpack.c.l.b16 %v440
      %v927 = vunpack.c.h.b16 %v440
      %v928 = vunpack.c.l.b16 %v441
      %v929 = vunpack.c.h.b16 %v441
      %v930 = vunpack.c.l.b16 %v442
      %v931 = vunpack.c.h.b16 %v442
      %v932 = vunpack.c.l.b16 %v443
      %v933 = vunpack.c.h.b16 %v443
      %v934 = vunpack.c.l.b16 %v444
      %v935 = vunpack.c.h.b16 %v444
      %v936 = vunpack.c.l.b16 %v445
      %v937 = vunpack.c.h.b16 %v445
      %v938 = vunpack.c.l.b16 %v446
      %v939 = vunpack.c.h.b16 %v446
      %v940 = vunpack.c.l.b16 %v447
      %v941 = vunpack.c.h.b16 %v447
      %v942 = vunpack.c.l.b16 %v448
      %v943 = vunpack.c.h.b16 %v448
      %v944 = vunpack.c.l.b16 %v449
      %v945 = vunpack.c.h.b16 %v449
      %v946 = vunpack.c.l.b16 %v450
      %v947 = vunpack.c.h.b16 %v450
      %v948 = vunpack.c.l.b16 %v451
      %v949 = vunpack.c.h.b16 %v451
      %v950 = vpack.c.b16 %v634, %v630
      %v951 = vpack.c.b16 %v635, %v631
      %v952 = vpack.c.b16 %v636, %v632
      %v953 = vpack.c.b16 %v637, %v633
      %v954 = vpack.c.b16 %v642, %v638
      %v955 = vpack.c.b16 %v643, %v639
      %v956 = vpack.c.b16 %v644, %v640
      %v957 = vpack.c.b16 %v645, %v641
      %v958 = vpack.c.b16 %v650, %v646
      %v959 = vpack.c.b16 %v651, %v647
      %v960 = vpack.c.b16 %v652, %v648
      %v961 = vpack.c.b16 %v653, %v649
      %v962 = vpack.c.b16 %v658, %v654
      %v963 = vpack.c.b16 %v659, %v655
      %v964 = vpack.c.b16 %v660, %v656
      %v965 = vpack.c.b16 %v661, %v657
      %v966 = vpack.c.b16 %v666, %v662
      %v967 = vpack.c.b16 %v667, %v663
      %v968 = vpack.c.b16 %v668, %v664
      %v969 = vpack.c.b16 %v669, %v665
      %v970 = vpack.c.b16 %v674, %v670
      %v971 = vpack.c.b16 %v675, %v671
      %v972 = vpack.c.b16 %v676, %v672
      %v973 = vpack.c.b16 %v677, %v673
      %v974 = vpack.c.b16 %v682, %v678
      %v975 = vpack.c.b16 %v683, %v679
      %v976 = vpack.c.b16 %v684, %v680
      %v977 = vpack.c.b16 %v685, %v681
      %v978 = vpack.c.b16 %v690, %v686
      %v979 = vpack.c.b16 %v691, %v687
      %v980 = vpack.c.b16 %v692, %v688
      %v981 = vpack.c.b16 %v693, %v689
      %v982 = vpack.c.b16 %v698, %v694
      %v983 = vpack.c.b16 %v699, %v695
      %v984 = vpack.c.b16 %v700, %v696
      %v985 = vpack.c.b16 %v701, %v697
      %v986 = vpack.c.b16 %v706, %v702
      %v987 = vpack.c.b16 %v707, %v703
      %v988 = vpack.c.b16 %v708, %v704
      %v989 = vpack.c.b16 %v709, %v705
      %v990 = vpack.c.b16 %v714, %v710
      %v991 = vpack.c.b16 %v715, %v711
      %v992 = vpack.c.b16 %v716, %v712
      %v993 = vpack.c.b16 %v717, %v713
      %v994 = vpack.c.b16 %v722, %v718
      %v995 = vpack.c.b16 %v723, %v719
      %v996 = vpack.c.b16 %v724, %v720
      %v997 = vpack.c.b16 %v725, %v721
      %v998 = vpack.c.b16 %v730, %v726
      %v999 = vpack.c.b16 %v731, %v727
      %v1000 = vpack.c.b16 %v732, %v728
      %v1001 = vpack.c.b16 %v733, %v729
      %v1002 = vpack.c.b16 %v738, %v734
      %v1003 = vpack.c.b16 %v739, %v735
      %v1004 = vpack.c.b16 %v740, %v736
      %v1005 = vpack.c.b16 %v741, %v737
      %v1006 = vpack.c.b16 %v746, %v742
      %v1007 = vpack.c.b16 %v747, %v743
      %v1008 = vpack.c.b16 %v748, %v744
      %v1009 = vpack.c.b16 %v749, %v745
      %v1010 = vpack.c.b16 %v754, %v750
      %v1011 = vpack.c.b16 %v755, %v751
      %v1012 = vpack.c.b16 %v756, %v752
      %v1013 = vpack.c.b16 %v757, %v753
      %v1014 = vpack.c.b16 %v762, %v758
      %v1015 = vpack.c.b16 %v763, %v759
      %v1016 = vpack.c.b16 %v764, %v760
      %v1017 = vpack.c.b16 %v765, %v761
      %v1018 = vpack.c.b16 %v770, %v766
      %v1019 = vpack.c.b16 %v771, %v767
      %v1020 = vpack.c.b16 %v772, %v768
      %v1021 = vpack.c.b16 %v773, %v769
      %v1022 = vpack.c.b16 %v778, %v774
      %v1023 = vpack.c.b16 %v779, %v775
      %v1024 = vpack.c.b16 %v780, %v776
      %v1025 = vpack.c.b16 %v781, %v777
      %v1026 = vpack.c.b16 %v786, %v782
      %v1027 = vpack.c.b16 %v787, %v783
      %v1028 = vpack.c.b16 %v788, %v784
      %v1029 = vpack.c.b16 %v789, %v785
      %v1030 = vpack.c.b16 %v794, %v790
      %v1031 = vpack.c.b16 %v795, %v791
      %v1032 = vpack.c.b16 %v796, %v792
      %v1033 = vpack.c.b16 %v797, %v793
      %v1034 = vpack.c.b16 %v802, %v798
      %v1035 = vpack.c.b16 %v803, %v799
      %v1036 = vpack.c.b16 %v804, %v800
      %v1037 = vpack.c.b16 %v805, %v801
      %v1038 = vpack.c.b16 %v810, %v806
      %v1039 = vpack.c.b16 %v811, %v807
      %v1040 = vpack.c.b16 %v812, %v808
      %v1041 = vpack.c.b16 %v813, %v809
      %v1042 = vpack.c.b16 %v818, %v814
      %v1043 = vpack.c.b16 %v819, %v815
      %v1044 = vpack.c.b16 %v820, %v816
      %v1045 = vpack.c.b16 %v821, %v817
      %v1046 = vpack.c.b16 %v826, %v822
      %v1047 = vpack.c.b16 %v827, %v823
      %v1048 = vpack.c.b16 %v828, %v824
      %v1049 = vpack.c.b16 %v829, %v825
      %v1050 = vpack.c.b16 %v834, %v830
      %v1051 = vpack.c.b16 %v835, %v831
      %v1052 = vpack.c.b16 %v836, %v832
      %v1053 = vpack.c.b16 %v837, %v833
      %v1054 = vpack.c.b16 %v842, %v838
      %v1055 = vpack.c.b16 %v843, %v839
      %v1056 = vpack.c.b16 %v844, %v840
      %v1057 = vpack.c.b16 %v845, %v841
      %v1058 = vpack.c.b16 %v850, %v846
      %v1059 = vpack.c.b16 %v851, %v847
      %v1060 = vpack.c.b16 %v852, %v848
      %v1061 = vpack.c.b16 %v853, %v849
      %v1062 = vpack.c.b16 %v858, %v854
      %v1063 = vpack.c.b16 %v859, %v855
      %v1064 = vpack.c.b16 %v860, %v856
      %v1065 = vpack.c.b16 %v861, %v857
      %v1066 = vpack.c.b16 %v866, %v862
      %v1067 = vpack.c.b16 %v867, %v863
      %v1068 = vpack.c.b16 %v868, %v864
      %v1069 = vpack.c.b16 %v869, %v865
      %v1070 = vpack.c.b16 %v874, %v870
      %v1071 = vpack.c.b16 %v875, %v871
      %v1072 = vpack.c.b16 %v876, %v872
      %v1073 = vpack.c.b16 %v877, %v873
      %v1074 = vpack.c.b16 %v882, %v878
      %v1075 = vpack.c.b16 %v883, %v879
      %v1076 = vpack.c.b16 %v884, %v880
      %v1077 = vpack.c.b16 %v885, %v881
      %v1078 = vpack.c.b16 %v890, %v886
      %v1079 = vpack.c.b16 %v891, %v887
      %v1080 = vpack.c.b16 %v892, %v888
      %v1081 = vpack.c.b16 %v893, %v889
      %v1082 = vpack.c.b16 %v898, %v894
      %v1083 = vpack.c.b16 %v899, %v895
      %v1084 = vpack.c.b16 %v900, %v896
      %v1085 = vpack.c.b16 %v901, %v897
      %v1086 = vpack.c.b16 %v906, %v902
      %v1087 = vpack.c.b16 %v907, %v903
      %v1088 = vpack.c.b16 %v908, %v904
      %v1089 = vpack.c.b16 %v909, %v905
      %v1090 = vpack.c.b16 %v914, %v910
      %v1091 = vpack.c.b16 %v915, %v911
      %v1092 = vpack.c.b16 %v916, %v912
      %v1093 = vpack.c.b16 %v917, %v913
      %v1094 = vpack.c.b16 %v922, %v918
      %v1095 = vpack.c.b16 %v923, %v919
      %v1096 = vpack.c.b16 %v924, %v920
      %v1097 = vpack.c.b16 %v925, %v921
      %v1098 = vpack.c.b16 %v930, %v926
      %v1099 = vpack.c.b16 %v931, %v927
      %v1100 = vpack.c.b16 %v932, %v928
      %v1101 = vpack.c.b16 %v933, %v929
      %v1102 = vpack.c.b16 %v938, %v934
      %v1103 = vpack.c.b16 %v939, %v935
      %v1104 = vpack.c.b16 %v940, %v936
      %v1105 = vpack.c.b16 %v941, %v937
      %v1106 = vpack.c.b16 %v946, %v942
      %v1107 = vpack.c.b16 %v947, %v943
      %v1108 = vpack.c.b16 %v948, %v944
      %v1109 = vpack.c.b16 %v949, %v945
      %1270 = vmatprep.subr.bf16.mxu0 %v979
      %1271 = vmatpush1.bf16.msra.mxu0 %v978
      %1272 = vmatprep.subr.bf16.mxu0 %v975
      %1273 = vmatpush1.bf16.msra.mxu0 %v974
      %1274 = vmatprep.subr.bf16.mxu0 %v971
      %1275 = vmatpush1.bf16.msra.mxu0 %v970
      %1276 = vmatprep.subr.bf16.mxu0 %v967
      %1277 = vmatpush1.bf16.msra.mxu0 %v966
      %1278 = vmatprep.subr.bf16.mxu0 %v963
      %1279 = vmatpush1.bf16.msra.mxu0 %v962
      %1280 = vmatprep.subr.bf16.mxu0 %v959
      %1281 = vmatpush1.bf16.msra.mxu0 %v958
      %1282 = vmatprep.subr.bf16.mxu0 %v955
      %1283 = vmatpush1.bf16.msra.mxu0 %v954
      %1284 = vmatprep.subr.bf16.mxu0 %v951
      %1285 = vmatpush1.bf16.msra.mxu0 %v950
      %1286 = vmatprep.subr.bf16.mxu0 %v1011
      %1287 = vmatpush2.bf16.msra.mxu0 %v1010
      %1288 = vmatprep.subr.bf16.mxu0 %v1007
      %1289 = vmatpush2.bf16.msra.mxu0 %v1006
      %1290 = vmatprep.subr.bf16.mxu0 %v1003
      %1291 = vmatpush2.bf16.msra.mxu0 %v1002
      %1292 = vmatprep.subr.bf16.mxu0 %v999
      %1293 = vmatpush2.bf16.msra.mxu0 %v998
      %1294 = vmatprep.subr.bf16.mxu0 %v995
      %1295 = vmatpush2.bf16.msra.mxu0 %v994
      %1296 = vmatprep.subr.bf16.mxu0 %v991
      %1297 = vmatpush2.bf16.msra.mxu0 %v990
      %1298 = vmatprep.subr.bf16.mxu0 %v987
      %1299 = vmatpush2.bf16.msra.mxu0 %v986
      %1300 = vmatprep.subr.bf16.mxu0 %v983
      %1301 = vmatpush2.bf16.msra.mxu0 %v982
      %1302 = vmatprep.mubr.bf16.mxu0 %v461
      %1303 = vmatmul.mubr.bf16.gmra.mxu0 %v460
      %v1304 = vpop.f32.mrf.mxu0
      %v1305 = vadd.f32 0.0, %v1304
      %v1306 = vpop.f32.mrf.mxu0
      %v1307 = vadd.f32 0.0, %v1306
      %v1308 = vpop.f32.mrf.mxu0
      %v1309 = vpop.f32.mrf.mxu0
      %1310 = vdwg.mxu0
      %1311 = vmatprep.subr.bf16.mxu0 %v1043
      %1312 = vmatpush1.bf16.msra.mxu0 %v1042
      %1313 = vmatprep.subr.bf16.mxu0 %v1039
      %1314 = vmatpush1.bf16.msra.mxu0 %v1038
      %1315 = vmatprep.subr.bf16.mxu0 %v1035
      %1316 = vmatpush1.bf16.msra.mxu0 %v1034
      %1317 = vmatprep.subr.bf16.mxu0 %v1031
      %1318 = vmatpush1.bf16.msra.mxu0 %v1030
      %1319 = vmatprep.subr.bf16.mxu0 %v1027
      %1320 = vmatpush1.bf16.msra.mxu0 %v1026
      %1321 = vmatprep.subr.bf16.mxu0 %v1023
      %1322 = vmatpush1.bf16.msra.mxu0 %v1022
      %1323 = vmatprep.subr.bf16.mxu0 %v1019
      %1324 = vmatpush1.bf16.msra.mxu0 %v1018
      %1325 = vmatprep.subr.bf16.mxu0 %v1015
      %1326 = vmatpush1.bf16.msra.mxu0 %v1014
      %1327 = vmatprep.subr.bf16.mxu0 %v1075
      %1328 = vmatpush2.bf16.msra.mxu0 %v1074
      %1329 = vmatprep.subr.bf16.mxu0 %v1071
      %1330 = vmatpush2.bf16.msra.mxu0 %v1070
      %1331 = vmatprep.subr.bf16.mxu0 %v1067
      %1332 = vmatpush2.bf16.msra.mxu0 %v1066
      %1333 = vmatprep.subr.bf16.mxu0 %v1063
      %1334 = vmatpush2.bf16.msra.mxu0 %v1062
      %1335 = vmatprep.subr.bf16.mxu0 %v1059
      %1336 = vmatpush2.bf16.msra.mxu0 %v1058
      %1337 = vmatprep.subr.bf16.mxu0 %v1055
      %1338 = vmatpush2.bf16.msra.mxu0 %v1054
      %1339 = vmatprep.subr.bf16.mxu0 %v1051
      %1340 = vmatpush2.bf16.msra.mxu0 %v1050
      %1341 = vmatprep.subr.bf16.mxu0 %v1047
      %1342 = vmatpush2.bf16.msra.mxu0 %v1046
      %1343 = vmatprep.mubr.bf16.mxu0 %v463
      %1344 = vmatmul.mubr.bf16.gmra.mxu0 %v462
      %v1345 = vpop.f32.mrf.mxu0
      %v1346 = vadd.f32 %v1305, %v1345
      %v1347 = vpop.f32.mrf.mxu0
      %v1348 = vadd.f32 %v1307, %v1347
      %v1349 = vpop.f32.mrf.mxu0
      %v1350 = vpop.f32.mrf.mxu0
      %1351 = vdwg.mxu0
      %1352 = vmatprep.subr.bf16.mxu0 %v1107
      %1353 = vmatpush1.bf16.msra.mxu0 %v1106
      %1354 = vmatprep.subr.bf16.mxu0 %v1103
      %1355 = vmatpush1.bf16.msra.mxu0 %v1102
      %1356 = vmatprep.subr.bf16.mxu0 %v1099
      %1357 = vmatpush1.bf16.msra.mxu0 %v1098
      %1358 = vmatprep.subr.bf16.mxu0 %v1095
      %1359 = vmatpush1.bf16.msra.mxu0 %v1094
      %1360 = vmatprep.subr.bf16.mxu0 %v1091
      %1361 = vmatpush1.bf16.msra.mxu0 %v1090
      %1362 = vmatprep.subr.bf16.mxu0 %v1087
      %1363 = vmatpush1.bf16.msra.mxu0 %v1086
      %1364 = vmatprep.subr.bf16.mxu0 %v1083
      %1365 = vmatpush1.bf16.msra.mxu0 %v1082
      %1366 = vmatprep.subr.bf16.mxu0 %v1079
      %1367 = vmatpush1.bf16.msra.mxu0 %v1078
      %1368 = vmatprep.subr.bf16.mxu0 0
      %1369 = vmatpush2.bf16.msra.mxu0 0
      %1370 = vmatprep.subr.bf16.mxu0 0
      %1371 = vmatpush2.bf16.msra.mxu0 0
      %1372 = vmatprep.subr.bf16.mxu0 0
      %1373 = vmatpush2.bf16.msra.mxu0 0
      %1374 = vmatprep.subr.bf16.mxu0 0
      %1375 = vmatpush2.bf16.msra.mxu0 0
      %1376 = vmatprep.subr.bf16.mxu0 0
      %1377 = vmatpush2.bf16.msra.mxu0 0
      %1378 = vmatprep.subr.bf16.mxu0 0
      %1379 = vmatpush2.bf16.msra.mxu0 0
      %1380 = vmatprep.subr.bf16.mxu0 0
      %1381 = vmatpush2.bf16.msra.mxu0 0
      %1382 = vmatprep.subr.bf16.mxu0 0
      %1383 = vmatpush2.bf16.msra.mxu0 0
      %1384 = vmatprep.mubr.bf16.mxu0 0
      %1385 = vmatmul.mubr.bf16.gmra.mxu0 %v464
      %v1386 = vpop.f32.mrf.mxu0
      %v1387 = vadd.f32 %v1346, %v1386
      %v1388 = vpop.f32.mrf.mxu0
      %v1389 = vadd.f32 %v1348, %v1388
      %v1390 = vpop.f32.mrf.mxu0
      %v1391 = vpop.f32.mrf.mxu0
      %1392 = vdwg.mxu0
      %1393 = vmatprep.subr.bf16.mxu0 %v981
      %1394 = vmatpush1.bf16.msra.mxu0 %v980
      %1395 = vmatprep.subr.bf16.mxu0 %v977
      %1396 = vmatpush1.bf16.msra.mxu0 %v976
      %1397 = vmatprep.subr.bf16.mxu0 %v973
      %1398 = vmatpush1.bf16.msra.mxu0 %v972
      %1399 = vmatprep.subr.bf16.mxu0 %v969
      %1400 = vmatpush1.bf16.msra.mxu0 %v968
      %1401 = vmatprep.subr.bf16.mxu0 %v965
      %1402 = vmatpush1.bf16.msra.mxu0 %v964
      %1403 = vmatprep.subr.bf16.mxu0 %v961
      %1404 = vmatpush1.bf16.msra.mxu0 %v960
      %1405 = vmatprep.subr.bf16.mxu0 %v957
      %1406 = vmatpush1.bf16.msra.mxu0 %v956
      %1407 = vmatprep.subr.bf16.mxu0 %v953
      %1408 = vmatpush1.bf16.msra.mxu0 %v952
      %1409 = vmatprep.subr.bf16.mxu0 %v1013
      %1410 = vmatpush2.bf16.msra.mxu0 %v1012
      %1411 = vmatprep.subr.bf16.mxu0 %v1009
      %1412 = vmatpush2.bf16.msra.mxu0 %v1008
      %1413 = vmatprep.subr.bf16.mxu0 %v1005
      %1414 = vmatpush2.bf16.msra.mxu0 %v1004
      %1415 = vmatprep.subr.bf16.mxu0 %v1001
      %1416 = vmatpush2.bf16.msra.mxu0 %v1000
      %1417 = vmatprep.subr.bf16.mxu0 %v997
      %1418 = vmatpush2.bf16.msra.mxu0 %v996
      %1419 = vmatprep.subr.bf16.mxu0 %v993
      %1420 = vmatpush2.bf16.msra.mxu0 %v992
      %1421 = vmatprep.subr.bf16.mxu0 %v989
      %1422 = vmatpush2.bf16.msra.mxu0 %v988
      %1423 = vmatprep.subr.bf16.mxu0 %v985
      %1424 = vmatpush2.bf16.msra.mxu0 %v984
      %1425 = vmatprep.mubr.bf16.mxu0 %v461
      %1426 = vmatmul.mubr.bf16.gmra.mxu0 %v460
      %v1427 = vpop.f32.mrf.mxu0
      %v1428 = vadd.f32 0.0, %v1427
      %v1429 = vpop.f32.mrf.mxu0
      %v1430 = vadd.f32 0.0, %v1429
      %v1431 = vpop.f32.mrf.mxu0
      %v1432 = vpop.f32.mrf.mxu0
      %1433 = vdwg.mxu0
      %1434 = vmatprep.subr.bf16.mxu0 %v1045
      %1435 = vmatpush1.bf16.msra.mxu0 %v1044
      %1436 = vmatprep.subr.bf16.mxu0 %v1041
      %1437 = vmatpush1.bf16.msra.mxu0 %v1040
      %1438 = vmatprep.subr.bf16.mxu0 %v1037
      %1439 = vmatpush1.bf16.msra.mxu0 %v1036
      %1440 = vmatprep.subr.bf16.mxu0 %v1033
      %1441 = vmatpush1.bf16.msra.mxu0 %v1032
      %1442 = vmatprep.subr.bf16.mxu0 %v1029
      %1443 = vmatpush1.bf16.msra.mxu0 %v1028
      %1444 = vmatprep.subr.bf16.mxu0 %v1025
      %1445 = vmatpush1.bf16.msra.mxu0 %v1024
      %1446 = vmatprep.subr.bf16.mxu0 %v1021
      %1447 = vmatpush1.bf16.msra.mxu0 %v1020
      %1448 = vmatprep.subr.bf16.mxu0 %v1017
      %1449 = vmatpush1.bf16.msra.mxu0 %v1016
      %1450 = vmatprep.subr.bf16.mxu0 %v1077
      %1451 = vmatpush2.bf16.msra.mxu0 %v1076
      %1452 = vmatprep.subr.bf16.mxu0 %v1073
      %1453 = vmatpush2.bf16.msra.mxu0 %v1072
      %1454 = vmatprep.subr.bf16.mxu0 %v1069
      %1455 = vmatpush2.bf16.msra.mxu0 %v1068
      %1456 = vmatprep.subr.bf16.mxu0 %v1065
      %1457 = vmatpush2.bf16.msra.mxu0 %v1064
      %1458 = vmatprep.subr.bf16.mxu0 %v1061
      %1459 = vmatpush2.bf16.msra.mxu0 %v1060
      %1460 = vmatprep.subr.bf16.mxu0 %v1057
      %1461 = vmatpush2.bf16.msra.mxu0 %v1056
      %1462 = vmatprep.subr.bf16.mxu0 %v1053
      %1463 = vmatpush2.bf16.msra.mxu0 %v1052
      %1464 = vmatprep.subr.bf16.mxu0 %v1049
      %1465 = vmatpush2.bf16.msra.mxu0 %v1048
      %1466 = vmatprep.mubr.bf16.mxu0 %v463
      %1467 = vmatmul.mubr.bf16.gmra.mxu0 %v462
      %v1468 = vpop.f32.mrf.mxu0
      %v1469 = vadd.f32 %v1428, %v1468
      %v1470 = vpop.f32.mrf.mxu0
      %v1471 = vadd.f32 %v1430, %v1470
      %v1472 = vpop.f32.mrf.mxu0
      %v1473 = vpop.f32.mrf.mxu0
      %1474 = vdwg.mxu0
      %1475 = vmatprep.subr.bf16.mxu0 %v1109
      %1476 = vmatpush1.bf16.msra.mxu0 %v1108
      %1477 = vmatprep.subr.bf16.mxu0 %v1105
      %1478 = vmatpush1.bf16.msra.mxu0 %v1104
      %1479 = vmatprep.subr.bf16.mxu0 %v1101
      %1480 = vmatpush1.bf16.msra.mxu0 %v1100
      %1481 = vmatprep.subr.bf16.mxu0 %v1097
      %1482 = vmatpush1.bf16.msra.mxu0 %v1096
      %1483 = vmatprep.subr.bf16.mxu0 %v1093
      %1484 = vmatpush1.bf16.msra.mxu0 %v1092
      %1485 = vmatprep.subr.bf16.mxu0 %v1089
      %1486 = vmatpush1.bf16.msra.mxu0 %v1088
      %1487 = vmatprep.subr.bf16.mxu0 %v1085
      %1488 = vmatpush1.bf16.msra.mxu0 %v1084
      %1489 = vmatprep.subr.bf16.mxu0 %v1081
      %1490 = vmatpush1.bf16.msra.mxu0 %v1080
      %1491 = vmatprep.subr.bf16.mxu0 0
      %1492 = vmatpush2.bf16.msra.mxu0 0
      %1493 = vmatprep.subr.bf16.mxu0 0
      %1494 = vmatpush2.bf16.msra.mxu0 0
      %1495 = vmatprep.subr.bf16.mxu0 0
      %1496 = vmatpush2.bf16.msra.mxu0 0
      %1497 = vmatprep.subr.bf16.mxu0 0
      %1498 = vmatpush2.bf16.msra.mxu0 0
      %1499 = vmatprep.subr.bf16.mxu0 0
      %1500 = vmatpush2.bf16.msra.mxu0 0
      %1501 = vmatprep.subr.bf16.mxu0 0
      %1502 = vmatpush2.bf16.msra.mxu0 0
      %1503 = vmatprep.subr.bf16.mxu0 0
      %1504 = vmatpush2.bf16.msra.mxu0 0
      %1505 = vmatprep.subr.bf16.mxu0 0
      %1506 = vmatpush2.bf16.msra.mxu0 0
      %1507 = vmatprep.mubr.bf16.mxu0 0
      %1508 = vmatmul.mubr.bf16.gmra.mxu0 %v464
      %v1509 = vpop.f32.mrf.mxu0
      %v1510 = vadd.f32 %v1469, %v1509
      %v1511 = vpop.f32.mrf.mxu0
      %v1512 = vadd.f32 %v1471, %v1511
      %v1513 = vpop.f32.mrf.mxu0
      %v1514 = vpop.f32.mrf.mxu0
      %1515 = vdwg.mxu0
      %v1516 = vadd.f32 %v285, %v1387
      %v1517 = vadd.f32 %v286, %v1389
      %v1518 = vadd.f32 %v287, %v1510
      %v1519 = vadd.f32 %v288, %v1512
      %1520 = vst [vmem:[#allocation2] sm:$0xff] %v1516
      %1521 = vst [vmem:[#allocation2 + $0x8] sm:$0xff] %v1517
      %1522 = vst [vmem:[#allocation2 + $0x10] sm:$0xff] %v1518
      %1523 = vst [vmem:[#allocation2 + $0x18] sm:$0xff] %v1519
      %p1524 = scmp.eq.s32.totalorder %s21, 4
      // Predicated region
      $region45: #{critic_forward.7} parent=39 // pred_check
        %p1525 = pneg %p1524
      $region46: #{critic_forward.7} parent=39 // pred_check_branch
        %1527 = sbr.rel (%p1525) target = $region48
      $region47: #{critic_forward.7} parent=39 // pred_region
        %v1528 = vld [vmem:[#allocation2] sm:$0xff]
        %v1529 = vld [vmem:[#allocation2 + $0x8] sm:$0xff]
        %v1530 = vld [vmem:[#allocation2 + $0x10] sm:$0xff]
        %v1531 = vld [vmem:[#allocation2 + $0x18] sm:$0xff]
        %v1532 = vld [vmem:[%s2] sm:$0xf]
        %v1534 = vlaneseq
        %v1535 = vshrl.u32 %v1534, 7
        %v1536 = vsub.s32 0, %v1535
        %v1537 = vrot.slane %v1532, %v1536
        %v1538 = vlaneseq
        %v1539 = vshrl.u32 %v1538, 7
        %v1540 = vsub.s32 1, %v1539
        %v1541 = vrot.slane %v1532, %v1540
        %v1542 = vlaneseq
        %v1543 = vshrl.u32 %v1542, 7
        %v1544 = vsub.s32 2, %v1543
        %v1545 = vrot.slane %v1532, %v1544
        %v1546 = vlaneseq
        %v1547 = vshrl.u32 %v1546, 7
        %v1548 = vsub.s32 3, %v1547
        %v1549 = vrot.slane %v1532, %v1548
        %v1554 = vadd.f32 %v1528, %v1537
        %v1555 = vadd.f32 %v1529, %v1541
        %v1556 = vadd.f32 %v1530, %v1545
        %v1557 = vadd.f32 %v1531, %v1549
        %v1558 = vmax.f32 %v1554, 0.0
        %v1559 = vmax.f32 %v1555, 0.0
        %v1560 = vmax.f32 %v1556, 0.0
        %v1561 = vmax.f32 %v1557, 0.0
        %v1562 = vpack.c.bf16 %v1558, %v1558
        %v1563 = vpack.c.bf16 %v1559, %v1559
        %v1564 = vpack.c.bf16 %v1560, %v1560
        %v1565 = vpack.c.bf16 %v1561, %v1561
        %v1566 = vld [vmem:[%s3] sm:$0xf]
        %v1567 = vld [vmem:[%s3 + $0x4] sm:$0xf]
        %v1568 = vld [vmem:[%s3 + $0x8] sm:$0xf]
        %v1569 = vld [vmem:[%s3 + $0xc] sm:$0xf]
        %v1570 = vld [vmem:[%s3 + $0x10] sm:$0xf]
        %v1571 = vld [vmem:[%s3 + $0x14] sm:$0xf]
        %v1572 = vld [vmem:[%s3 + $0x18] sm:$0xf]
        %v1573 = vld [vmem:[%s3 + $0x1c] sm:$0xf]
        %v1574 = vld [vmem:[%s3 + $0x20] sm:$0xf]
        %v1575 = vld [vmem:[%s3 + $0x24] sm:$0xf]
        %v1576 = vld [vmem:[%s3 + $0x28] sm:$0xf]
        %v1577 = vld [vmem:[%s3 + $0x2c] sm:$0xf]
        %v1578 = vld [vmem:[%s3 + $0x30] sm:$0xf]
        %v1579 = vld [vmem:[%s3 + $0x34] sm:$0xf]
        %v1580 = vld [vmem:[%s3 + $0x38] sm:$0xf]
        %v1581 = vld [vmem:[%s3 + $0x3c] sm:$0xf]
        %v1582 = vld [vmem:[%s3 + $0x40] sm:$0xf]
        %v1583 = vld [vmem:[%s3 + $0x44] sm:$0xf]
        %v1584 = vld [vmem:[%s3 + $0x48] sm:$0xf]
        %v1585 = vld [vmem:[%s3 + $0x4c] sm:$0xf]
        %v1586 = vld [vmem:[%s3 + $0x50] sm:$0xf]
        %v1587 = vld [vmem:[%s3 + $0x54] sm:$0xf]
        %v1588 = vld [vmem:[%s3 + $0x58] sm:$0xf]
        %v1589 = vld [vmem:[%s3 + $0x5c] sm:$0xf]
        %v1590 = vld [vmem:[%s3 + $0x60] sm:$0xf]
        %v1591 = vld [vmem:[%s3 + $0x64] sm:$0xf]
        %v1592 = vld [vmem:[%s3 + $0x68] sm:$0xf]
        %v1593 = vld [vmem:[%s3 + $0x6c] sm:$0xf]
        %v1594 = vld [vmem:[%s3 + $0x70] sm:$0xf]
        %v1595 = vld [vmem:[%s3 + $0x74] sm:$0xf]
        %v1596 = vld [vmem:[%s3 + $0x78] sm:$0xf]
        %v1597 = vld [vmem:[%s3 + $0x7c] sm:$0xf]
        %v1598 = vld [vmem:[%s3 + $0x80] sm:$0xf]
        %v1599 = vld [vmem:[%s3 + $0x84] sm:$0xf]
        %v1600 = vld [vmem:[%s3 + $0x88] sm:$0xf]
        %v1601 = vld [vmem:[%s3 + $0x8c] sm:$0xf]
        %v1602 = vld [vmem:[%s3 + $0x90] sm:$0xf]
        %v1603 = vld [vmem:[%s3 + $0x94] sm:$0xf]
        %v1604 = vld [vmem:[%s3 + $0x98] sm:$0xf]
        %v1605 = vld [vmem:[%s3 + $0x9c] sm:$0xf]
        %v1606 = vld [vmem:[%s3 + $0xa0] sm:$0xf]
        %v1607 = vld [vmem:[%s3 + $0xa4] sm:$0xf]
        %v1608 = vld [vmem:[%s3 + $0xa8] sm:$0xf]
        %v1609 = vld [vmem:[%s3 + $0xac] sm:$0xf]
        %v1610 = vld [vmem:[%s3 + $0xb0] sm:$0xf]
        %v1611 = vld [vmem:[%s3 + $0xb4] sm:$0xf]
        %v1612 = vld [vmem:[%s3 + $0xb8] sm:$0xf]
        %v1613 = vld [vmem:[%s3 + $0xbc] sm:$0xf]
        %v1614 = vld [vmem:[%s3 + $0xc0] sm:$0xf]
        %v1615 = vld [vmem:[%s3 + $0xc4] sm:$0xf]
        %v1616 = vld [vmem:[%s3 + $0xc8] sm:$0xf]
        %v1617 = vld [vmem:[%s3 + $0xcc] sm:$0xf]
        %v1618 = vld [vmem:[%s3 + $0xd0] sm:$0xf]
        %v1619 = vld [vmem:[%s3 + $0xd4] sm:$0xf]
        %v1620 = vld [vmem:[%s3 + $0xd8] sm:$0xf]
        %v1621 = vld [vmem:[%s3 + $0xdc] sm:$0xf]
        %v1622 = vld [vmem:[%s3 + $0xe0] sm:$0xf]
        %v1623 = vld [vmem:[%s3 + $0xe4] sm:$0xf]
        %v1624 = vld [vmem:[%s3 + $0xe8] sm:$0xf]
        %v1625 = vld [vmem:[%s3 + $0xec] sm:$0xf]
        %v1626 = vld [vmem:[%s3 + $0xf0] sm:$0xf]
        %v1627 = vld [vmem:[%s3 + $0xf4] sm:$0xf]
        %v1628 = vld [vmem:[%s3 + $0xf8] sm:$0xf]
        %v1629 = vld [vmem:[%s3 + $0xfc] sm:$0xf]
        %v1630 = vld [vmem:[%s4] sm:$0x1]
        %v1632 = vlaneseq
        %v1633 = vshrl.u32 %v1632, 7
        %v1634 = vsub.s32 0, %v1633
        %v1635 = vrot.slane %v1630, %v1634
        %v1701 = vunpack.c.l.b16 %v1566
        %v1702 = vunpack.c.l.b16 %v1567
        %v1703 = vunpack.c.l.b16 %v1568
        %v1704 = vunpack.c.l.b16 %v1569
        %v1705 = vunpack.c.l.b16 %v1570
        %v1706 = vunpack.c.l.b16 %v1571
        %v1707 = vunpack.c.l.b16 %v1572
        %v1708 = vunpack.c.l.b16 %v1573
        %v1709 = vunpack.c.l.b16 %v1574
        %v1710 = vunpack.c.l.b16 %v1575
        %v1711 = vunpack.c.l.b16 %v1576
        %v1712 = vunpack.c.l.b16 %v1577
        %v1713 = vunpack.c.l.b16 %v1578
        %v1714 = vunpack.c.l.b16 %v1579
        %v1715 = vunpack.c.l.b16 %v1580
        %v1716 = vunpack.c.l.b16 %v1581
        %v1717 = vunpack.c.l.b16 %v1582
        %v1718 = vunpack.c.l.b16 %v1583
        %v1719 = vunpack.c.l.b16 %v1584
        %v1720 = vunpack.c.l.b16 %v1585
        %v1721 = vunpack.c.l.b16 %v1586
        %v1722 = vunpack.c.l.b16 %v1587
        %v1723 = vunpack.c.l.b16 %v1588
        %v1724 = vunpack.c.l.b16 %v1589
        %v1725 = vunpack.c.l.b16 %v1590
        %v1726 = vunpack.c.l.b16 %v1591
        %v1727 = vunpack.c.l.b16 %v1592
        %v1728 = vunpack.c.l.b16 %v1593
        %v1729 = vunpack.c.l.b16 %v1594
        %v1730 = vunpack.c.l.b16 %v1595
        %v1731 = vunpack.c.l.b16 %v1596
        %v1732 = vunpack.c.l.b16 %v1597
        %v1733 = vunpack.c.l.b16 %v1598
        %v1734 = vunpack.c.l.b16 %v1599
        %v1735 = vunpack.c.l.b16 %v1600
        %v1736 = vunpack.c.l.b16 %v1601
        %v1737 = vunpack.c.l.b16 %v1602
        %v1738 = vunpack.c.l.b16 %v1603
        %v1739 = vunpack.c.l.b16 %v1604
        %v1740 = vunpack.c.l.b16 %v1605
        %v1741 = vunpack.c.l.b16 %v1606
        %v1742 = vunpack.c.l.b16 %v1607
        %v1743 = vunpack.c.l.b16 %v1608
        %v1744 = vunpack.c.l.b16 %v1609
        %v1745 = vunpack.c.l.b16 %v1610
        %v1746 = vunpack.c.l.b16 %v1611
        %v1747 = vunpack.c.l.b16 %v1612
        %v1748 = vunpack.c.l.b16 %v1613
        %v1749 = vunpack.c.l.b16 %v1614
        %v1750 = vunpack.c.l.b16 %v1615
        %v1751 = vunpack.c.l.b16 %v1616
        %v1752 = vunpack.c.l.b16 %v1617
        %v1753 = vunpack.c.l.b16 %v1618
        %v1754 = vunpack.c.l.b16 %v1619
        %v1755 = vunpack.c.l.b16 %v1620
        %v1756 = vunpack.c.l.b16 %v1621
        %v1757 = vunpack.c.l.b16 %v1622
        %v1758 = vunpack.c.l.b16 %v1623
        %v1759 = vunpack.c.l.b16 %v1624
        %v1760 = vunpack.c.l.b16 %v1625
        %v1761 = vunpack.c.l.b16 %v1626
        %v1762 = vunpack.c.l.b16 %v1627
        %v1763 = vunpack.c.l.b16 %v1628
        %v1764 = vunpack.c.l.b16 %v1629
        %v1765 = vpack.c.b16 %v1702, %v1701
        %v1766 = vpack.c.b16 %v1704, %v1703
        %v1767 = vpack.c.b16 %v1706, %v1705
        %v1768 = vpack.c.b16 %v1708, %v1707
        %v1769 = vpack.c.b16 %v1710, %v1709
        %v1770 = vpack.c.b16 %v1712, %v1711
        %v1771 = vpack.c.b16 %v1714, %v1713
        %v1772 = vpack.c.b16 %v1716, %v1715
        %v1773 = vpack.c.b16 %v1718, %v1717
        %v1774 = vpack.c.b16 %v1720, %v1719
        %v1775 = vpack.c.b16 %v1722, %v1721
        %v1776 = vpack.c.b16 %v1724, %v1723
        %v1777 = vpack.c.b16 %v1726, %v1725
        %v1778 = vpack.c.b16 %v1728, %v1727
        %v1779 = vpack.c.b16 %v1730, %v1729
        %v1780 = vpack.c.b16 %v1732, %v1731
        %v1781 = vpack.c.b16 %v1734, %v1733
        %v1782 = vpack.c.b16 %v1736, %v1735
        %v1783 = vpack.c.b16 %v1738, %v1737
        %v1784 = vpack.c.b16 %v1740, %v1739
        %v1785 = vpack.c.b16 %v1742, %v1741
        %v1786 = vpack.c.b16 %v1744, %v1743
        %v1787 = vpack.c.b16 %v1746, %v1745
        %v1788 = vpack.c.b16 %v1748, %v1747
        %v1789 = vpack.c.b16 %v1750, %v1749
        %v1790 = vpack.c.b16 %v1752, %v1751
        %v1791 = vpack.c.b16 %v1754, %v1753
        %v1792 = vpack.c.b16 %v1756, %v1755
        %v1793 = vpack.c.b16 %v1758, %v1757
        %v1794 = vpack.c.b16 %v1760, %v1759
        %v1795 = vpack.c.b16 %v1762, %v1761
        %v1796 = vpack.c.b16 %v1764, %v1763
        %1829 = vmatprep.subr.bf16.mxu0 0
        %1830 = vmatpush1.bf16.msra.mxu0 %v1772
        %1831 = vmatprep.subr.bf16.mxu0 0
        %1832 = vmatpush1.bf16.msra.mxu0 %v1771
        %1833 = vmatprep.subr.bf16.mxu0 0
        %1834 = vmatpush1.bf16.msra.mxu0 %v1770
        %1835 = vmatprep.subr.bf16.mxu0 0
        %1836 = vmatpush1.bf16.msra.mxu0 %v1769
        %1837 = vmatprep.subr.bf16.mxu0 0
        %1838 = vmatpush1.bf16.msra.mxu0 %v1768
        %1839 = vmatprep.subr.bf16.mxu0 0
        %1840 = vmatpush1.bf16.msra.mxu0 %v1767
        %1841 = vmatprep.subr.bf16.mxu0 0
        %1842 = vmatpush1.bf16.msra.mxu0 %v1766
        %1843 = vmatprep.subr.bf16.mxu0 0
        %1844 = vmatpush1.bf16.msra.mxu0 %v1765
        %1845 = vmatprep.subr.bf16.mxu0 0
        %1846 = vmatpush2.bf16.msra.mxu0 %v1780
        %1847 = vmatprep.subr.bf16.mxu0 0
        %1848 = vmatpush2.bf16.msra.mxu0 %v1779
        %1849 = vmatprep.subr.bf16.mxu0 0
        %1850 = vmatpush2.bf16.msra.mxu0 %v1778
        %1851 = vmatprep.subr.bf16.mxu0 0
        %1852 = vmatpush2.bf16.msra.mxu0 %v1777
        %1853 = vmatprep.subr.bf16.mxu0 0
        %1854 = vmatpush2.bf16.msra.mxu0 %v1776
        %1855 = vmatprep.subr.bf16.mxu0 0
        %1856 = vmatpush2.bf16.msra.mxu0 %v1775
        %1857 = vmatprep.subr.bf16.mxu0 0
        %1858 = vmatpush2.bf16.msra.mxu0 %v1774
        %1859 = vmatprep.subr.bf16.mxu0 0
        %1860 = vmatpush2.bf16.msra.mxu0 %v1773
        %1861 = vmatprep.mubr.bf16.mxu0 %v1563
        %1862 = vmatmul.mubr.bf16.gmra.mxu0 %v1562
        %v1863 = vpop.f32.mrf.mxu0
        %v1864 = vadd.f32 %v1635, %v1863
        %v1865 = vpop.f32.mrf.mxu0
        %v1866 = vpop.f32.mrf.mxu0
        %v1867 = vpop.f32.mrf.mxu0
        %1868 = vdwg.mxu0
        %1869 = vmatprep.subr.bf16.mxu0 0
        %1870 = vmatpush1.bf16.msra.mxu0 %v1788
        %1871 = vmatprep.subr.bf16.mxu0 0
        %1872 = vmatpush1.bf16.msra.mxu0 %v1787
        %1873 = vmatprep.subr.bf16.mxu0 0
        %1874 = vmatpush1.bf16.msra.mxu0 %v1786
        %1875 = vmatprep.subr.bf16.mxu0 0
        %1876 = vmatpush1.bf16.msra.mxu0 %v1785
        %1877 = vmatprep.subr.bf16.mxu0 0
        %1878 = vmatpush1.bf16.msra.mxu0 %v1784
        %1879 = vmatprep.subr.bf16.mxu0 0
        %1880 = vmatpush1.bf16.msra.mxu0 %v1783
        %1881 = vmatprep.subr.bf16.mxu0 0
        %1882 = vmatpush1.bf16.msra.mxu0 %v1782
        %1883 = vmatprep.subr.bf16.mxu0 0
        %1884 = vmatpush1.bf16.msra.mxu0 %v1781
        %1885 = vmatprep.subr.bf16.mxu0 0
        %1886 = vmatpush2.bf16.msra.mxu0 %v1796
        %1887 = vmatprep.subr.bf16.mxu0 0
        %1888 = vmatpush2.bf16.msra.mxu0 %v1795
        %1889 = vmatprep.subr.bf16.mxu0 0
        %1890 = vmatpush2.bf16.msra.mxu0 %v1794
        %1891 = vmatprep.subr.bf16.mxu0 0
        %1892 = vmatpush2.bf16.msra.mxu0 %v1793
        %1893 = vmatprep.subr.bf16.mxu0 0
        %1894 = vmatpush2.bf16.msra.mxu0 %v1792
        %1895 = vmatprep.subr.bf16.mxu0 0
        %1896 = vmatpush2.bf16.msra.mxu0 %v1791
        %1897 = vmatprep.subr.bf16.mxu0 0
        %1898 = vmatpush2.bf16.msra.mxu0 %v1790
        %1899 = vmatprep.subr.bf16.mxu0 0
        %1900 = vmatpush2.bf16.msra.mxu0 %v1789
        %1901 = vmatprep.mubr.bf16.mxu0 %v1565
        %1902 = vmatmul.mubr.bf16.gmra.mxu0 %v1564
        %v1903 = vpop.f32.mrf.mxu0
        %v1904 = vadd.f32 %v1864, %v1903
        %v1905 = vpop.f32.mrf.mxu0
        %v1906 = vpop.f32.mrf.mxu0
        %v1907 = vpop.f32.mrf.mxu0
        %1908 = vdwg.mxu0
        %1909 = vst [vmem:[%s275] sm:$0xff] %v1904
      $region48: #{critic_forward.7} parent=39 // pred_fallthru
        _
      %p1910 = scmp.lt.s32.totalorder %s20, 0
      %s1911 = scalar_select %p1910, %s20, 0
      %s1912 = smul.addr %s1911, 8
      %s1913 = scalar_lea.vmem %s5, %s1912
      // Predicated region
      $region49: #{critic_forward.7} parent=39 // pred_check
        %p1914 = pneg %p163
      $region50: #{critic_forward.7} parent=39 // pred_check_branch
        %1916 = sbr.rel (%p1914) target = $region52
      $region51: #{critic_forward.7} parent=39 // pred_region
        _
      $region52: #{critic_forward.7} parent=39 // pred_fallthru
        _
      // Predicated region
      $region53: #{critic_forward.7} parent=39 // pred_check
        %p1917 = pneg %p163
      $region54: #{critic_forward.7} parent=39 // pred_check_branch
        %1919 = sbr.rel (%p1917) target = $region56
      $region55: #{critic_forward.7} parent=39 // pred_region
        %p1920 = scmp.lt.s32.totalorder %s20, 0
        %s1921 = scalar_select %p1920, %s20, 0
        %s1922 = smul.addr %s1921, 8
        %s1923 = scalar_lea.vmem %s5, %s1922
      $region56: #{critic_forward.7} parent=39 // pred_fallthru
        _
    $region40: #{critic_forward.7} parent=5 // pred_fallthru
      _
    %p1924 = scmp.le.s32.totalorder 2, %s11
    // Predicated region
    $region57: #{critic_forward.7} parent=5 // pred_check
      %p1925 = pneg %p1924
    $region58: #{critic_forward.7} parent=5 // pred_check_branch
      %1927 = sbr.rel (%p1925) target = $region60
    $region59: #{critic_forward.7} parent=5 // pred_region
      %s1928 = ssub.s32 %s11, 2
    $region60: #{critic_forward.7} parent=5 // pred_fallthru
      _
  $region6: #{critic_forward.7} parent=0 // loop_footer
    %s15 = sadd.s32 1, %s11
  $region7: #{critic_forward.7} parent=0 // loop_footer_branch
    %10 = sbr.rel target = $region3
  $region8: #{critic_forward.7} parent=0 // loop_exit
    _

</llo_original>
